<compile_context>
chip_gen: v5e
topology: v5e:2x2
jax: 0.10.0
libtpu: 0.0.40
codegen_flags: <defaults>
</compile_context>

<pallas_src>
import functools
import math

import jax
import jax.numpy as jnp
from jax import lax
from jax.experimental import pallas as pl
from jax.experimental.pallas import tpu as pltpu


# ----------------------------------------------------------------------------
# Pallas kernel: 3 row-shifted lane-dense matmuls (= fused upsample+conv+BN+act)
# ----------------------------------------------------------------------------
def _conv_kernel(x_ref, w_ref, b_ref, o_ref, *, row_off, act):
    """x_ref: (R, (W+2)*Cin)   source rows, one batch element
       w_ref: (3, (W+2)*Cin, N) block-Toeplitz weights (BN scale folded in)
       b_ref: (1, N)            per-lane bias (BN bias tiled over W)
       o_ref: (M, N)            M output rows, N = W * Nout (lane dense)."""
    M, N = o_ref.shape

    acc = jnp.zeros((M, N), jnp.float32)
    for kh in range(3):
        lhs = x_ref[kh + row_off:kh + row_off + M, :]
        acc = acc + jnp.dot(lhs, w_ref[kh],
                            preferred_element_type=jnp.float32)

    y = acc + b_ref[...]
    if act == "leaky":
        y = jnp.where(y >= 0.0, y, 0.2 * y)
    else:  # "tanh"
        y = jnp.tanh(y)
    o_ref[...] = y.astype(o_ref.dtype)


def _conv_call(x2, w, b, out_rows, act, row_off):
    """x2: (B, R, K); w: (3, K, N); b: (1, N) -> (B, out_rows, N)."""
    B, R, K = x2.shape
    N = w.shape[-1]
    kernel = functools.partial(_conv_kernel, row_off=row_off, act=act)
    return pl.pallas_call(
        kernel,
        out_shape=jax.ShapeDtypeStruct((B, out_rows, N), jnp.float32),
        grid_spec=pltpu.PrefetchScalarGridSpec(
            num_scalar_prefetch=0,
            grid=(B,),
            in_specs=[
                pl.BlockSpec((pl.Squeezed(), R, K), lambda i: (i, 0, 0)),
                pl.BlockSpec((3, K, N), lambda i: (0, 0, 0)),
                pl.BlockSpec((1, N), lambda i: (0, 0)),
            ],
            out_specs=pl.BlockSpec((pl.Squeezed(), out_rows, N),
                                   lambda i: (i, 0, 0)),
        ),
        compiler_params=pltpu.CompilerParams(
            dimension_semantics=("parallel",)),
    )(x2, w, b)


# ----------------------------------------------------------------------------
# Weight preparation (done once, outside the per-forward path)
# ----------------------------------------------------------------------------
def _pack_up_weights(w_hwio, scale):
    """Fold BN scale and the 2x column upsample into the 3x3 kernel.

    Returns (3, 3, Cin, 2*Cout): first Cout output channels produce even
    output columns, last Cout produce odd output columns."""
    w = w_hwio * scale[None, None, None, :]
    zeros = jnp.zeros_like(w[:, 0])
    even = jnp.stack([w[:, 0], w[:, 1] + w[:, 2], zeros], axis=1)
    odd = jnp.stack([zeros, w[:, 0] + w[:, 1], w[:, 2]], axis=1)
    return jnp.concatenate([even, odd], axis=-1)


def _toeplitz_weights(w_eff, W):
    """Expand an effective (3, 3, Cin, Nout) kernel into block-Toeplitz row
    matrices of shape (3, (W+2)*Cin, W*Nout) so the conv over all W output
    column groups becomes 3 dense matmuls."""
    _, _, cin, nout = w_eff.shape
    b_idx = jnp.arange(W + 2)
    q_idx = jnp.arange(W)
    diff = b_idx[:, None] - q_idx[None, :]                       # (W+2, W)
    onehot = (diff[None, :, :] == jnp.arange(3)[:, None, None]
              ).astype(jnp.float32)                              # (3, W+2, W)
    t = jnp.einsum("kbq,hkcn->hbcqn", onehot, w_eff)             # (3,W+2,Cin,W,Nout)
    return t.reshape(3, (W + 2) * cin, W * nout)


def prepare_params(params, w_final, in_hw):
    """Fold BN, pack the upsample, build Toeplitz weights and tiled biases."""
    eps = 1e-5
    H, W = in_hw
    packed = []
    for p in params:
        w = jnp.transpose(p["w"], (2, 3, 1, 0))                  # OIHW -> HWIO
        scale = p["gamma"] / jnp.sqrt(p["var"] + eps)
        bias = p["beta"] - p["mean"] * scale
        w_eff = _pack_up_weights(w, scale)                       # (3,3,Cin,2Cout)
        T = _toeplitz_weights(w_eff, W)                          # (3,(W+2)Cin,W*2Cout)
        b_row = jnp.tile(jnp.concatenate([bias, bias]), W)[None, :]
        packed.append((T.astype(jnp.float32), b_row.astype(jnp.float32)))
        H, W = 2 * H, 2 * W
    w = jnp.transpose(w_final, (2, 3, 1, 0))                     # (3,3,Cin_f,3)
    T = _toeplitz_weights(w, W)
    b_row = jnp.zeros((1, W * 3), jnp.float32)
    packed.append((T.astype(jnp.float32), b_row))
    return packed


# ----------------------------------------------------------------------------
# Forward pass
# ----------------------------------------------------------------------------
def simple_decoder_forward(x_nchw, packed):
    x = jnp.transpose(x_nchw, (0, 2, 3, 1))                      # NCHW -> NHWC
    B = x.shape[0]

    for T, b_row in packed[:-1]:                                 # 4 UpLayers
        H, W, C = x.shape[1], x.shape[2], x.shape[3]
        N = T.shape[-1]
        cout = N // (2 * W)
        xp = jnp.pad(x, ((0, 0), (1, 1), (1, 1), (0, 0)))        # small tensor
        xph = jnp.repeat(xp, 2, axis=1)                          # H upsample
        x2 = xph.reshape(B, 2 * H + 4, (W + 2) * C)              # free reshape
        out = _conv_call(x2, T, b_row, out_rows=2 * H,
                         act="leaky", row_off=1)                 # (B,2H,W*2Cout)
        x = out.reshape(B, 2 * H, 2 * W, cout)                   # free reshape

    T, b_row = packed[-1]                                        # final conv
    H, W, C = x.shape[1], x.shape[2], x.shape[3]
    xp = jnp.pad(x, ((0, 0), (1, 1), (1, 1), (0, 0)))
    x2 = xp.reshape(B, H + 2, (W + 2) * C)
    out = _conv_call(x2, T, b_row, out_rows=H, act="tanh", row_off=0)
    y = out.reshape(B, H, W, 3)
    return jnp.transpose(y, (0, 3, 1, 2))                        # NHWC -> NCHW


# ----------------------------------------------------------------------------
# Parameter init (PyTorch-style OIHW weights + BN stats) and JAX reference
# ----------------------------------------------------------------------------
def init_params(key, channel):
    chans = [channel // 2 ** i for i in range(5)]
    assert chans[4] >= 1
    params = []
    for i in range(4):
        cin, cout = chans[i], chans[i + 1]
        key, k1, k2, k3, k4, k5 = jax.random.split(key, 6)
        params.append(dict(
            w=jax.random.normal(k1, (cout, cin, 3, 3), jnp.float32)
              * (1.0 / math.sqrt(cin * 9)),                      # OIHW
            gamma=1.0 + 0.1 * jax.random.normal(k2, (cout,), jnp.float32),
            beta=0.1 * jax.random.normal(k3, (cout,), jnp.float32),
            mean=0.1 * jax.random.normal(k4, (cout,), jnp.float32),
            var=jnp.abs(jax.random.normal(k5, (cout,), jnp.float32)) + 1.0,
        ))
    key, k = jax.random.split(key)
    w_final = jax.random.normal(k, (3, chans[4], 3, 3), jnp.float32) \
        * (1.0 / math.sqrt(chans[4] * 9))                        # OIHW
    return params, w_final


def reference_forward(x_nchw, params, w_final):
    """Pure-JAX reference (lax.conv), NCHW."""
    eps = 1e-5
    x = x_nchw
    for p in params:
        x = jnp.repeat(jnp.repeat(x, 2, axis=2), 2, axis=3)
        x = lax.conv_general_dilated(
            x, p["w"], (1, 1), ((1, 1), (1, 1)),
            dimension_numbers=("NCHW", "OIHW", "NCHW"))
        scale = p["gamma"] / jnp.sqrt(p["var"] + eps)
        bias = p["beta"] - p["mean"] * scale
        x = x * scale[None, :, None, None] + bias[None, :, None, None]
        x = jnp.where(x >= 0.0, x, 0.2 * x)
    x = lax.conv_general_dilated(
        x, w_final, (1, 1), ((1, 1), (1, 1)),
        dimension_numbers=("NCHW", "OIHW", "NCHW"))
    return jnp.tanh(x)


if __name__ == "__main__":
    key = jax.random.PRNGKey(0)
    channel = 32          # nn.Conv2d(channel // 16 = 2, 3, ...)
    B, H, W = 2, 4, 4     # output is (B, 3, 64, 64)

    kx, kp = jax.random.split(key)
    x = jax.random.normal(kx, (B, channel, H, W), jnp.float32)
    params, w_final = init_params(kp, channel)

    packed = prepare_params(params, w_final, (H, W))             # once, offline
    fwd = jax.jit(simple_decoder_forward)
    out = jax.block_until_ready(fwd(x, packed))

    assert out.shape == (B, 3, H * 16, W * 16), out.shape
    ref = reference_forward(x, params, w_final)
    err = float(jnp.max(jnp.abs(out - ref)))
    assert err < 5e-2, f"max abs err vs reference = {err}"

    print("KERNEL_OK")
</pallas_src>

<mosaic_0001>
module attributes {stable_mosaic.version = 11 : i64} {
  func.func @_conv_kernel(%arg0: i32, %arg1: memref<1x12x192xf32, #tpu.memory_space<vmem>>, %arg2: memref<3x192x128xf32, #tpu.memory_space<vmem>>, %arg3: memref<1x128xf32, #tpu.memory_space<vmem>>, %arg4: memref<1x8x128xf32, #tpu.memory_space<vmem>>) attributes {dimension_semantics = [#tpu.dimension_semantics<parallel>], iteration_bounds = array<i64: 2>, scalar_prefetch = 0 : i64, scratch_operands = 0 : i64, tpu.core_type = #tpu.core_type<tc>, window_params = [{transform_indices = @transform_0, window_bounds = array<i64: 1, 12, 192>}, {pipeline_mode = #tpu.pipeline_mode<synchronous>, transform_indices = @transform_1, window_bounds = array<i64: 3, 192, 128>}, {pipeline_mode = #tpu.pipeline_mode<synchronous>, transform_indices = @transform_2, window_bounds = array<i64: 1, 128>}, {transform_indices = @transform_3, window_bounds = array<i64: 1, 8, 128>}]} {
    %cst = arith.constant 0.000000e+00 : f32
    %0 = vector.broadcast %cst : f32 to vector<8x128xf32>
    %c0 = arith.constant 0 : index
    %c1 = arith.constant 1 : index
    %c0_0 = arith.constant 0 : index
    %1 = vector.load %arg1[%c0, %c1, %c0_0] : memref<1x12x192xf32, #tpu.memory_space<vmem>>, vector<1x8x192xf32>
    %2 = vector.shape_cast %1 : vector<1x8x192xf32> to vector<8x192xf32>
    %c0_1 = arith.constant 0 : index
    %c0_2 = arith.constant 0 : index
    %c0_3 = arith.constant 0 : index
    %3 = vector.load %arg2[%c0_1, %c0_2, %c0_3] : memref<3x192x128xf32, #tpu.memory_space<vmem>>, vector<1x192x128xf32>
    %4 = vector.shape_cast %3 : vector<1x192x128xf32> to vector<192x128xf32>
    %cst_4 = arith.constant dense<0.000000e+00> : vector<8x128xf32>
    %5 = tpu.matmul %2, %4, %cst_4 {dimension_numbers = #tpu.dot_dimension_numbers<[1], [0], [0], [1], [0, 0, 1, 1], [], []>} : vector<8x192xf32>, vector<192x128xf32>, vector<8x128xf32> -> vector<8x128xf32>
    %6 = arith.addf %0, %5 : vector<8x128xf32>
    %c0_5 = arith.constant 0 : index
    %c2 = arith.constant 2 : index
    %c0_6 = arith.constant 0 : index
    %7 = vector.load %arg1[%c0_5, %c2, %c0_6] : memref<1x12x192xf32, #tpu.memory_space<vmem>>, vector<1x8x192xf32>
    %8 = vector.shape_cast %7 : vector<1x8x192xf32> to vector<8x192xf32>
    %c1_7 = arith.constant 1 : index
    %c0_8 = arith.constant 0 : index
    %c0_9 = arith.constant 0 : index
    %9 = vector.load %arg2[%c1_7, %c0_8, %c0_9] : memref<3x192x128xf32, #tpu.memory_space<vmem>>, vector<1x192x128xf32>
    %10 = vector.shape_cast %9 : vector<1x192x128xf32> to vector<192x128xf32>
    %cst_10 = arith.constant dense<0.000000e+00> : vector<8x128xf32>
    %11 = tpu.matmul %8, %10, %cst_10 {dimension_numbers = #tpu.dot_dimension_numbers<[1], [0], [0], [1], [0, 0, 1, 1], [], []>} : vector<8x192xf32>, vector<192x128xf32>, vector<8x128xf32> -> vector<8x128xf32>
    %12 = arith.addf %6, %11 : vector<8x128xf32>
    %c0_11 = arith.constant 0 : index
    %c3 = arith.constant 3 : index
    %c0_12 = arith.constant 0 : index
    %13 = vector.load %arg1[%c0_11, %c3, %c0_12] : memref<1x12x192xf32, #tpu.memory_space<vmem>>, vector<1x8x192xf32>
    %14 = vector.shape_cast %13 : vector<1x8x192xf32> to vector<8x192xf32>
    %c2_13 = arith.constant 2 : index
    %c0_14 = arith.constant 0 : index
    %c0_15 = arith.constant 0 : index
    %15 = vector.load %arg2[%c2_13, %c0_14, %c0_15] : memref<3x192x128xf32, #tpu.memory_space<vmem>>, vector<1x192x128xf32>
    %16 = vector.shape_cast %15 : vector<1x192x128xf32> to vector<192x128xf32>
    %cst_16 = arith.constant dense<0.000000e+00> : vector<8x128xf32>
    %17 = tpu.matmul %14, %16, %cst_16 {dimension_numbers = #tpu.dot_dimension_numbers<[1], [0], [0], [1], [0, 0, 1, 1], [], []>} : vector<8x192xf32>, vector<192x128xf32>, vector<8x128xf32> -> vector<8x128xf32>
    %18 = arith.addf %12, %17 : vector<8x128xf32>
    %c0_17 = arith.constant 0 : index
    %c0_18 = arith.constant 0 : index
    %19 = vector.load %arg3[%c0_17, %c0_18] : memref<1x128xf32, #tpu.memory_space<vmem>>, vector<1x128xf32>
    %20 = vector.broadcast %19 : vector<1x128xf32> to vector<8x128xf32>
    %21 = arith.addf %18, %20 : vector<8x128xf32>
    %cst_19 = arith.constant 0.000000e+00 : f32
    %22 = vector.broadcast %cst_19 : f32 to vector<8x128xf32>
    %23 = arith.cmpf oge, %21, %22 : vector<8x128xf32>
    %cst_20 = arith.constant 2.000000e-01 : f32
    %24 = vector.broadcast %cst_20 : f32 to vector<8x128xf32>
    %25 = arith.mulf %24, %21 : vector<8x128xf32>
    %26 = arith.select %23, %21, %25 : vector<8x128xi1>, vector<8x128xf32>
    %c0_21 = arith.constant 0 : index
    %c0_22 = arith.constant 0 : index
    %c0_23 = arith.constant 0 : index
    %27 = vector.load %arg4[%c0_21, %c0_22, %c0_23] : memref<1x8x128xf32, #tpu.memory_space<vmem>>, vector<1x8x128xf32>
    %28 = vector.shape_cast %27 : vector<1x8x128xf32> to vector<8x128xf32>
    %29 = vector.shape_cast %26 : vector<8x128xf32> to vector<1x8x128xf32>
    tpu.vector_store %arg4[%c0_21, %c0_22, %c0_23], %29 {strides = array<i32>} : memref<1x8x128xf32, #tpu.memory_space<vmem>>, vector<1x8x128xf32>,
    return
  }
  func.func @transform_0(%arg0: i32) -> (i32, i32, i32) {
    %c0_i32 = arith.constant 0 : i32
    %c0_i32_0 = arith.constant 0 : i32
    %c0_i32_1 = arith.constant 0 : i32
    return %arg0, %c0_i32, %c0_i32_0 : i32, i32, i32
  }
  func.func @transform_1(%arg0: i32) -> (i32, i32, i32) {
    %c0_i32 = arith.constant 0 : i32
    %c0_i32_0 = arith.constant 0 : i32
    %c0_i32_1 = arith.constant 0 : i32
    %c0_i32_2 = arith.constant 0 : i32
    return %c0_i32, %c0_i32_0, %c0_i32_1 : i32, i32, i32
  }
  func.func @transform_2(%arg0: i32) -> (i32, i32) {
    %c0_i32 = arith.constant 0 : i32
    %c0_i32_0 = arith.constant 0 : i32
    %c0_i32_1 = arith.constant 0 : i32
    return %c0_i32, %c0_i32_0 : i32, i32
  }
  func.func @transform_3(%arg0: i32) -> (i32, i32, i32) {
    %c0_i32 = arith.constant 0 : i32
    %c0_i32_0 = arith.constant 0 : i32
    %c0_i32_1 = arith.constant 0 : i32
    return %arg0, %c0_i32, %c0_i32_0 : i32, i32, i32
  }
}

module attributes {stable_mosaic.version = 11 : i64} {
  func.func @_conv_kernel(%arg0: i32, %arg1: memref<1x20x160xf32, #tpu.memory_space<vmem>>, %arg2: memref<3x160x128xf32, #tpu.memory_space<vmem>>, %arg3: memref<1x128xf32, #tpu.memory_space<vmem>>, %arg4: memref<1x16x128xf32, #tpu.memory_space<vmem>>) attributes {dimension_semantics = [#tpu.dimension_semantics<parallel>], iteration_bounds = array<i64: 2>, scalar_prefetch = 0 : i64, scratch_operands = 0 : i64, tpu.core_type = #tpu.core_type<tc>, window_params = [{transform_indices = @transform_0, window_bounds = array<i64: 1, 20, 160>}, {pipeline_mode = #tpu.pipeline_mode<synchronous>, transform_indices = @transform_1, window_bounds = array<i64: 3, 160, 128>}, {pipeline_mode = #tpu.pipeline_mode<synchronous>, transform_indices = @transform_2, window_bounds = array<i64: 1, 128>}, {transform_indices = @transform_3, window_bounds = array<i64: 1, 16, 128>}]} {
    %cst = arith.constant 0.000000e+00 : f32
    %0 = vector.broadcast %cst : f32 to vector<16x128xf32>
    %c0 = arith.constant 0 : index
    %c1 = arith.constant 1 : index
    %c0_0 = arith.constant 0 : index
    %1 = vector.load %arg1[%c0, %c1, %c0_0] : memref<1x20x160xf32, #tpu.memory_space<vmem>>, vector<1x16x160xf32>
    %2 = vector.shape_cast %1 : vector<1x16x160xf32> to vector<16x160xf32>
    %c0_1 = arith.constant 0 : index
    %c0_2 = arith.constant 0 : index
    %c0_3 = arith.constant 0 : index
    %3 = vector.load %arg2[%c0_1, %c0_2, %c0_3] : memref<3x160x128xf32, #tpu.memory_space<vmem>>, vector<1x160x128xf32>
    %4 = vector.shape_cast %3 : vector<1x160x128xf32> to vector<160x128xf32>
    %cst_4 = arith.constant dense<0.000000e+00> : vector<16x128xf32>
    %5 = tpu.matmul %2, %4, %cst_4 {dimension_numbers = #tpu.dot_dimension_numbers<[1], [0], [0], [1], [0, 0, 1, 1], [], []>} : vector<16x160xf32>, vector<160x128xf32>, vector<16x128xf32> -> vector<16x128xf32>
    %6 = arith.addf %0, %5 : vector<16x128xf32>
    %c0_5 = arith.constant 0 : index
    %c2 = arith.constant 2 : index
    %c0_6 = arith.constant 0 : index
    %7 = vector.load %arg1[%c0_5, %c2, %c0_6] : memref<1x20x160xf32, #tpu.memory_space<vmem>>, vector<1x16x160xf32>
    %8 = vector.shape_cast %7 : vector<1x16x160xf32> to vector<16x160xf32>
    %c1_7 = arith.constant 1 : index
    %c0_8 = arith.constant 0 : index
    %c0_9 = arith.constant 0 : index
    %9 = vector.load %arg2[%c1_7, %c0_8, %c0_9] : memref<3x160x128xf32, #tpu.memory_space<vmem>>, vector<1x160x128xf32>
    %10 = vector.shape_cast %9 : vector<1x160x128xf32> to vector<160x128xf32>
    %cst_10 = arith.constant dense<0.000000e+00> : vector<16x128xf32>
    %11 = tpu.matmul %8, %10, %cst_10 {dimension_numbers = #tpu.dot_dimension_numbers<[1], [0], [0], [1], [0, 0, 1, 1], [], []>} : vector<16x160xf32>, vector<160x128xf32>, vector<16x128xf32> -> vector<16x128xf32>
    %12 = arith.addf %6, %11 : vector<16x128xf32>
    %c0_11 = arith.constant 0 : index
    %c3 = arith.constant 3 : index
    %c0_12 = arith.constant 0 : index
    %13 = vector.load %arg1[%c0_11, %c3, %c0_12] : memref<1x20x160xf32, #tpu.memory_space<vmem>>, vector<1x16x160xf32>
    %14 = vector.shape_cast %13 : vector<1x16x160xf32> to vector<16x160xf32>
    %c2_13 = arith.constant 2 : index
    %c0_14 = arith.constant 0 : index
    %c0_15 = arith.constant 0 : index
    %15 = vector.load %arg2[%c2_13, %c0_14, %c0_15] : memref<3x160x128xf32, #tpu.memory_space<vmem>>, vector<1x160x128xf32>
    %16 = vector.shape_cast %15 : vector<1x160x128xf32> to vector<160x128xf32>
    %cst_16 = arith.constant dense<0.000000e+00> : vector<16x128xf32>
    %17 = tpu.matmul %14, %16, %cst_16 {dimension_numbers = #tpu.dot_dimension_numbers<[1], [0], [0], [1], [0, 0, 1, 1], [], []>} : vector<16x160xf32>, vector<160x128xf32>, vector<16x128xf32> -> vector<16x128xf32>
    %18 = arith.addf %12, %17 : vector<16x128xf32>
    %c0_17 = arith.constant 0 : index
    %c0_18 = arith.constant 0 : index
    %19 = vector.load %arg3[%c0_17, %c0_18] : memref<1x128xf32, #tpu.memory_space<vmem>>, vector<1x128xf32>
    %20 = vector.broadcast %19 : vector<1x128xf32> to vector<16x128xf32>
    %21 = arith.addf %18, %20 : vector<16x128xf32>
    %cst_19 = arith.constant 0.000000e+00 : f32
    %22 = vector.broadcast %cst_19 : f32 to vector<16x128xf32>
    %23 = arith.cmpf oge, %21, %22 : vector<16x128xf32>
    %cst_20 = arith.constant 2.000000e-01 : f32
    %24 = vector.broadcast %cst_20 : f32 to vector<16x128xf32>
    %25 = arith.mulf %24, %21 : vector<16x128xf32>
    %26 = arith.select %23, %21, %25 : vector<16x128xi1>, vector<16x128xf32>
    %c0_21 = arith.constant 0 : index
    %c0_22 = arith.constant 0 : index
    %c0_23 = arith.constant 0 : index
    %27 = vector.load %arg4[%c0_21, %c0_22, %c0_23] : memref<1x16x128xf32, #tpu.memory_space<vmem>>, vector<1x16x128xf32>
    %28 = vector.shape_cast %27 : vector<1x16x128xf32> to vector<16x128xf32>
    %29 = vector.shape_cast %26 : vector<16x128xf32> to vector<1x16x128xf32>
    tpu.vector_store %arg4[%c0_21, %c0_22, %c0_23], %29 {strides = array<i32>} : memref<1x16x128xf32, #tpu.memory_space<vmem>>, vector<1x16x128xf32>,
    return
  }
  func.func @transform_0(%arg0: i32) -> (i32, i32, i32) {
    %c0_i32 = arith.constant 0 : i32
    %c0_i32_0 = arith.constant 0 : i32
    %c0_i32_1 = arith.constant 0 : i32
    return %arg0, %c0_i32, %c0_i32_0 : i32, i32, i32
  }
  func.func @transform_1(%arg0: i32) -> (i32, i32, i32) {
    %c0_i32 = arith.constant 0 : i32
    %c0_i32_0 = arith.constant 0 : i32
    %c0_i32_1 = arith.constant 0 : i32
    %c0_i32_2 = arith.constant 0 : i32
    return %c0_i32, %c0_i32_0, %c0_i32_1 : i32, i32, i32
  }
  func.func @transform_2(%arg0: i32) -> (i32, i32) {
    %c0_i32 = arith.constant 0 : i32
    %c0_i32_0 = arith.constant 0 : i32
    %c0_i32_1 = arith.constant 0 : i32
    return %c0_i32, %c0_i32_0 : i32, i32
  }
  func.func @transform_3(%arg0: i32) -> (i32, i32, i32) {
    %c0_i32 = arith.constant 0 : i32
    %c0_i32_0 = arith.constant 0 : i32
    %c0_i32_1 = arith.constant 0 : i32
    return %arg0, %c0_i32, %c0_i32_0 : i32, i32, i32
  }
}

module attributes {stable_mosaic.version = 11 : i64} {
  func.func @_conv_kernel(%arg0: i32, %arg1: memref<1x36x144xf32, #tpu.memory_space<vmem>>, %arg2: memref<3x144x128xf32, #tpu.memory_space<vmem>>, %arg3: memref<1x128xf32, #tpu.memory_space<vmem>>, %arg4: memref<1x32x128xf32, #tpu.memory_space<vmem>>) attributes {dimension_semantics = [#tpu.dimension_semantics<parallel>], iteration_bounds = array<i64: 2>, scalar_prefetch = 0 : i64, scratch_operands = 0 : i64, tpu.core_type = #tpu.core_type<tc>, window_params = [{transform_indices = @transform_0, window_bounds = array<i64: 1, 36, 144>}, {pipeline_mode = #tpu.pipeline_mode<synchronous>, transform_indices = @transform_1, window_bounds = array<i64: 3, 144, 128>}, {pipeline_mode = #tpu.pipeline_mode<synchronous>, transform_indices = @transform_2, window_bounds = array<i64: 1, 128>}, {transform_indices = @transform_3, window_bounds = array<i64: 1, 32, 128>}]} {
    %cst = arith.constant 0.000000e+00 : f32
    %0 = vector.broadcast %cst : f32 to vector<32x128xf32>
    %c0 = arith.constant 0 : index
    %c1 = arith.constant 1 : index
    %c0_0 = arith.constant 0 : index
    %1 = vector.load %arg1[%c0, %c1, %c0_0] : memref<1x36x144xf32, #tpu.memory_space<vmem>>, vector<1x32x144xf32>
    %2 = vector.shape_cast %1 : vector<1x32x144xf32> to vector<32x144xf32>
    %c0_1 = arith.constant 0 : index
    %c0_2 = arith.constant 0 : index
    %c0_3 = arith.constant 0 : index
    %3 = vector.load %arg2[%c0_1, %c0_2, %c0_3] : memref<3x144x128xf32, #tpu.memory_space<vmem>>, vector<1x144x128xf32>
    %4 = vector.shape_cast %3 : vector<1x144x128xf32> to vector<144x128xf32>
    %cst_4 = arith.constant dense<0.000000e+00> : vector<32x128xf32>
    %5 = tpu.matmul %2, %4, %cst_4 {dimension_numbers = #tpu.dot_dimension_numbers<[1], [0], [0], [1], [0, 0, 1, 1], [], []>} : vector<32x144xf32>, vector<144x128xf32>, vector<32x128xf32> -> vector<32x128xf32>
    %6 = arith.addf %0, %5 : vector<32x128xf32>
    %c0_5 = arith.constant 0 : index
    %c2 = arith.constant 2 : index
    %c0_6 = arith.constant 0 : index
    %7 = vector.load %arg1[%c0_5, %c2, %c0_6] : memref<1x36x144xf32, #tpu.memory_space<vmem>>, vector<1x32x144xf32>
    %8 = vector.shape_cast %7 : vector<1x32x144xf32> to vector<32x144xf32>
    %c1_7 = arith.constant 1 : index
    %c0_8 = arith.constant 0 : index
    %c0_9 = arith.constant 0 : index
    %9 = vector.load %arg2[%c1_7, %c0_8, %c0_9] : memref<3x144x128xf32, #tpu.memory_space<vmem>>, vector<1x144x128xf32>
    %10 = vector.shape_cast %9 : vector<1x144x128xf32> to vector<144x128xf32>
    %cst_10 = arith.constant dense<0.000000e+00> : vector<32x128xf32>
    %11 = tpu.matmul %8, %10, %cst_10 {dimension_numbers = #tpu.dot_dimension_numbers<[1], [0], [0], [1], [0, 0, 1, 1], [], []>} : vector<32x144xf32>, vector<144x128xf32>, vector<32x128xf32> -> vector<32x128xf32>
    %12 = arith.addf %6, %11 : vector<32x128xf32>
    %c0_11 = arith.constant 0 : index
    %c3 = arith.constant 3 : index
    %c0_12 = arith.constant 0 : index
    %13 = vector.load %arg1[%c0_11, %c3, %c0_12] : memref<1x36x144xf32, #tpu.memory_space<vmem>>, vector<1x32x144xf32>
    %14 = vector.shape_cast %13 : vector<1x32x144xf32> to vector<32x144xf32>
    %c2_13 = arith.constant 2 : index
    %c0_14 = arith.constant 0 : index
    %c0_15 = arith.constant 0 : index
    %15 = vector.load %arg2[%c2_13, %c0_14, %c0_15] : memref<3x144x128xf32, #tpu.memory_space<vmem>>, vector<1x144x128xf32>
    %16 = vector.shape_cast %15 : vector<1x144x128xf32> to vector<144x128xf32>
    %cst_16 = arith.constant dense<0.000000e+00> : vector<32x128xf32>
    %17 = tpu.matmul %14, %16, %cst_16 {dimension_numbers = #tpu.dot_dimension_numbers<[1], [0], [0], [1], [0, 0, 1, 1], [], []>} : vector<32x144xf32>, vector<144x128xf32>, vector<32x128xf32> -> vector<32x128xf32>
    %18 = arith.addf %12, %17 : vector<32x128xf32>
    %c0_17 = arith.constant 0 : index
    %c0_18 = arith.constant 0 : index
    %19 = vector.load %arg3[%c0_17, %c0_18] : memref<1x128xf32, #tpu.memory_space<vmem>>, vector<1x128xf32>
    %20 = vector.broadcast %19 : vector<1x128xf32> to vector<32x128xf32>
    %21 = arith.addf %18, %20 : vector<32x128xf32>
    %cst_19 = arith.constant 0.000000e+00 : f32
    %22 = vector.broadcast %cst_19 : f32 to vector<32x128xf32>
    %23 = arith.cmpf oge, %21, %22 : vector<32x128xf32>
    %cst_20 = arith.constant 2.000000e-01 : f32
    %24 = vector.broadcast %cst_20 : f32 to vector<32x128xf32>
    %25 = arith.mulf %24, %21 : vector<32x128xf32>
    %26 = arith.select %23, %21, %25 : vector<32x128xi1>, vector<32x128xf32>
    %c0_21 = arith.constant 0 : index
    %c0_22 = arith.constant 0 : index
    %c0_23 = arith.constant 0 : index
    %27 = vector.load %arg4[%c0_21, %c0_22, %c0_23] : memref<1x32x128xf32, #tpu.memory_space<vmem>>, vector<1x32x128xf32>
    %28 = vector.shape_cast %27 : vector<1x32x128xf32> to vector<32x128xf32>
    %29 = vector.shape_cast %26 : vector<32x128xf32> to vector<1x32x128xf32>
    tpu.vector_store %arg4[%c0_21, %c0_22, %c0_23], %29 {strides = array<i32>} : memref<1x32x128xf32, #tpu.memory_space<vmem>>, vector<1x32x128xf32>,
    return
  }
  func.func @transform_0(%arg0: i32) -> (i32, i32, i32) {
    %c0_i32 = arith.constant 0 : i32
    %c0_i32_0 = arith.constant 0 : i32
    %c0_i32_1 = arith.constant 0 : i32
    return %arg0, %c0_i32, %c0_i32_0 : i32, i32, i32
  }
  func.func @transform_1(%arg0: i32) -> (i32, i32, i32) {
    %c0_i32 = arith.constant 0 : i32
    %c0_i32_0 = arith.constant 0 : i32
    %c0_i32_1 = arith.constant 0 : i32
    %c0_i32_2 = arith.constant 0 : i32
    return %c0_i32, %c0_i32_0, %c0_i32_1 : i32, i32, i32
  }
  func.func @transform_2(%arg0: i32) -> (i32, i32) {
    %c0_i32 = arith.constant 0 : i32
    %c0_i32_0 = arith.constant 0 : i32
    %c0_i32_1 = arith.constant 0 : i32
    return %c0_i32, %c0_i32_0 : i32, i32
  }
  func.func @transform_3(%arg0: i32) -> (i32, i32, i32) {
    %c0_i32 = arith.constant 0 : i32
    %c0_i32_0 = arith.constant 0 : i32
    %c0_i32_1 = arith.constant 0 : i32
    return %arg0, %c0_i32, %c0_i32_0 : i32, i32, i32
  }
}

module attributes {stable_mosaic.version = 11 : i64} {
  func.func @_conv_kernel(%arg0: i32, %arg1: memref<1x68x136xf32, #tpu.memory_space<vmem>>, %arg2: memref<3x136x128xf32, #tpu.memory_space<vmem>>, %arg3: memref<1x128xf32, #tpu.memory_space<vmem>>, %arg4: memref<1x64x128xf32, #tpu.memory_space<vmem>>) attributes {dimension_semantics = [#tpu.dimension_semantics<parallel>], iteration_bounds = array<i64: 2>, scalar_prefetch = 0 : i64, scratch_operands = 0 : i64, tpu.core_type = #tpu.core_type<tc>, window_params = [{transform_indices = @transform_0, window_bounds = array<i64: 1, 68, 136>}, {pipeline_mode = #tpu.pipeline_mode<synchronous>, transform_indices = @transform_1, window_bounds = array<i64: 3, 136, 128>}, {pipeline_mode = #tpu.pipeline_mode<synchronous>, transform_indices = @transform_2, window_bounds = array<i64: 1, 128>}, {transform_indices = @transform_3, window_bounds = array<i64: 1, 64, 128>}]} {
    %cst = arith.constant 0.000000e+00 : f32
    %0 = vector.broadcast %cst : f32 to vector<64x128xf32>
    %c0 = arith.constant 0 : index
    %c1 = arith.constant 1 : index
    %c0_0 = arith.constant 0 : index
    %1 = vector.load %arg1[%c0, %c1, %c0_0] : memref<1x68x136xf32, #tpu.memory_space<vmem>>, vector<1x64x136xf32>
    %2 = vector.shape_cast %1 : vector<1x64x136xf32> to vector<64x136xf32>
    %c0_1 = arith.constant 0 : index
    %c0_2 = arith.constant 0 : index
    %c0_3 = arith.constant 0 : index
    %3 = vector.load %arg2[%c0_1, %c0_2, %c0_3] : memref<3x136x128xf32, #tpu.memory_space<vmem>>, vector<1x136x128xf32>
    %4 = vector.shape_cast %3 : vector<1x136x128xf32> to vector<136x128xf32>
    %cst_4 = arith.constant dense<0.000000e+00> : vector<64x128xf32>
    %5 = tpu.matmul %2, %4, %cst_4 {dimension_numbers = #tpu.dot_dimension_numbers<[1], [0], [0], [1], [0, 0, 1, 1], [], []>} : vector<64x136xf32>, vector<136x128xf32>, vector<64x128xf32> -> vector<64x128xf32>
    %6 = arith.addf %0, %5 : vector<64x128xf32>
    %c0_5 = arith.constant 0 : index
    %c2 = arith.constant 2 : index
    %c0_6 = arith.constant 0 : index
    %7 = vector.load %arg1[%c0_5, %c2, %c0_6] : memref<1x68x136xf32, #tpu.memory_space<vmem>>, vector<1x64x136xf32>
    %8 = vector.shape_cast %7 : vector<1x64x136xf32> to vector<64x136xf32>
    %c1_7 = arith.constant 1 : index
    %c0_8 = arith.constant 0 : index
    %c0_9 = arith.constant 0 : index
    %9 = vector.load %arg2[%c1_7, %c0_8, %c0_9] : memref<3x136x128xf32, #tpu.memory_space<vmem>>, vector<1x136x128xf32>
    %10 = vector.shape_cast %9 : vector<1x136x128xf32> to vector<136x128xf32>
    %cst_10 = arith.constant dense<0.000000e+00> : vector<64x128xf32>
    %11 = tpu.matmul %8, %10, %cst_10 {dimension_numbers = #tpu.dot_dimension_numbers<[1], [0], [0], [1], [0, 0, 1, 1], [], []>} : vector<64x136xf32>, vector<136x128xf32>, vector<64x128xf32> -> vector<64x128xf32>
    %12 = arith.addf %6, %11 : vector<64x128xf32>
    %c0_11 = arith.constant 0 : index
    %c3 = arith.constant 3 : index
    %c0_12 = arith.constant 0 : index
    %13 = vector.load %arg1[%c0_11, %c3, %c0_12] : memref<1x68x136xf32, #tpu.memory_space<vmem>>, vector<1x64x136xf32>
    %14 = vector.shape_cast %13 : vector<1x64x136xf32> to vector<64x136xf32>
    %c2_13 = arith.constant 2 : index
    %c0_14 = arith.constant 0 : index
    %c0_15 = arith.constant 0 : index
    %15 = vector.load %arg2[%c2_13, %c0_14, %c0_15] : memref<3x136x128xf32, #tpu.memory_space<vmem>>, vector<1x136x128xf32>
    %16 = vector.shape_cast %15 : vector<1x136x128xf32> to vector<136x128xf32>
    %cst_16 = arith.constant dense<0.000000e+00> : vector<64x128xf32>
    %17 = tpu.matmul %14, %16, %cst_16 {dimension_numbers = #tpu.dot_dimension_numbers<[1], [0], [0], [1], [0, 0, 1, 1], [], []>} : vector<64x136xf32>, vector<136x128xf32>, vector<64x128xf32> -> vector<64x128xf32>
    %18 = arith.addf %12, %17 : vector<64x128xf32>
    %c0_17 = arith.constant 0 : index
    %c0_18 = arith.constant 0 : index
    %19 = vector.load %arg3[%c0_17, %c0_18] : memref<1x128xf32, #tpu.memory_space<vmem>>, vector<1x128xf32>
    %20 = vector.broadcast %19 : vector<1x128xf32> to vector<64x128xf32>
    %21 = arith.addf %18, %20 : vector<64x128xf32>
    %cst_19 = arith.constant 0.000000e+00 : f32
    %22 = vector.broadcast %cst_19 : f32 to vector<64x128xf32>
    %23 = arith.cmpf oge, %21, %22 : vector<64x128xf32>
    %cst_20 = arith.constant 2.000000e-01 : f32
    %24 = vector.broadcast %cst_20 : f32 to vector<64x128xf32>
    %25 = arith.mulf %24, %21 : vector<64x128xf32>
    %26 = arith.select %23, %21, %25 : vector<64x128xi1>, vector<64x128xf32>
    %c0_21 = arith.constant 0 : index
    %c0_22 = arith.constant 0 : index
    %c0_23 = arith.constant 0 : index
    %27 = vector.load %arg4[%c0_21, %c0_22, %c0_23] : memref<1x64x128xf32, #tpu.memory_space<vmem>>, vector<1x64x128xf32>
    %28 = vector.shape_cast %27 : vector<1x64x128xf32> to vector<64x128xf32>
    %29 = vector.shape_cast %26 : vector<64x128xf32> to vector<1x64x128xf32>
    tpu.vector_store %arg4[%c0_21, %c0_22, %c0_23], %29 {strides = array<i32>} : memref<1x64x128xf32, #tpu.memory_space<vmem>>, vector<1x64x128xf32>,
    return
  }
  func.func @transform_0(%arg0: i32) -> (i32, i32, i32) {
    %c0_i32 = arith.constant 0 : i32
    %c0_i32_0 = arith.constant 0 : i32
    %c0_i32_1 = arith.constant 0 : i32
    return %arg0, %c0_i32, %c0_i32_0 : i32, i32, i32
  }
  func.func @transform_1(%arg0: i32) -> (i32, i32, i32) {
    %c0_i32 = arith.constant 0 : i32
    %c0_i32_0 = arith.constant 0 : i32
    %c0_i32_1 = arith.constant 0 : i32
    %c0_i32_2 = arith.constant 0 : i32
    return %c0_i32, %c0_i32_0, %c0_i32_1 : i32, i32, i32
  }
  func.func @transform_2(%arg0: i32) -> (i32, i32) {
    %c0_i32 = arith.constant 0 : i32
    %c0_i32_0 = arith.constant 0 : i32
    %c0_i32_1 = arith.constant 0 : i32
    return %c0_i32, %c0_i32_0 : i32, i32
  }
  func.func @transform_3(%arg0: i32) -> (i32, i32, i32) {
    %c0_i32 = arith.constant 0 : i32
    %c0_i32_0 = arith.constant 0 : i32
    %c0_i32_1 = arith.constant 0 : i32
    return %arg0, %c0_i32, %c0_i32_0 : i32, i32, i32
  }
}

module attributes {stable_mosaic.version = 11 : i64} {
  func.func @_conv_kernel(%arg0: i32, %arg1: memref<1x66x132xf32, #tpu.memory_space<vmem>>, %arg2: memref<3x132x192xf32, #tpu.memory_space<vmem>>, %arg3: memref<1x192xf32, #tpu.memory_space<vmem>>, %arg4: memref<1x64x192xf32, #tpu.memory_space<vmem>>) attributes {dimension_semantics = [#tpu.dimension_semantics<parallel>], iteration_bounds = array<i64: 2>, scalar_prefetch = 0 : i64, scratch_operands = 0 : i64, tpu.core_type = #tpu.core_type<tc>, window_params = [{transform_indices = @transform_0, window_bounds = array<i64: 1, 66, 132>}, {pipeline_mode = #tpu.pipeline_mode<synchronous>, transform_indices = @transform_1, window_bounds = array<i64: 3, 132, 192>}, {pipeline_mode = #tpu.pipeline_mode<synchronous>, transform_indices = @transform_2, window_bounds = array<i64: 1, 192>}, {transform_indices = @transform_3, window_bounds = array<i64: 1, 64, 192>}]} {
    %cst = arith.constant 0.000000e+00 : f32
    %0 = vector.broadcast %cst : f32 to vector<64x192xf32>
    %c0 = arith.constant 0 : index
    %c0_0 = arith.constant 0 : index
    %c0_1 = arith.constant 0 : index
    %1 = vector.load %arg1[%c0, %c0_0, %c0_1] : memref<1x66x132xf32, #tpu.memory_space<vmem>>, vector<1x64x132xf32>
    %2 = vector.shape_cast %1 : vector<1x64x132xf32> to vector<64x132xf32>
    %c0_2 = arith.constant 0 : index
    %c0_3 = arith.constant 0 : index
    %c0_4 = arith.constant 0 : index
    %3 = vector.load %arg2[%c0_2, %c0_3, %c0_4] : memref<3x132x192xf32, #tpu.memory_space<vmem>>, vector<1x132x192xf32>
    %4 = vector.shape_cast %3 : vector<1x132x192xf32> to vector<132x192xf32>
    %cst_5 = arith.constant dense<0.000000e+00> : vector<64x192xf32>
    %5 = tpu.matmul %2, %4, %cst_5 {dimension_numbers = #tpu.dot_dimension_numbers<[1], [0], [0], [1], [0, 0, 1, 1], [], []>} : vector<64x132xf32>, vector<132x192xf32>, vector<64x192xf32> -> vector<64x192xf32>
    %6 = arith.addf %0, %5 : vector<64x192xf32>
    %c0_6 = arith.constant 0 : index
    %c1 = arith.constant 1 : index
    %c0_7 = arith.constant 0 : index
    %7 = vector.load %arg1[%c0_6, %c1, %c0_7] : memref<1x66x132xf32, #tpu.memory_space<vmem>>, vector<1x64x132xf32>
    %8 = vector.shape_cast %7 : vector<1x64x132xf32> to vector<64x132xf32>
    %c1_8 = arith.constant 1 : index
    %c0_9 = arith.constant 0 : index
    %c0_10 = arith.constant 0 : index
    %9 = vector.load %arg2[%c1_8, %c0_9, %c0_10] : memref<3x132x192xf32, #tpu.memory_space<vmem>>, vector<1x132x192xf32>
    %10 = vector.shape_cast %9 : vector<1x132x192xf32> to vector<132x192xf32>
    %cst_11 = arith.constant dense<0.000000e+00> : vector<64x192xf32>
    %11 = tpu.matmul %8, %10, %cst_11 {dimension_numbers = #tpu.dot_dimension_numbers<[1], [0], [0], [1], [0, 0, 1, 1], [], []>} : vector<64x132xf32>, vector<132x192xf32>, vector<64x192xf32> -> vector<64x192xf32>
    %12 = arith.addf %6, %11 : vector<64x192xf32>
    %c0_12 = arith.constant 0 : index
    %c2 = arith.constant 2 : index
    %c0_13 = arith.constant 0 : index
    %13 = vector.load %arg1[%c0_12, %c2, %c0_13] : memref<1x66x132xf32, #tpu.memory_space<vmem>>, vector<1x64x132xf32>
    %14 = vector.shape_cast %13 : vector<1x64x132xf32> to vector<64x132xf32>
    %c2_14 = arith.constant 2 : index
    %c0_15 = arith.constant 0 : index
    %c0_16 = arith.constant 0 : index
    %15 = vector.load %arg2[%c2_14, %c0_15, %c0_16] : memref<3x132x192xf32, #tpu.memory_space<vmem>>, vector<1x132x192xf32>
    %16 = vector.shape_cast %15 : vector<1x132x192xf32> to vector<132x192xf32>
    %cst_17 = arith.constant dense<0.000000e+00> : vector<64x192xf32>
    %17 = tpu.matmul %14, %16, %cst_17 {dimension_numbers = #tpu.dot_dimension_numbers<[1], [0], [0], [1], [0, 0, 1, 1], [], []>} : vector<64x132xf32>, vector<132x192xf32>, vector<64x192xf32> -> vector<64x192xf32>
    %18 = arith.addf %12, %17 : vector<64x192xf32>
    %c0_18 = arith.constant 0 : index
    %c0_19 = arith.constant 0 : index
    %19 = vector.load %arg3[%c0_18, %c0_19] : memref<1x192xf32, #tpu.memory_space<vmem>>, vector<1x192xf32>
    %20 = vector.broadcast %19 : vector<1x192xf32> to vector<64x192xf32>
    %21 = arith.addf %18, %20 : vector<64x192xf32>
    %22 = math.tanh %21 : vector<64x192xf32>
    %c0_20 = arith.constant 0 : index
    %c0_21 = arith.constant 0 : index
    %c0_22 = arith.constant 0 : index
    %23 = vector.load %arg4[%c0_20, %c0_21, %c0_22] : memref<1x64x192xf32, #tpu.memory_space<vmem>>, vector<1x64x192xf32>
    %24 = vector.shape_cast %23 : vector<1x64x192xf32> to vector<64x192xf32>
    %25 = vector.shape_cast %22 : vector<64x192xf32> to vector<1x64x192xf32>
    tpu.vector_store %arg4[%c0_20, %c0_21, %c0_22], %25 {strides = array<i32>} : memref<1x64x192xf32, #tpu.memory_space<vmem>>, vector<1x64x192xf32>,
    return
  }
  func.func @transform_0(%arg0: i32) -> (i32, i32, i32) {
    %c0_i32 = arith.constant 0 : i32
    %c0_i32_0 = arith.constant 0 : i32
    %c0_i32_1 = arith.constant 0 : i32
    return %arg0, %c0_i32, %c0_i32_0 : i32, i32, i32
  }
  func.func @transform_1(%arg0: i32) -> (i32, i32, i32) {
    %c0_i32 = arith.constant 0 : i32
    %c0_i32_0 = arith.constant 0 : i32
    %c0_i32_1 = arith.constant 0 : i32
    %c0_i32_2 = arith.constant 0 : i32
    return %c0_i32, %c0_i32_0, %c0_i32_1 : i32, i32, i32
  }
  func.func @transform_2(%arg0: i32) -> (i32, i32) {
    %c0_i32 = arith.constant 0 : i32
    %c0_i32_0 = arith.constant 0 : i32
    %c0_i32_1 = arith.constant 0 : i32
    return %c0_i32, %c0_i32_0 : i32, i32
  }
  func.func @transform_3(%arg0: i32) -> (i32, i32, i32) {
    %c0_i32 = arith.constant 0 : i32
    %c0_i32_0 = arith.constant 0 : i32
    %c0_i32_1 = arith.constant 0 : i32
    return %arg0, %c0_i32, %c0_i32_0 : i32, i32, i32
  }
}

</mosaic_0001>

<llo_original>
// kernel: simple_decoder_forward.6
$region0: #{simple_decoder_forward.6}
  #allocation0 [shape = 'u32[]', space=smem, size = 0x4, offset = 0x4, fixed_abs, tag = 'smem constant byte address 0x4 - core index']
  #allocation1 [shape = 'u32[72,128]{1,0:T(1,128)}', space=vmem, size = 0x9000, scoped, tag = 'internal scratch']
  %s0 = inlined_call_operand.vmem [shape: f32[2,20,160], index: 0, kind: input, shape index: {}]
  %s1 = inlined_call_operand.hbm [shape: f32[3,160,128], index: 1, kind: input, shape index: {}]
  %s2 = inlined_call_operand.hbm [shape: f32[1,128], index: 2, kind: input, shape index: {}]
  %s3 = inlined_call_operand.vmem [shape: f32[2,16,128], index: 3, kind: output, shape index: {}]
  %s4 = sld [smem:[#allocation0]]
  $region53: #{simple_decoder_forward.6} parent=0
    _
  %s6 = ssub.s32 1, %s4
  %s7 = scalar_select 0, %s6, %s4
  $region1: #{simple_decoder_forward.6} parent=0
    #allocation2 [shape = 'u8[245760]{0}', space=vmem, size = 0x3c000, scoped, tag = 'input window, operand 1, single buffered']
    #allocation3 [shape = 's32[2]{0}', space=sflag, size = 0x8, scoped, tag = 'scoped memory for simple_decoder_forward.6']
    #allocation4 [shape = 'u8[512]{0}', space=vmem, size = 0x400, scoped, tag = 'input window, operand 2, single buffered']
    #allocation5 [shape = 's32[1]{0}', space=sflag, size = 0x4, scoped, tag = 'scoped memory for simple_decoder_forward.6']
    %8 = vsyncpa [#allocation3], 0
    %9 = vsyncpa [#allocation5], 0
    loop: start=0, step=1, limit=4
    $region2: #{simple_decoder_forward.6} parent=1 // loop_pre_header
      _
    $region3: #{simple_decoder_forward.6} parent=1 // loop_header
      %s11 = sphi 0, %s15
      %p12 = scmp.ge.s32.totalorder %s11, 4
      %s21 = sphi 0, %s23
      %s24 = sphi 0, %s21
      %s25 = sphi 0, %s24
      %s41 = sphi 0, %s25
      %s45 = sphi 0, %s45
      %s47 = sphi 0, %s45
      %s48 = sphi 0, %s47
      %s62 = sphi 0, %s48
      %s66 = sphi 0, %s66
      %s68 = sphi 0, %s66
      %s69 = sphi 0, %s68
      %s83 = sphi 0, %s69
      %s89 = sphi 0, %s91
      %s92 = sphi 0, %s89
      %s93 = sphi 0, %s92
      %s109 = sphi 0, %s93
    $region4: #{simple_decoder_forward.6} parent=1 // loop_header_branch
      %14 = sbr.rel (%p12) target = $region8
    $region5: #{simple_decoder_forward.6} parent=1 // loop_body
      %s16 = ssub.s32 %s11, 1
      %s17 = ssub.s32 %s11, 2
      %s18 = sadd.s32 %s11, 1
      %s19 = ssub.s32 %s11, %s18
      %p20 = scmp.eq.s32.totalorder %s19, 0
      %s22 = sadd.s32 %s21, 1
      %s23 = scalar_select %p20, %s21, %s22
      %p26 = pneg %p20
      %p27 = scmp.eq.s32.totalorder %s11, 1
      %p28 = por %p26, %p27
      %p29 = scmp.ne.s32.totalorder %s21, %s24
      %p30 = scmp.eq.s32.totalorder %s11, 0
      %p31 = por %p29, %p30
      %p32 = scmp.ne.s32.totalorder %s21, %s24
      %p33 = scmp.eq.s32.totalorder %s16, 1
      %p34 = por %p32, %p33
      %p35 = scmp.ne.s32.totalorder %s24, %s25
      %p36 = scmp.eq.s32.totalorder %s16, 0
      %p37 = por %p35, %p36
      %p38 = scmp.ne.s32.totalorder %s24, %s25
      %p39 = scmp.eq.s32.totalorder %s17, 1
      %p40 = por %p38, %p39
      %p42 = scmp.ne.s32.totalorder %s25, %s41
      %p43 = scmp.eq.s32.totalorder %s17, 0
      %p44 = por %p42, %p43
      %s46 = sadd.s32 %s45, 1
      %p49 = scmp.eq.s32.totalorder %s11, 1
      %p50 = scmp.ne.s32.totalorder %s45, %s47
      %p51 = scmp.eq.s32.totalorder %s11, 0
      %p52 = por %p50, %p51
      %p53 = scmp.ne.s32.totalorder %s45, %s47
      %p54 = scmp.eq.s32.totalorder %s16, 1
      %p55 = por %p53, %p54
      %p56 = scmp.ne.s32.totalorder %s47, %s48
      %p57 = scmp.eq.s32.totalorder %s16, 0
      %p58 = por %p56, %p57
      %p59 = scmp.ne.s32.totalorder %s47, %s48
      %p60 = scmp.eq.s32.totalorder %s17, 1
      %p61 = por %p59, %p60
      %p63 = scmp.ne.s32.totalorder %s48, %s62
      %p64 = scmp.eq.s32.totalorder %s17, 0
      %p65 = por %p63, %p64
      %s67 = sadd.s32 %s66, 1
      %p70 = scmp.eq.s32.totalorder %s11, 1
      %p71 = scmp.ne.s32.totalorder %s66, %s68
      %p72 = scmp.eq.s32.totalorder %s11, 0
      %p73 = por %p71, %p72
      %p74 = scmp.ne.s32.totalorder %s66, %s68
      %p75 = scmp.eq.s32.totalorder %s16, 1
      %p76 = por %p74, %p75
      %p77 = scmp.ne.s32.totalorder %s68, %s69
      %p78 = scmp.eq.s32.totalorder %s16, 0
      %p79 = por %p77, %p78
      %p80 = scmp.ne.s32.totalorder %s68, %s69
      %p81 = scmp.eq.s32.totalorder %s17, 1
      %p82 = por %p80, %p81
      %p84 = scmp.ne.s32.totalorder %s69, %s83
      %p85 = scmp.eq.s32.totalorder %s17, 0
      %p86 = por %p84, %p85
      %s87 = ssub.s32 %s11, %s18
      %p88 = scmp.eq.s32.totalorder %s87, 0
      %s90 = sadd.s32 %s89, 1
      %s91 = scalar_select %p88, %s89, %s90
      %p94 = pneg %p88
      %p95 = scmp.eq.s32.totalorder %s11, 1
      %p96 = por %p94, %p95
      %p97 = scmp.ne.s32.totalorder %s89, %s92
      %p98 = scmp.eq.s32.totalorder %s11, 0
      %p99 = por %p97, %p98
      %p100 = scmp.ne.s32.totalorder %s89, %s92
      %p101 = scmp.eq.s32.totalorder %s16, 1
      %p102 = por %p100, %p101
      %p103 = scmp.ne.s32.totalorder %s92, %s93
      %p104 = scmp.eq.s32.totalorder %s16, 0
      %p105 = por %p103, %p104
      %p106 = scmp.ne.s32.totalorder %s92, %s93
      %p107 = scmp.eq.s32.totalorder %s17, 1
      %p108 = por %p106, %p107
      %p110 = scmp.ne.s32.totalorder %s93, %s109
      %p111 = scmp.eq.s32.totalorder %s17, 0
      %p112 = por %p110, %p111
      %p113 = scmp.le.s32.totalorder 1, %s11
      %p114 = scmp.lt.s32.totalorder %s11, 3
      %p115 = pnand %p113, %p114
      %p116 = pneg %p115
      // Predicated region
      $region9: #{simple_decoder_forward.6} parent=5 // pred_check
        _
      $region10: #{simple_decoder_forward.6} parent=5 // pred_check_branch
        %118 = sbr.rel (%p115) target = $region12
      $region11: #{simple_decoder_forward.6} parent=5 // pred_region
        %s119 = ssub.s32 %s11, 1
        // Predicated region
        $region13: #{simple_decoder_forward.6} parent=11 // pred_check
          %p120 = pneg %p58
        $region14: #{simple_decoder_forward.6} parent=11 // pred_check_branch
          %122 = sbr.rel (%p120) target = $region16
        $region15: #{simple_decoder_forward.6} parent=11 // pred_region
          %124 = vsyncadd [#allocation3], 0
          %s125 = sshll.u32 %s1, 4
          %s126 = int_to_ptr.hbm [resolvable:$true] %s125
          %s127 = sshll.u32 [#allocation2], 4
          %s128 = int_to_ptr.vmem [resolvable:$true] %s127
          %133 = dma.hbm_to_vmem [thread:$0]  %s126, 7680, %s128, [#allocation3], 128, 128, 8
        $region16: #{simple_decoder_forward.6} parent=11 // pred_fallthru
          _
        // Predicated region
        $region17: #{simple_decoder_forward.6} parent=11 // pred_check
          %p134 = pneg %p79
        $region18: #{simple_decoder_forward.6} parent=11 // pred_check_branch
          %136 = sbr.rel (%p134) target = $region20
        $region19: #{simple_decoder_forward.6} parent=11 // pred_region
          %138 = vsyncadd [#allocation5], 0
          %s140 = sshll.u32 %s2, 4
          %s141 = int_to_ptr.hbm [resolvable:$true] %s140
          %s142 = sshll.u32 [#allocation4], 4
          %s143 = int_to_ptr.vmem [resolvable:$true] %s142
          %145 = dma.hbm_to_vmem [thread:$0]  %s141, 16, %s143, [#allocation5]
        $region20: #{simple_decoder_forward.6} parent=11 // pred_fallthru
          _
      $region12: #{simple_decoder_forward.6} parent=5 // pred_fallthru
        _
      %p146 = scmp.lt.s32.totalorder %s11, 2
      // Predicated region
      $region21: #{simple_decoder_forward.6} parent=5 // pred_check
        %p147 = pneg %p146
      $region22: #{simple_decoder_forward.6} parent=5 // pred_check_branch
        %149 = sbr.rel (%p147) target = $region24
      $region23: #{simple_decoder_forward.6} parent=5 // pred_region
        // Predicated region
        $region25: #{simple_decoder_forward.6} parent=23 // pred_check
          %p150 = pneg %p31
        $region26: #{simple_decoder_forward.6} parent=23 // pred_check_branch
          %152 = sbr.rel (%p150) target = $region28
        $region27: #{simple_decoder_forward.6} parent=23 // pred_region
          %p153 = scmp.lt.s32.totalorder %s11, 1
          %s154 = scalar_select %p153, %s11, 1
          %s155 = smul.addr %s154, 6
          %s156 = smul.addr %s155, 8
          %s157 = scalar_lea.vmem %s0, %s156
        $region28: #{simple_decoder_forward.6} parent=23 // pred_fallthru
          _
      $region24: #{simple_decoder_forward.6} parent=5 // pred_fallthru
        _
      %p158 = scmp.le.s32.totalorder 1, %s11
      %p159 = scmp.lt.s32.totalorder %s11, 3
      %p160 = pnand %p158, %p159
      %p161 = pneg %p160
      // Predicated region
      $region29: #{simple_decoder_forward.6} parent=5 // pred_check
        _
      $region30: #{simple_decoder_forward.6} parent=5 // pred_check_branch
        %163 = sbr.rel (%p160) target = $region32
      $region31: #{simple_decoder_forward.6} parent=5 // pred_region
        %s164 = ssub.s32 %s11, 1
        // Predicated region
        $region33: #{simple_decoder_forward.6} parent=31 // pred_check
          %p165 = pneg %p58
        $region34: #{simple_decoder_forward.6} parent=31 // pred_check_branch
          %167 = sbr.rel (%p165) target = $region36
        $region35: #{simple_decoder_forward.6} parent=31 // pred_region
          %169 = dma.done [#allocation3], 7680
        $region36: #{simple_decoder_forward.6} parent=31 // pred_fallthru
          _
        // Predicated region
        $region37: #{simple_decoder_forward.6} parent=31 // pred_check
          %p170 = pneg %p79
        $region38: #{simple_decoder_forward.6} parent=31 // pred_check_branch
          %172 = sbr.rel (%p170) target = $region40
        $region39: #{simple_decoder_forward.6} parent=31 // pred_region
          %174 = dma.done [#allocation5], 16
        $region40: #{simple_decoder_forward.6} parent=31 // pred_fallthru
          _
        %p175 = scmp.lt.s32.totalorder %s16, 1
        %s176 = scalar_select %p175, %s16, 1
        %s177 = smul.addr %s176, 6
        %s178 = smul.addr %s177, 8
        %s179 = scalar_lea.vmem %s0, %s178
        %p180 = pneg %p37
        %p181 = pneg %p34
        %p182 = pneg %p58
        %p183 = pneg %p55
        %p184 = pneg %p79
        %p185 = pneg %p76
        %p186 = pneg %p105
        %p187 = pneg %p102
        %p188 = scmp.lt.s32.totalorder %s16, 1
        %s189 = scalar_select %p188, %s16, 1
        %s190 = smul.addr %s189, 2
        %s191 = smul.addr %s190, 8
        %s192 = scalar_lea.vmem %s3, %s191
        %p193 = scmp.lt.s32.totalorder %s16, 1
        %s194 = scalar_select %p193, %s16, 1
        %s195 = smul.addr %s194, 6
        %s196 = smul.addr %s195, 8
        %s197 = scalar_lea.vmem %s0, %s196
        %p198 = scmp.lt.s32.totalorder %s16, 1
        %s199 = scalar_select %p198, %s16, 1
        %s200 = smul.addr %s199, 2
        %s201 = smul.addr %s200, 8
        %s202 = scalar_lea.vmem %s3, %s201
        %v203 = vld [vmem:[%s197] sm:$0xfe]
        %v204 = vld [vmem:[%s197 + $0x8] sm:$0xfe]
        %v205 = vld [vmem:[%s197 + $0x10] sm:$0xff]
        %v206 = vld [vmem:[%s197 + $0x18] sm:$0xff]
        %v207 = vld [vmem:[%s197 + $0x20] sm:$0x1]
        %v208 = vld [vmem:[%s197 + $0x28] sm:$0x1]
        %v209 = vld [vmem:[#allocation2] sm:$0xff]
        %v210 = vld [vmem:[#allocation2 + $0x8] sm:$0xff]
        %v211 = vld [vmem:[#allocation2 + $0x10] sm:$0xff]
        %v212 = vld [vmem:[#allocation2 + $0x18] sm:$0xff]
        %v213 = vld [vmem:[#allocation2 + $0x20] sm:$0xff]
        %v214 = vld [vmem:[#allocation2 + $0x28] sm:$0xff]
        %v215 = vld [vmem:[#allocation2 + $0x30] sm:$0xff]
        %v216 = vld [vmem:[#allocation2 + $0x38] sm:$0xff]
        %v217 = vld [vmem:[#allocation2 + $0x40] sm:$0xff]
        %v218 = vld [vmem:[#allocation2 + $0x48] sm:$0xff]
        %v219 = vld [vmem:[#allocation2 + $0x50] sm:$0xff]
        %v220 = vld [vmem:[#allocation2 + $0x58] sm:$0xff]
        %v221 = vld [vmem:[#allocation2 + $0x60] sm:$0xff]
        %v222 = vld [vmem:[#allocation2 + $0x68] sm:$0xff]
        %v223 = vld [vmem:[#allocation2 + $0x70] sm:$0xff]
        %v224 = vld [vmem:[#allocation2 + $0x78] sm:$0xff]
        %v225 = vld [vmem:[#allocation2 + $0x80] sm:$0xff]
        %v226 = vld [vmem:[#allocation2 + $0x88] sm:$0xff]
        %v227 = vld [vmem:[#allocation2 + $0x90] sm:$0xff]
        %v228 = vld [vmem:[#allocation2 + $0x98] sm:$0xff]
        %v229 = vld [vmem:[%s197] sm:$0xfc]
        %v230 = vld [vmem:[%s197 + $0x8] sm:$0xfc]
        %v231 = vld [vmem:[%s197 + $0x20] sm:$0x3]
        %v232 = vld [vmem:[%s197 + $0x28] sm:$0x3]
        %s233 = scalar_lea.vmem [#allocation2], 160
        %v234 = vld [vmem:[%s233] sm:$0xff]
        %v235 = vld [vmem:[%s233 + $0x8] sm:$0xff]
        %v236 = vld [vmem:[%s233 + $0x10] sm:$0xff]
        %v237 = vld [vmem:[%s233 + $0x18] sm:$0xff]
        %v238 = vld [vmem:[%s233 + $0x20] sm:$0xff]
        %v239 = vld [vmem:[%s233 + $0x28] sm:$0xff]
        %v240 = vld [vmem:[%s233 + $0x30] sm:$0xff]
        %v241 = vld [vmem:[%s233 + $0x38] sm:$0xff]
        %v242 = vld [vmem:[%s233 + $0x40] sm:$0xff]
        %v243 = vld [vmem:[%s233 + $0x48] sm:$0xff]
        %v244 = vld [vmem:[%s233 + $0x50] sm:$0xff]
        %v245 = vld [vmem:[%s233 + $0x58] sm:$0xff]
        %v246 = vld [vmem:[%s233 + $0x60] sm:$0xff]
        %v247 = vld [vmem:[%s233 + $0x68] sm:$0xff]
        %v248 = vld [vmem:[%s233 + $0x70] sm:$0xff]
        %v249 = vld [vmem:[%s233 + $0x78] sm:$0xff]
        %v250 = vld [vmem:[%s233 + $0x80] sm:$0xff]
        %v251 = vld [vmem:[%s233 + $0x88] sm:$0xff]
        %v252 = vld [vmem:[%s233 + $0x90] sm:$0xff]
        %v253 = vld [vmem:[%s233 + $0x98] sm:$0xff]
        %vm260 = vcmask 1045504
        %v261 = vrot.slane %v229, 2
        %v262 = vrot.slane %v205, 2
        %v263 = vsel %vm260, %v261, %v262
        %v264 = vrot.slane %v230, 2
        %v265 = vrot.slane %v206, 2
        %v266 = vsel %vm260, %v264, %v265
        %v267 = vrot.slane %v231, 2
        %v268 = vsel %vm260, %v262, %v267
        %v269 = vrot.slane %v232, 2
        %v270 = vsel %vm260, %v265, %v269
        %vm273 = vcmask 261120
        %v274 = vsel %vm273, %v266, 0
        %v276 = vsel %vm273, %v270, 0
        %278 = vmatpush.msra.mxu0 %v249
        %279 = vmatpush.msra.mxu0 %v248
        %280 = vmatpush.msra.mxu0 %v247
        %281 = vmatpush.msra.mxu0 %v246
        %282 = vmatpush.msra.mxu0 %v245
        %283 = vmatpush.msra.mxu0 %v244
        %284 = vmatpush.msra.mxu0 %v243
        %285 = vmatpush.msra.mxu0 %v242
        %286 = vmatpush.msra.mxu0 %v241
        %287 = vmatpush.msra.mxu0 %v240
        %288 = vmatpush.msra.mxu0 %v239
        %289 = vmatpush.msra.mxu0 %v238
        %290 = vmatpush.msra.mxu0 %v237
        %291 = vmatpush.msra.mxu0 %v236
        %292 = vmatpush.msra.mxu0 %v235
        %293 = vmatpush.msra.mxu0 %v234
        %294 = vmatmul.f32.gmra.mxu0 %v263
        %v295 = vpop.f32.mrf.mxu0
        %v296 = vadd.f32 0.0, %v295
        %297 = vmatmul.f32.gmra.mxu0 %v268
        %v298 = vpop.f32.mrf.mxu0
        %v299 = vadd.f32 0.0, %v298
        %300 = vdwg.mxu0
        %301 = vmatpush.msra.mxu0 0.0
        %302 = vmatpush.msra.mxu0 0.0
        %303 = vmatpush.msra.mxu0 0.0
        %304 = vmatpush.msra.mxu0 0.0
        %305 = vmatpush.msra.mxu0 0.0
        %306 = vmatpush.msra.mxu0 0.0
        %307 = vmatpush.msra.mxu0 0.0
        %308 = vmatpush.msra.mxu0 0.0
        %309 = vmatpush.msra.mxu0 0.0
        %310 = vmatpush.msra.mxu0 0.0
        %311 = vmatpush.msra.mxu0 0.0
        %312 = vmatpush.msra.mxu0 0.0
        %313 = vmatpush.msra.mxu0 %v253
        %314 = vmatpush.msra.mxu0 %v252
        %315 = vmatpush.msra.mxu0 %v251
        %316 = vmatpush.msra.mxu0 %v250
        %317 = vmatmul.f32.gmra.mxu0 %v274
        %v318 = vpop.f32.mrf.mxu0
        %v319 = vadd.f32 %v296, %v318
        %320 = vmatmul.f32.gmra.mxu0 %v276
        %v321 = vpop.f32.mrf.mxu0
        %v322 = vadd.f32 %v299, %v321
        %323 = vdwg.mxu0
        %vm328 = vcmask 1046528
        %v329 = vrot.slane %v203, 1
        %v330 = vrot.slane %v205, 1
        %v331 = vsel %vm328, %v329, %v330
        %v332 = vrot.slane %v204, 1
        %v333 = vrot.slane %v206, 1
        %v334 = vsel %vm328, %v332, %v333
        %v335 = vrot.slane %v207, 1
        %v336 = vsel %vm328, %v330, %v335
        %v337 = vrot.slane %v208, 1
        %v338 = vsel %vm328, %v333, %v337
        %v341 = vsel %vm273, %v334, 0
        %v343 = vsel %vm273, %v338, 0
        %345 = vmatpush.msra.mxu0 %v224
        %346 = vmatpush.msra.mxu0 %v223
        %347 = vmatpush.msra.mxu0 %v222
        %348 = vmatpush.msra.mxu0 %v221
        %349 = vmatpush.msra.mxu0 %v220
        %350 = vmatpush.msra.mxu0 %v219
        %351 = vmatpush.msra.mxu0 %v218
        %352 = vmatpush.msra.mxu0 %v217
        %353 = vmatpush.msra.mxu0 %v216
        %354 = vmatpush.msra.mxu0 %v215
        %355 = vmatpush.msra.mxu0 %v214
        %356 = vmatpush.msra.mxu0 %v213
        %357 = vmatpush.msra.mxu0 %v212
        %358 = vmatpush.msra.mxu0 %v211
        %359 = vmatpush.msra.mxu0 %v210
        %360 = vmatpush.msra.mxu0 %v209
        %361 = vmatmul.f32.gmra.mxu0 %v331
        %v362 = vpop.f32.mrf.mxu0
        %v363 = vadd.f32 %v319, %v362
        %364 = vmatmul.f32.gmra.mxu0 %v336
        %v365 = vpop.f32.mrf.mxu0
        %v366 = vadd.f32 %v322, %v365
        %367 = vdwg.mxu0
        %368 = vmatpush.msra.mxu0 0.0
        %369 = vmatpush.msra.mxu0 0.0
        %370 = vmatpush.msra.mxu0 0.0
        %371 = vmatpush.msra.mxu0 0.0
        %372 = vmatpush.msra.mxu0 0.0
        %373 = vmatpush.msra.mxu0 0.0
        %374 = vmatpush.msra.mxu0 0.0
        %375 = vmatpush.msra.mxu0 0.0
        %376 = vmatpush.msra.mxu0 0.0
        %377 = vmatpush.msra.mxu0 0.0
        %378 = vmatpush.msra.mxu0 0.0
        %379 = vmatpush.msra.mxu0 0.0
        %380 = vmatpush.msra.mxu0 %v228
        %381 = vmatpush.msra.mxu0 %v227
        %382 = vmatpush.msra.mxu0 %v226
        %383 = vmatpush.msra.mxu0 %v225
        %384 = vmatmul.f32.gmra.mxu0 %v341
        %v385 = vpop.f32.mrf.mxu0
        %v386 = vadd.f32 %v363, %v385
        %387 = vmatmul.f32.gmra.mxu0 %v343
        %v388 = vpop.f32.mrf.mxu0
        %v389 = vadd.f32 %v366, %v388
        %390 = vdwg.mxu0
        %v391 = vld [vmem:[%s197] sm:$0xf8]
        %v392 = vld [vmem:[%s197 + $0x8] sm:$0xf8]
        %v393 = vld [vmem:[%s197 + $0x20] sm:$0x7]
        %v394 = vld [vmem:[%s197 + $0x28] sm:$0x7]
        %s395 = scalar_lea.vmem [#allocation2], 320
        %v396 = vld [vmem:[%s395] sm:$0xff]
        %v397 = vld [vmem:[%s395 + $0x8] sm:$0xff]
        %v398 = vld [vmem:[%s395 + $0x10] sm:$0xff]
        %v399 = vld [vmem:[%s395 + $0x18] sm:$0xff]
        %v400 = vld [vmem:[%s395 + $0x20] sm:$0xff]
        %v401 = vld [vmem:[%s395 + $0x28] sm:$0xff]
        %v402 = vld [vmem:[%s395 + $0x30] sm:$0xff]
        %v403 = vld [vmem:[%s395 + $0x38] sm:$0xff]
        %v404 = vld [vmem:[%s395 + $0x40] sm:$0xff]
        %v405 = vld [vmem:[%s395 + $0x48] sm:$0xff]
        %v406 = vld [vmem:[%s395 + $0x50] sm:$0xff]
        %v407 = vld [vmem:[%s395 + $0x58] sm:$0xff]
        %v408 = vld [vmem:[%s395 + $0x60] sm:$0xff]
        %v409 = vld [vmem:[%s395 + $0x68] sm:$0xff]
        %v410 = vld [vmem:[%s395 + $0x70] sm:$0xff]
        %v411 = vld [vmem:[%s395 + $0x78] sm:$0xff]
        %v412 = vld [vmem:[%s395 + $0x80] sm:$0xff]
        %v413 = vld [vmem:[%s395 + $0x88] sm:$0xff]
        %v414 = vld [vmem:[%s395 + $0x90] sm:$0xff]
        %v415 = vld [vmem:[%s395 + $0x98] sm:$0xff]
        %vm420 = vcmask 1044480
        %v421 = vrot.slane %v391, 3
        %v422 = vrot.slane %v205, 3
        %v423 = vsel %vm420, %v421, %v422
        %v424 = vrot.slane %v392, 3
        %v425 = vrot.slane %v206, 3
        %v426 = vsel %vm420, %v424, %v425
        %v427 = vrot.slane %v393, 3
        %v428 = vsel %vm420, %v422, %v427
        %v429 = vrot.slane %v394, 3
        %v430 = vsel %vm420, %v425, %v429
        %v433 = vsel %vm273, %v426, 0
        %v435 = vsel %vm273, %v430, 0
        %437 = vmatpush.msra.mxu0 %v411
        %438 = vmatpush.msra.mxu0 %v410
        %439 = vmatpush.msra.mxu0 %v409
        %440 = vmatpush.msra.mxu0 %v408
        %441 = vmatpush.msra.mxu0 %v407
        %442 = vmatpush.msra.mxu0 %v406
        %443 = vmatpush.msra.mxu0 %v405
        %444 = vmatpush.msra.mxu0 %v404
        %445 = vmatpush.msra.mxu0 %v403
        %446 = vmatpush.msra.mxu0 %v402
        %447 = vmatpush.msra.mxu0 %v401
        %448 = vmatpush.msra.mxu0 %v400
        %449 = vmatpush.msra.mxu0 %v399
        %450 = vmatpush.msra.mxu0 %v398
        %451 = vmatpush.msra.mxu0 %v397
        %452 = vmatpush.msra.mxu0 %v396
        %453 = vmatmul.f32.gmra.mxu0 %v423
        %v454 = vpop.f32.mrf.mxu0
        %v455 = vadd.f32 0.0, %v454
        %456 = vmatmul.f32.gmra.mxu0 %v428
        %v457 = vpop.f32.mrf.mxu0
        %v458 = vadd.f32 0.0, %v457
        %459 = vdwg.mxu0
        %460 = vmatpush.msra.mxu0 0.0
        %461 = vmatpush.msra.mxu0 0.0
        %462 = vmatpush.msra.mxu0 0.0
        %463 = vmatpush.msra.mxu0 0.0
        %464 = vmatpush.msra.mxu0 0.0
        %465 = vmatpush.msra.mxu0 0.0
        %466 = vmatpush.msra.mxu0 0.0
        %467 = vmatpush.msra.mxu0 0.0
        %468 = vmatpush.msra.mxu0 0.0
        %469 = vmatpush.msra.mxu0 0.0
        %470 = vmatpush.msra.mxu0 0.0
        %471 = vmatpush.msra.mxu0 0.0
        %472 = vmatpush.msra.mxu0 %v415
        %473 = vmatpush.msra.mxu0 %v414
        %474 = vmatpush.msra.mxu0 %v413
        %475 = vmatpush.msra.mxu0 %v412
        %476 = vmatmul.f32.gmra.mxu0 %v433
        %v477 = vpop.f32.mrf.mxu0
        %v478 = vadd.f32 %v455, %v477
        %479 = vmatmul.f32.gmra.mxu0 %v435
        %v480 = vpop.f32.mrf.mxu0
        %v481 = vadd.f32 %v458, %v480
        %482 = vdwg.mxu0
        %v483 = vadd.f32 %v386, %v478
        %v484 = vadd.f32 %v389, %v481
        %v485 = vld [vmem:[#allocation4] sm:$0x1]
        %v487 = vperm.slane %v485, 0
        %v489 = vadd.f32 %v483, %v487
        %v490 = vadd.f32 %v484, %v487
        %vm491 = vcmp.ge.f32.partialorder %v489, 0.0
        %vm492 = vcmp.ge.f32.partialorder %v490, 0.0
        %v493 = vmul.f32 %v489, 0.2
        %v494 = vmul.f32 %v490, 0.2
        %v495 = vsel %vm491, %v489, %v493
        %v496 = vsel %vm492, %v490, %v494
        %497 = vst [vmem:[%s202] sm:$0xff] %v495
        %498 = vst [vmem:[%s202 + $0x8] sm:$0xff] %v496
        %p499 = scmp.lt.s32.totalorder %s16, 1
        %s500 = scalar_select %p499, %s16, 1
        %s501 = smul.addr %s500, 2
        %s502 = smul.addr %s501, 8
        %s503 = scalar_lea.vmem %s3, %s502
        // Predicated region
        $region41: #{simple_decoder_forward.6} parent=31 // pred_check
          %p504 = pneg %p102
        $region42: #{simple_decoder_forward.6} parent=31 // pred_check_branch
          %506 = sbr.rel (%p504) target = $region44
        $region43: #{simple_decoder_forward.6} parent=31 // pred_region
          _
        $region44: #{simple_decoder_forward.6} parent=31 // pred_fallthru
          _
      $region32: #{simple_decoder_forward.6} parent=5 // pred_fallthru
        _
      %p507 = scmp.le.s32.totalorder 2, %s11
      // Predicated region
      $region45: #{simple_decoder_forward.6} parent=5 // pred_check
        %p508 = pneg %p507
      $region46: #{simple_decoder_forward.6} parent=5 // pred_check_branch
        %510 = sbr.rel (%p508) target = $region48
      $region47: #{simple_decoder_forward.6} parent=5 // pred_region
        %s511 = ssub.s32 %s11, 2
        // Predicated region
        $region49: #{simple_decoder_forward.6} parent=47 // pred_check
          %p512 = pneg %p108
        $region50: #{simple_decoder_forward.6} parent=47 // pred_check_branch
          %514 = sbr.rel (%p512) target = $region52
        $region51: #{simple_decoder_forward.6} parent=47 // pred_region
          %p515 = scmp.lt.s32.totalorder %s17, 1
          %s516 = scalar_select %p515, %s17, 1
          %s517 = smul.addr %s516, 2
          %s518 = smul.addr %s517, 8
          %s519 = scalar_lea.vmem %s3, %s518
        $region52: #{simple_decoder_forward.6} parent=47 // pred_fallthru
          _
      $region48: #{simple_decoder_forward.6} parent=5 // pred_fallthru
        _
    $region6: #{simple_decoder_forward.6} parent=1 // loop_footer
      %s15 = sadd.s32 1, %s11
    $region7: #{simple_decoder_forward.6} parent=1 // loop_footer_branch
      %10 = sbr.rel target = $region3
    $region8: #{simple_decoder_forward.6} parent=1 // loop_exit
      _
    %520 = vsyncpa [#allocation3], 1
    %s521 = scalar_lea.sflag [#allocation3], 1
    %522 = vsyncpa %s521, 1
    %523 = vsyncpa [#allocation5], 1

// kernel: simple_decoder_forward.5
$region0: #{simple_decoder_forward.5}
  #allocation0 [shape = 'u32[]', space=smem, size = 0x4, offset = 0x4, fixed_abs, tag = 'smem constant byte address 0x4 - core index']
  #allocation1 [shape = 'u32[72,128]{1,0:T(1,128)}', space=vmem, size = 0x9000, scoped, tag = 'internal scratch']
  %s0 = inlined_call_operand.vmem [shape: f32[2,12,192], index: 0, kind: input, shape index: {}]
  %s1 = inlined_call_operand.hbm [shape: f32[3,192,128], index: 1, kind: input, shape index: {}]
  %s2 = inlined_call_operand.hbm [shape: f32[1,128], index: 2, kind: input, shape index: {}]
  %s3 = inlined_call_operand.vmem [shape: f32[2,8,128], index: 3, kind: output, shape index: {}]
  %s4 = sld [smem:[#allocation0]]
  $region53: #{simple_decoder_forward.5} parent=0
    _
  %s6 = ssub.s32 1, %s4
  %s7 = scalar_select 0, %s6, %s4
  $region1: #{simple_decoder_forward.5} parent=0
    #allocation2 [shape = 'u8[294912]{0}', space=vmem, size = 0x48000, scoped, tag = 'input window, operand 1, single buffered']
    #allocation3 [shape = 's32[2]{0}', space=sflag, size = 0x8, scoped, tag = 'scoped memory for simple_decoder_forward.5']
    #allocation4 [shape = 'u8[512]{0}', space=vmem, size = 0x400, scoped, tag = 'input window, operand 2, single buffered']
    #allocation5 [shape = 's32[1]{0}', space=sflag, size = 0x4, scoped, tag = 'scoped memory for simple_decoder_forward.5']
    %8 = vsyncpa [#allocation3], 0
    %9 = vsyncpa [#allocation5], 0
    loop: start=0, step=1, limit=4
    $region2: #{simple_decoder_forward.5} parent=1 // loop_pre_header
      _
    $region3: #{simple_decoder_forward.5} parent=1 // loop_header
      %s11 = sphi 0, %s15
      %p12 = scmp.ge.s32.totalorder %s11, 4
      %s21 = sphi 0, %s23
      %s24 = sphi 0, %s21
      %s25 = sphi 0, %s24
      %s41 = sphi 0, %s25
      %s45 = sphi 0, %s45
      %s47 = sphi 0, %s45
      %s48 = sphi 0, %s47
      %s62 = sphi 0, %s48
      %s66 = sphi 0, %s66
      %s68 = sphi 0, %s66
      %s69 = sphi 0, %s68
      %s83 = sphi 0, %s69
      %s89 = sphi 0, %s91
      %s92 = sphi 0, %s89
      %s93 = sphi 0, %s92
      %s109 = sphi 0, %s93
    $region4: #{simple_decoder_forward.5} parent=1 // loop_header_branch
      %14 = sbr.rel (%p12) target = $region8
    $region5: #{simple_decoder_forward.5} parent=1 // loop_body
      %s16 = ssub.s32 %s11, 1
      %s17 = ssub.s32 %s11, 2
      %s18 = sadd.s32 %s11, 1
      %s19 = ssub.s32 %s11, %s18
      %p20 = scmp.eq.s32.totalorder %s19, 0
      %s22 = sadd.s32 %s21, 1
      %s23 = scalar_select %p20, %s21, %s22
      %p26 = pneg %p20
      %p27 = scmp.eq.s32.totalorder %s11, 1
      %p28 = por %p26, %p27
      %p29 = scmp.ne.s32.totalorder %s21, %s24
      %p30 = scmp.eq.s32.totalorder %s11, 0
      %p31 = por %p29, %p30
      %p32 = scmp.ne.s32.totalorder %s21, %s24
      %p33 = scmp.eq.s32.totalorder %s16, 1
      %p34 = por %p32, %p33
      %p35 = scmp.ne.s32.totalorder %s24, %s25
      %p36 = scmp.eq.s32.totalorder %s16, 0
      %p37 = por %p35, %p36
      %p38 = scmp.ne.s32.totalorder %s24, %s25
      %p39 = scmp.eq.s32.totalorder %s17, 1
      %p40 = por %p38, %p39
      %p42 = scmp.ne.s32.totalorder %s25, %s41
      %p43 = scmp.eq.s32.totalorder %s17, 0
      %p44 = por %p42, %p43
      %s46 = sadd.s32 %s45, 1
      %p49 = scmp.eq.s32.totalorder %s11, 1
      %p50 = scmp.ne.s32.totalorder %s45, %s47
      %p51 = scmp.eq.s32.totalorder %s11, 0
      %p52 = por %p50, %p51
      %p53 = scmp.ne.s32.totalorder %s45, %s47
      %p54 = scmp.eq.s32.totalorder %s16, 1
      %p55 = por %p53, %p54
      %p56 = scmp.ne.s32.totalorder %s47, %s48
      %p57 = scmp.eq.s32.totalorder %s16, 0
      %p58 = por %p56, %p57
      %p59 = scmp.ne.s32.totalorder %s47, %s48
      %p60 = scmp.eq.s32.totalorder %s17, 1
      %p61 = por %p59, %p60
      %p63 = scmp.ne.s32.totalorder %s48, %s62
      %p64 = scmp.eq.s32.totalorder %s17, 0
      %p65 = por %p63, %p64
      %s67 = sadd.s32 %s66, 1
      %p70 = scmp.eq.s32.totalorder %s11, 1
      %p71 = scmp.ne.s32.totalorder %s66, %s68
      %p72 = scmp.eq.s32.totalorder %s11, 0
      %p73 = por %p71, %p72
      %p74 = scmp.ne.s32.totalorder %s66, %s68
      %p75 = scmp.eq.s32.totalorder %s16, 1
      %p76 = por %p74, %p75
      %p77 = scmp.ne.s32.totalorder %s68, %s69
      %p78 = scmp.eq.s32.totalorder %s16, 0
      %p79 = por %p77, %p78
      %p80 = scmp.ne.s32.totalorder %s68, %s69
      %p81 = scmp.eq.s32.totalorder %s17, 1
      %p82 = por %p80, %p81
      %p84 = scmp.ne.s32.totalorder %s69, %s83
      %p85 = scmp.eq.s32.totalorder %s17, 0
      %p86 = por %p84, %p85
      %s87 = ssub.s32 %s11, %s18
      %p88 = scmp.eq.s32.totalorder %s87, 0
      %s90 = sadd.s32 %s89, 1
      %s91 = scalar_select %p88, %s89, %s90
      %p94 = pneg %p88
      %p95 = scmp.eq.s32.totalorder %s11, 1
      %p96 = por %p94, %p95
      %p97 = scmp.ne.s32.totalorder %s89, %s92
      %p98 = scmp.eq.s32.totalorder %s11, 0
      %p99 = por %p97, %p98
      %p100 = scmp.ne.s32.totalorder %s89, %s92
      %p101 = scmp.eq.s32.totalorder %s16, 1
      %p102 = por %p100, %p101
      %p103 = scmp.ne.s32.totalorder %s92, %s93
      %p104 = scmp.eq.s32.totalorder %s16, 0
      %p105 = por %p103, %p104
      %p106 = scmp.ne.s32.totalorder %s92, %s93
      %p107 = scmp.eq.s32.totalorder %s17, 1
      %p108 = por %p106, %p107
      %p110 = scmp.ne.s32.totalorder %s93, %s109
      %p111 = scmp.eq.s32.totalorder %s17, 0
      %p112 = por %p110, %p111
      %p113 = scmp.le.s32.totalorder 1, %s11
      %p114 = scmp.lt.s32.totalorder %s11, 3
      %p115 = pnand %p113, %p114
      %p116 = pneg %p115
      // Predicated region
      $region9: #{simple_decoder_forward.5} parent=5 // pred_check
        _
      $region10: #{simple_decoder_forward.5} parent=5 // pred_check_branch
        %118 = sbr.rel (%p115) target = $region12
      $region11: #{simple_decoder_forward.5} parent=5 // pred_region
        %s119 = ssub.s32 %s11, 1
        // Predicated region
        $region13: #{simple_decoder_forward.5} parent=11 // pred_check
          %p120 = pneg %p58
        $region14: #{simple_decoder_forward.5} parent=11 // pred_check_branch
          %122 = sbr.rel (%p120) target = $region16
        $region15: #{simple_decoder_forward.5} parent=11 // pred_region
          %124 = vsyncadd [#allocation3], 0
          %s125 = sshll.u32 %s1, 4
          %s126 = int_to_ptr.hbm [resolvable:$true] %s125
          %s127 = sshll.u32 [#allocation2], 4
          %s128 = int_to_ptr.vmem [resolvable:$true] %s127
          %133 = dma.hbm_to_vmem [thread:$0]  %s126, 9216, %s128, [#allocation3], 128, 128, 8
        $region16: #{simple_decoder_forward.5} parent=11 // pred_fallthru
          _
        // Predicated region
        $region17: #{simple_decoder_forward.5} parent=11 // pred_check
          %p134 = pneg %p79
        $region18: #{simple_decoder_forward.5} parent=11 // pred_check_branch
          %136 = sbr.rel (%p134) target = $region20
        $region19: #{simple_decoder_forward.5} parent=11 // pred_region
          %138 = vsyncadd [#allocation5], 0
          %s140 = sshll.u32 %s2, 4
          %s141 = int_to_ptr.hbm [resolvable:$true] %s140
          %s142 = sshll.u32 [#allocation4], 4
          %s143 = int_to_ptr.vmem [resolvable:$true] %s142
          %145 = dma.hbm_to_vmem [thread:$0]  %s141, 16, %s143, [#allocation5]
        $region20: #{simple_decoder_forward.5} parent=11 // pred_fallthru
          _
      $region12: #{simple_decoder_forward.5} parent=5 // pred_fallthru
        _
      %p146 = scmp.lt.s32.totalorder %s11, 2
      // Predicated region
      $region21: #{simple_decoder_forward.5} parent=5 // pred_check
        %p147 = pneg %p146
      $region22: #{simple_decoder_forward.5} parent=5 // pred_check_branch
        %149 = sbr.rel (%p147) target = $region24
      $region23: #{simple_decoder_forward.5} parent=5 // pred_region
        // Predicated region
        $region25: #{simple_decoder_forward.5} parent=23 // pred_check
          %p150 = pneg %p31
        $region26: #{simple_decoder_forward.5} parent=23 // pred_check_branch
          %152 = sbr.rel (%p150) target = $region28
        $region27: #{simple_decoder_forward.5} parent=23 // pred_region
          %p153 = scmp.lt.s32.totalorder %s11, 1
          %s154 = scalar_select %p153, %s11, 1
          %s155 = smul.addr %s154, 4
          %s156 = smul.addr %s155, 8
          %s157 = scalar_lea.vmem %s0, %s156
        $region28: #{simple_decoder_forward.5} parent=23 // pred_fallthru
          _
      $region24: #{simple_decoder_forward.5} parent=5 // pred_fallthru
        _
      %p158 = scmp.le.s32.totalorder 1, %s11
      %p159 = scmp.lt.s32.totalorder %s11, 3
      %p160 = pnand %p158, %p159
      %p161 = pneg %p160
      // Predicated region
      $region29: #{simple_decoder_forward.5} parent=5 // pred_check
        _
      $region30: #{simple_decoder_forward.5} parent=5 // pred_check_branch
        %163 = sbr.rel (%p160) target = $region32
      $region31: #{simple_decoder_forward.5} parent=5 // pred_region
        %s164 = ssub.s32 %s11, 1
        // Predicated region
        $region33: #{simple_decoder_forward.5} parent=31 // pred_check
          %p165 = pneg %p58
        $region34: #{simple_decoder_forward.5} parent=31 // pred_check_branch
          %167 = sbr.rel (%p165) target = $region36
        $region35: #{simple_decoder_forward.5} parent=31 // pred_region
          %169 = dma.done [#allocation3], 9216
        $region36: #{simple_decoder_forward.5} parent=31 // pred_fallthru
          _
        // Predicated region
        $region37: #{simple_decoder_forward.5} parent=31 // pred_check
          %p170 = pneg %p79
        $region38: #{simple_decoder_forward.5} parent=31 // pred_check_branch
          %172 = sbr.rel (%p170) target = $region40
        $region39: #{simple_decoder_forward.5} parent=31 // pred_region
          %174 = dma.done [#allocation5], 16
        $region40: #{simple_decoder_forward.5} parent=31 // pred_fallthru
          _
        %p175 = scmp.lt.s32.totalorder %s16, 1
        %s176 = scalar_select %p175, %s16, 1
        %s177 = smul.addr %s176, 4
        %s178 = smul.addr %s177, 8
        %s179 = scalar_lea.vmem %s0, %s178
        %p180 = pneg %p37
        %p181 = pneg %p34
        %p182 = pneg %p58
        %p183 = pneg %p55
        %p184 = pneg %p79
        %p185 = pneg %p76
        %p186 = pneg %p105
        %p187 = pneg %p102
        %p188 = scmp.lt.s32.totalorder %s16, 1
        %s189 = scalar_select %p188, %s16, 1
        %s190 = smul.addr %s189, 8
        %s191 = scalar_lea.vmem %s3, %s190
        %p192 = scmp.lt.s32.totalorder %s16, 1
        %s193 = scalar_select %p192, %s16, 1
        %s194 = smul.addr %s193, 4
        %s195 = smul.addr %s194, 8
        %s196 = scalar_lea.vmem %s0, %s195
        %p197 = scmp.lt.s32.totalorder %s16, 1
        %s198 = scalar_select %p197, %s16, 1
        %s199 = smul.addr %s198, 8
        %s200 = scalar_lea.vmem %s3, %s199
        %v201 = vld [vmem:[%s196] sm:$0xfe]
        %v202 = vld [vmem:[%s196 + $0x8] sm:$0xfe]
        %v203 = vld [vmem:[%s196 + $0x10] sm:$0x1]
        %v204 = vld [vmem:[%s196 + $0x18] sm:$0x1]
        %v205 = vld [vmem:[#allocation2] sm:$0xff]
        %v206 = vld [vmem:[#allocation2 + $0x8] sm:$0xff]
        %v207 = vld [vmem:[#allocation2 + $0x10] sm:$0xff]
        %v208 = vld [vmem:[#allocation2 + $0x18] sm:$0xff]
        %v209 = vld [vmem:[#allocation2 + $0x20] sm:$0xff]
        %v210 = vld [vmem:[#allocation2 + $0x28] sm:$0xff]
        %v211 = vld [vmem:[#allocation2 + $0x30] sm:$0xff]
        %v212 = vld [vmem:[#allocation2 + $0x38] sm:$0xff]
        %v213 = vld [vmem:[#allocation2 + $0x40] sm:$0xff]
        %v214 = vld [vmem:[#allocation2 + $0x48] sm:$0xff]
        %v215 = vld [vmem:[#allocation2 + $0x50] sm:$0xff]
        %v216 = vld [vmem:[#allocation2 + $0x58] sm:$0xff]
        %v217 = vld [vmem:[#allocation2 + $0x60] sm:$0xff]
        %v218 = vld [vmem:[#allocation2 + $0x68] sm:$0xff]
        %v219 = vld [vmem:[#allocation2 + $0x70] sm:$0xff]
        %v220 = vld [vmem:[#allocation2 + $0x78] sm:$0xff]
        %v221 = vld [vmem:[#allocation2 + $0x80] sm:$0xff]
        %v222 = vld [vmem:[#allocation2 + $0x88] sm:$0xff]
        %v223 = vld [vmem:[#allocation2 + $0x90] sm:$0xff]
        %v224 = vld [vmem:[#allocation2 + $0x98] sm:$0xff]
        %v225 = vld [vmem:[#allocation2 + $0xa0] sm:$0xff]
        %v226 = vld [vmem:[#allocation2 + $0xa8] sm:$0xff]
        %v227 = vld [vmem:[#allocation2 + $0xb0] sm:$0xff]
        %v228 = vld [vmem:[#allocation2 + $0xb8] sm:$0xff]
        %v229 = vld [vmem:[%s196] sm:$0xfc]
        %v230 = vld [vmem:[%s196 + $0x8] sm:$0xfc]
        %v231 = vld [vmem:[%s196 + $0x10] sm:$0x3]
        %v232 = vld [vmem:[%s196 + $0x18] sm:$0x3]
        %s233 = scalar_lea.vmem [#allocation2], 192
        %v234 = vld [vmem:[%s233] sm:$0xff]
        %v235 = vld [vmem:[%s233 + $0x8] sm:$0xff]
        %v236 = vld [vmem:[%s233 + $0x10] sm:$0xff]
        %v237 = vld [vmem:[%s233 + $0x18] sm:$0xff]
        %v238 = vld [vmem:[%s233 + $0x20] sm:$0xff]
        %v239 = vld [vmem:[%s233 + $0x28] sm:$0xff]
        %v240 = vld [vmem:[%s233 + $0x30] sm:$0xff]
        %v241 = vld [vmem:[%s233 + $0x38] sm:$0xff]
        %v242 = vld [vmem:[%s233 + $0x40] sm:$0xff]
        %v243 = vld [vmem:[%s233 + $0x48] sm:$0xff]
        %v244 = vld [vmem:[%s233 + $0x50] sm:$0xff]
        %v245 = vld [vmem:[%s233 + $0x58] sm:$0xff]
        %v246 = vld [vmem:[%s233 + $0x60] sm:$0xff]
        %v247 = vld [vmem:[%s233 + $0x68] sm:$0xff]
        %v248 = vld [vmem:[%s233 + $0x70] sm:$0xff]
        %v249 = vld [vmem:[%s233 + $0x78] sm:$0xff]
        %v250 = vld [vmem:[%s233 + $0x80] sm:$0xff]
        %v251 = vld [vmem:[%s233 + $0x88] sm:$0xff]
        %v252 = vld [vmem:[%s233 + $0x90] sm:$0xff]
        %v253 = vld [vmem:[%s233 + $0x98] sm:$0xff]
        %v254 = vld [vmem:[%s233 + $0xa0] sm:$0xff]
        %v255 = vld [vmem:[%s233 + $0xa8] sm:$0xff]
        %v256 = vld [vmem:[%s233 + $0xb0] sm:$0xff]
        %v257 = vld [vmem:[%s233 + $0xb8] sm:$0xff]
        %vm262 = vcmask 1045504
        %v263 = vrot.slane %v229, 2
        %v264 = vrot.slane %v231, 2
        %v265 = vsel %vm262, %v263, %v264
        %v266 = vrot.slane %v230, 2
        %v267 = vrot.slane %v232, 2
        %v268 = vsel %vm262, %v266, %v267
        %vm270 = vcmask 523264
        %v271 = vsel %vm270, %v268, 0
        %273 = vmatpush.msra.mxu0 %v249
        %274 = vmatpush.msra.mxu0 %v248
        %275 = vmatpush.msra.mxu0 %v247
        %276 = vmatpush.msra.mxu0 %v246
        %277 = vmatpush.msra.mxu0 %v245
        %278 = vmatpush.msra.mxu0 %v244
        %279 = vmatpush.msra.mxu0 %v243
        %280 = vmatpush.msra.mxu0 %v242
        %281 = vmatpush.msra.mxu0 %v241
        %282 = vmatpush.msra.mxu0 %v240
        %283 = vmatpush.msra.mxu0 %v239
        %284 = vmatpush.msra.mxu0 %v238
        %285 = vmatpush.msra.mxu0 %v237
        %286 = vmatpush.msra.mxu0 %v236
        %287 = vmatpush.msra.mxu0 %v235
        %288 = vmatpush.msra.mxu0 %v234
        %289 = vmatmul.f32.gmra.mxu0 %v265
        %v290 = vpop.f32.mrf.mxu0
        %v291 = vadd.f32 0.0, %v290
        %292 = vdwg.mxu0
        %293 = vmatpush.msra.mxu0 0.0
        %294 = vmatpush.msra.mxu0 0.0
        %295 = vmatpush.msra.mxu0 0.0
        %296 = vmatpush.msra.mxu0 0.0
        %297 = vmatpush.msra.mxu0 0.0
        %298 = vmatpush.msra.mxu0 0.0
        %299 = vmatpush.msra.mxu0 0.0
        %300 = vmatpush.msra.mxu0 0.0
        %301 = vmatpush.msra.mxu0 %v257
        %302 = vmatpush.msra.mxu0 %v256
        %303 = vmatpush.msra.mxu0 %v255
        %304 = vmatpush.msra.mxu0 %v254
        %305 = vmatpush.msra.mxu0 %v253
        %306 = vmatpush.msra.mxu0 %v252
        %307 = vmatpush.msra.mxu0 %v251
        %308 = vmatpush.msra.mxu0 %v250
        %309 = vmatmul.f32.gmra.mxu0 %v271
        %v310 = vpop.f32.mrf.mxu0
        %v311 = vadd.f32 %v291, %v310
        %312 = vdwg.mxu0
        %vm317 = vcmask 1046528
        %v318 = vrot.slane %v201, 1
        %v319 = vrot.slane %v203, 1
        %v320 = vsel %vm317, %v318, %v319
        %v321 = vrot.slane %v202, 1
        %v322 = vrot.slane %v204, 1
        %v323 = vsel %vm317, %v321, %v322
        %v325 = vsel %vm270, %v323, 0
        %327 = vmatpush.msra.mxu0 %v220
        %328 = vmatpush.msra.mxu0 %v219
        %329 = vmatpush.msra.mxu0 %v218
        %330 = vmatpush.msra.mxu0 %v217
        %331 = vmatpush.msra.mxu0 %v216
        %332 = vmatpush.msra.mxu0 %v215
        %333 = vmatpush.msra.mxu0 %v214
        %334 = vmatpush.msra.mxu0 %v213
        %335 = vmatpush.msra.mxu0 %v212
        %336 = vmatpush.msra.mxu0 %v211
        %337 = vmatpush.msra.mxu0 %v210
        %338 = vmatpush.msra.mxu0 %v209
        %339 = vmatpush.msra.mxu0 %v208
        %340 = vmatpush.msra.mxu0 %v207
        %341 = vmatpush.msra.mxu0 %v206
        %342 = vmatpush.msra.mxu0 %v205
        %343 = vmatmul.f32.gmra.mxu0 %v320
        %v344 = vpop.f32.mrf.mxu0
        %v345 = vadd.f32 %v311, %v344
        %346 = vdwg.mxu0
        %347 = vmatpush.msra.mxu0 0.0
        %348 = vmatpush.msra.mxu0 0.0
        %349 = vmatpush.msra.mxu0 0.0
        %350 = vmatpush.msra.mxu0 0.0
        %351 = vmatpush.msra.mxu0 0.0
        %352 = vmatpush.msra.mxu0 0.0
        %353 = vmatpush.msra.mxu0 0.0
        %354 = vmatpush.msra.mxu0 0.0
        %355 = vmatpush.msra.mxu0 %v228
        %356 = vmatpush.msra.mxu0 %v227
        %357 = vmatpush.msra.mxu0 %v226
        %358 = vmatpush.msra.mxu0 %v225
        %359 = vmatpush.msra.mxu0 %v224
        %360 = vmatpush.msra.mxu0 %v223
        %361 = vmatpush.msra.mxu0 %v222
        %362 = vmatpush.msra.mxu0 %v221
        %363 = vmatmul.f32.gmra.mxu0 %v325
        %v364 = vpop.f32.mrf.mxu0
        %v365 = vadd.f32 %v345, %v364
        %366 = vdwg.mxu0
        %v367 = vld [vmem:[%s196] sm:$0xf8]
        %v368 = vld [vmem:[%s196 + $0x8] sm:$0xf8]
        %v369 = vld [vmem:[%s196 + $0x10] sm:$0x7]
        %v370 = vld [vmem:[%s196 + $0x18] sm:$0x7]
        %s371 = scalar_lea.vmem [#allocation2], 384
        %v372 = vld [vmem:[%s371] sm:$0xff]
        %v373 = vld [vmem:[%s371 + $0x8] sm:$0xff]
        %v374 = vld [vmem:[%s371 + $0x10] sm:$0xff]
        %v375 = vld [vmem:[%s371 + $0x18] sm:$0xff]
        %v376 = vld [vmem:[%s371 + $0x20] sm:$0xff]
        %v377 = vld [vmem:[%s371 + $0x28] sm:$0xff]
        %v378 = vld [vmem:[%s371 + $0x30] sm:$0xff]
        %v379 = vld [vmem:[%s371 + $0x38] sm:$0xff]
        %v380 = vld [vmem:[%s371 + $0x40] sm:$0xff]
        %v381 = vld [vmem:[%s371 + $0x48] sm:$0xff]
        %v382 = vld [vmem:[%s371 + $0x50] sm:$0xff]
        %v383 = vld [vmem:[%s371 + $0x58] sm:$0xff]
        %v384 = vld [vmem:[%s371 + $0x60] sm:$0xff]
        %v385 = vld [vmem:[%s371 + $0x68] sm:$0xff]
        %v386 = vld [vmem:[%s371 + $0x70] sm:$0xff]
        %v387 = vld [vmem:[%s371 + $0x78] sm:$0xff]
        %v388 = vld [vmem:[%s371 + $0x80] sm:$0xff]
        %v389 = vld [vmem:[%s371 + $0x88] sm:$0xff]
        %v390 = vld [vmem:[%s371 + $0x90] sm:$0xff]
        %v391 = vld [vmem:[%s371 + $0x98] sm:$0xff]
        %v392 = vld [vmem:[%s371 + $0xa0] sm:$0xff]
        %v393 = vld [vmem:[%s371 + $0xa8] sm:$0xff]
        %v394 = vld [vmem:[%s371 + $0xb0] sm:$0xff]
        %v395 = vld [vmem:[%s371 + $0xb8] sm:$0xff]
        %vm400 = vcmask 1044480
        %v401 = vrot.slane %v367, 3
        %v402 = vrot.slane %v369, 3
        %v403 = vsel %vm400, %v401, %v402
        %v404 = vrot.slane %v368, 3
        %v405 = vrot.slane %v370, 3
        %v406 = vsel %vm400, %v404, %v405
        %v408 = vsel %vm270, %v406, 0
        %410 = vmatpush.msra.mxu0 %v387
        %411 = vmatpush.msra.mxu0 %v386
        %412 = vmatpush.msra.mxu0 %v385
        %413 = vmatpush.msra.mxu0 %v384
        %414 = vmatpush.msra.mxu0 %v383
        %415 = vmatpush.msra.mxu0 %v382
        %416 = vmatpush.msra.mxu0 %v381
        %417 = vmatpush.msra.mxu0 %v380
        %418 = vmatpush.msra.mxu0 %v379
        %419 = vmatpush.msra.mxu0 %v378
        %420 = vmatpush.msra.mxu0 %v377
        %421 = vmatpush.msra.mxu0 %v376
        %422 = vmatpush.msra.mxu0 %v375
        %423 = vmatpush.msra.mxu0 %v374
        %424 = vmatpush.msra.mxu0 %v373
        %425 = vmatpush.msra.mxu0 %v372
        %426 = vmatmul.f32.gmra.mxu0 %v403
        %v427 = vpop.f32.mrf.mxu0
        %v428 = vadd.f32 0.0, %v427
        %429 = vdwg.mxu0
        %430 = vmatpush.msra.mxu0 0.0
        %431 = vmatpush.msra.mxu0 0.0
        %432 = vmatpush.msra.mxu0 0.0
        %433 = vmatpush.msra.mxu0 0.0
        %434 = vmatpush.msra.mxu0 0.0
        %435 = vmatpush.msra.mxu0 0.0
        %436 = vmatpush.msra.mxu0 0.0
        %437 = vmatpush.msra.mxu0 0.0
        %438 = vmatpush.msra.mxu0 %v395
        %439 = vmatpush.msra.mxu0 %v394
        %440 = vmatpush.msra.mxu0 %v393
        %441 = vmatpush.msra.mxu0 %v392
        %442 = vmatpush.msra.mxu0 %v391
        %443 = vmatpush.msra.mxu0 %v390
        %444 = vmatpush.msra.mxu0 %v389
        %445 = vmatpush.msra.mxu0 %v388
        %446 = vmatmul.f32.gmra.mxu0 %v408
        %v447 = vpop.f32.mrf.mxu0
        %v448 = vadd.f32 %v428, %v447
        %449 = vdwg.mxu0
        %v450 = vadd.f32 %v365, %v448
        %v451 = vld [vmem:[#allocation4] sm:$0x1]
        %v453 = vperm.slane %v451, 0
        %v455 = vadd.f32 %v450, %v453
        %vm456 = vcmp.ge.f32.partialorder %v455, 0.0
        %v457 = vmul.f32 %v455, 0.2
        %v458 = vsel %vm456, %v455, %v457
        %459 = vst [vmem:[%s200] sm:$0xff] %v458
        %p460 = scmp.lt.s32.totalorder %s16, 1
        %s461 = scalar_select %p460, %s16, 1
        %s462 = smul.addr %s461, 8
        %s463 = scalar_lea.vmem %s3, %s462
        // Predicated region
        $region41: #{simple_decoder_forward.5} parent=31 // pred_check
          %p464 = pneg %p102
        $region42: #{simple_decoder_forward.5} parent=31 // pred_check_branch
          %466 = sbr.rel (%p464) target = $region44
        $region43: #{simple_decoder_forward.5} parent=31 // pred_region
          _
        $region44: #{simple_decoder_forward.5} parent=31 // pred_fallthru
          _
      $region32: #{simple_decoder_forward.5} parent=5 // pred_fallthru
        _
      %p467 = scmp.le.s32.totalorder 2, %s11
      // Predicated region
      $region45: #{simple_decoder_forward.5} parent=5 // pred_check
        %p468 = pneg %p467
      $region46: #{simple_decoder_forward.5} parent=5 // pred_check_branch
        %470 = sbr.rel (%p468) target = $region48
      $region47: #{simple_decoder_forward.5} parent=5 // pred_region
        %s471 = ssub.s32 %s11, 2
        // Predicated region
        $region49: #{simple_decoder_forward.5} parent=47 // pred_check
          %p472 = pneg %p108
        $region50: #{simple_decoder_forward.5} parent=47 // pred_check_branch
          %474 = sbr.rel (%p472) target = $region52
        $region51: #{simple_decoder_forward.5} parent=47 // pred_region
          %p475 = scmp.lt.s32.totalorder %s17, 1
          %s476 = scalar_select %p475, %s17, 1
          %s477 = smul.addr %s476, 8
          %s478 = scalar_lea.vmem %s3, %s477
        $region52: #{simple_decoder_forward.5} parent=47 // pred_fallthru
          _
      $region48: #{simple_decoder_forward.5} parent=5 // pred_fallthru
        _
    $region6: #{simple_decoder_forward.5} parent=1 // loop_footer
      %s15 = sadd.s32 1, %s11
    $region7: #{simple_decoder_forward.5} parent=1 // loop_footer_branch
      %10 = sbr.rel target = $region3
    $region8: #{simple_decoder_forward.5} parent=1 // loop_exit
      _
    %479 = vsyncpa [#allocation3], 1
    %s480 = scalar_lea.sflag [#allocation3], 1
    %481 = vsyncpa %s480, 1
    %482 = vsyncpa [#allocation5], 1

// kernel: simple_decoder_forward.7
$region0: #{simple_decoder_forward.7}
  #allocation0 [shape = 'u32[]', space=smem, size = 0x4, offset = 0x4, fixed_abs, tag = 'smem constant byte address 0x4 - core index']
  #allocation1 [shape = 'u32[72,128]{1,0:T(1,128)}', space=vmem, size = 0x9000, scoped, tag = 'internal scratch']
  %s0 = inlined_call_operand.vmem [shape: f32[2,36,144], index: 0, kind: input, shape index: {}]
  %s1 = inlined_call_operand.vmem [shape: f32[3,144,128], index: 1, kind: input, shape index: {}]
  %s2 = inlined_call_operand.vmem [shape: f32[1,128], index: 2, kind: input, shape index: {}]
  %s3 = inlined_call_operand.vmem [shape: f32[2,32,128], index: 3, kind: output, shape index: {}]
  %s4 = sld [smem:[#allocation0]]
  $region45: #{simple_decoder_forward.7} parent=0
    _
  %s6 = ssub.s32 1, %s4
  %s7 = scalar_select 0, %s6, %s4
  loop: start=0, step=1, limit=4
  $region2: #{simple_decoder_forward.7} parent=0 // loop_pre_header
    _
  $region3: #{simple_decoder_forward.7} parent=0 // loop_header
    %s9 = sphi 0, %s13
    %p10 = scmp.ge.s32.totalorder %s9, 4
    %s19 = sphi 0, %s21
    %s22 = sphi 0, %s19
    %s23 = sphi 0, %s22
    %s39 = sphi 0, %s23
    %s43 = sphi 0, %s43
    %s45 = sphi 0, %s43
    %s46 = sphi 0, %s45
    %s60 = sphi 0, %s46
    %s64 = sphi 0, %s64
    %s66 = sphi 0, %s64
    %s67 = sphi 0, %s66
    %s81 = sphi 0, %s67
    %s87 = sphi 0, %s89
    %s90 = sphi 0, %s87
    %s91 = sphi 0, %s90
    %s107 = sphi 0, %s91
  $region4: #{simple_decoder_forward.7} parent=0 // loop_header_branch
    %12 = sbr.rel (%p10) target = $region8
  $region5: #{simple_decoder_forward.7} parent=0 // loop_body
    %s14 = ssub.s32 %s9, 1
    %s15 = ssub.s32 %s9, 2
    %s16 = sadd.s32 %s9, 1
    %s17 = ssub.s32 %s9, %s16
    %p18 = scmp.eq.s32.totalorder %s17, 0
    %s20 = sadd.s32 %s19, 1
    %s21 = scalar_select %p18, %s19, %s20
    %p24 = pneg %p18
    %p25 = scmp.eq.s32.totalorder %s9, 1
    %p26 = por %p24, %p25
    %p27 = scmp.ne.s32.totalorder %s19, %s22
    %p28 = scmp.eq.s32.totalorder %s9, 0
    %p29 = por %p27, %p28
    %p30 = scmp.ne.s32.totalorder %s19, %s22
    %p31 = scmp.eq.s32.totalorder %s14, 1
    %p32 = por %p30, %p31
    %p33 = scmp.ne.s32.totalorder %s22, %s23
    %p34 = scmp.eq.s32.totalorder %s14, 0
    %p35 = por %p33, %p34
    %p36 = scmp.ne.s32.totalorder %s22, %s23
    %p37 = scmp.eq.s32.totalorder %s15, 1
    %p38 = por %p36, %p37
    %p40 = scmp.ne.s32.totalorder %s23, %s39
    %p41 = scmp.eq.s32.totalorder %s15, 0
    %p42 = por %p40, %p41
    %s44 = sadd.s32 %s43, 1
    %p47 = scmp.eq.s32.totalorder %s9, 1
    %p48 = scmp.ne.s32.totalorder %s43, %s45
    %p49 = scmp.eq.s32.totalorder %s9, 0
    %p50 = por %p48, %p49
    %p51 = scmp.ne.s32.totalorder %s43, %s45
    %p52 = scmp.eq.s32.totalorder %s14, 1
    %p53 = por %p51, %p52
    %p54 = scmp.ne.s32.totalorder %s45, %s46
    %p55 = scmp.eq.s32.totalorder %s14, 0
    %p56 = por %p54, %p55
    %p57 = scmp.ne.s32.totalorder %s45, %s46
    %p58 = scmp.eq.s32.totalorder %s15, 1
    %p59 = por %p57, %p58
    %p61 = scmp.ne.s32.totalorder %s46, %s60
    %p62 = scmp.eq.s32.totalorder %s15, 0
    %p63 = por %p61, %p62
    %s65 = sadd.s32 %s64, 1
    %p68 = scmp.eq.s32.totalorder %s9, 1
    %p69 = scmp.ne.s32.totalorder %s64, %s66
    %p70 = scmp.eq.s32.totalorder %s9, 0
    %p71 = por %p69, %p70
    %p72 = scmp.ne.s32.totalorder %s64, %s66
    %p73 = scmp.eq.s32.totalorder %s14, 1
    %p74 = por %p72, %p73
    %p75 = scmp.ne.s32.totalorder %s66, %s67
    %p76 = scmp.eq.s32.totalorder %s14, 0
    %p77 = por %p75, %p76
    %p78 = scmp.ne.s32.totalorder %s66, %s67
    %p79 = scmp.eq.s32.totalorder %s15, 1
    %p80 = por %p78, %p79
    %p82 = scmp.ne.s32.totalorder %s67, %s81
    %p83 = scmp.eq.s32.totalorder %s15, 0
    %p84 = por %p82, %p83
    %s85 = ssub.s32 %s9, %s16
    %p86 = scmp.eq.s32.totalorder %s85, 0
    %s88 = sadd.s32 %s87, 1
    %s89 = scalar_select %p86, %s87, %s88
    %p92 = pneg %p86
    %p93 = scmp.eq.s32.totalorder %s9, 1
    %p94 = por %p92, %p93
    %p95 = scmp.ne.s32.totalorder %s87, %s90
    %p96 = scmp.eq.s32.totalorder %s9, 0
    %p97 = por %p95, %p96
    %p98 = scmp.ne.s32.totalorder %s87, %s90
    %p99 = scmp.eq.s32.totalorder %s14, 1
    %p100 = por %p98, %p99
    %p101 = scmp.ne.s32.totalorder %s90, %s91
    %p102 = scmp.eq.s32.totalorder %s14, 0
    %p103 = por %p101, %p102
    %p104 = scmp.ne.s32.totalorder %s90, %s91
    %p105 = scmp.eq.s32.totalorder %s15, 1
    %p106 = por %p104, %p105
    %p108 = scmp.ne.s32.totalorder %s91, %s107
    %p109 = scmp.eq.s32.totalorder %s15, 0
    %p110 = por %p108, %p109
    %p111 = scmp.le.s32.totalorder 1, %s9
    %p112 = scmp.lt.s32.totalorder %s9, 3
    %p113 = pnand %p111, %p112
    %p114 = pneg %p113
    // Predicated region
    $region9: #{simple_decoder_forward.7} parent=5 // pred_check
      _
    $region10: #{simple_decoder_forward.7} parent=5 // pred_check_branch
      %116 = sbr.rel (%p113) target = $region12
    $region11: #{simple_decoder_forward.7} parent=5 // pred_region
      %s117 = ssub.s32 %s9, 1
      // Predicated region
      $region13: #{simple_decoder_forward.7} parent=11 // pred_check
        %p118 = pneg %p56
      $region14: #{simple_decoder_forward.7} parent=11 // pred_check_branch
        %120 = sbr.rel (%p118) target = $region16
      $region15: #{simple_decoder_forward.7} parent=11 // pred_region
        _
      $region16: #{simple_decoder_forward.7} parent=11 // pred_fallthru
        _
      // Predicated region
      $region17: #{simple_decoder_forward.7} parent=11 // pred_check
        %p121 = pneg %p77
      $region18: #{simple_decoder_forward.7} parent=11 // pred_check_branch
        %123 = sbr.rel (%p121) target = $region20
      $region19: #{simple_decoder_forward.7} parent=11 // pred_region
        _
      $region20: #{simple_decoder_forward.7} parent=11 // pred_fallthru
        _
    $region12: #{simple_decoder_forward.7} parent=5 // pred_fallthru
      _
    %p124 = scmp.lt.s32.totalorder %s9, 2
    // Predicated region
    $region21: #{simple_decoder_forward.7} parent=5 // pred_check
      %p125 = pneg %p124
    $region22: #{simple_decoder_forward.7} parent=5 // pred_check_branch
      %127 = sbr.rel (%p125) target = $region24
    $region23: #{simple_decoder_forward.7} parent=5 // pred_region
      // Predicated region
      $region25: #{simple_decoder_forward.7} parent=23 // pred_check
        %p128 = pneg %p29
      $region26: #{simple_decoder_forward.7} parent=23 // pred_check_branch
        %130 = sbr.rel (%p128) target = $region28
      $region27: #{simple_decoder_forward.7} parent=23 // pred_region
        %p131 = scmp.lt.s32.totalorder %s9, 1
        %s132 = scalar_select %p131, %s9, 1
        %s133 = smul.addr %s132, 10
        %s134 = smul.addr %s133, 8
        %s135 = scalar_lea.vmem %s0, %s134
      $region28: #{simple_decoder_forward.7} parent=23 // pred_fallthru
        _
    $region24: #{simple_decoder_forward.7} parent=5 // pred_fallthru
      _
    %p136 = scmp.le.s32.totalorder 1, %s9
    %p137 = scmp.lt.s32.totalorder %s9, 3
    %p138 = pnand %p136, %p137
    %p139 = pneg %p138
    // Predicated region
    $region29: #{simple_decoder_forward.7} parent=5 // pred_check
      _
    $region30: #{simple_decoder_forward.7} parent=5 // pred_check_branch
      %141 = sbr.rel (%p138) target = $region32
    $region31: #{simple_decoder_forward.7} parent=5 // pred_region
      %s142 = ssub.s32 %s9, 1
      %p143 = scmp.lt.s32.totalorder %s14, 1
      %s144 = scalar_select %p143, %s14, 1
      %s145 = smul.addr %s144, 10
      %s146 = smul.addr %s145, 8
      %s147 = scalar_lea.vmem %s0, %s146
      %p148 = pneg %p35
      %p149 = pneg %p32
      %p150 = pneg %p56
      %p151 = pneg %p53
      %p152 = pneg %p77
      %p153 = pneg %p74
      %p154 = pneg %p103
      %p155 = pneg %p100
      %p156 = scmp.lt.s32.totalorder %s14, 1
      %s157 = scalar_select %p156, %s14, 1
      %s158 = smul.addr %s157, 4
      %s159 = smul.addr %s158, 8
      %s160 = scalar_lea.vmem %s3, %s159
      %p161 = scmp.lt.s32.totalorder %s14, 1
      %s162 = scalar_select %p161, %s14, 1
      %s163 = smul.addr %s162, 10
      %s164 = smul.addr %s163, 8
      %s165 = scalar_lea.vmem %s0, %s164
      %p166 = scmp.lt.s32.totalorder %s14, 1
      %s167 = scalar_select %p166, %s14, 1
      %s168 = smul.addr %s167, 4
      %s169 = smul.addr %s168, 8
      %s170 = scalar_lea.vmem %s3, %s169
      %v171 = vld [vmem:[%s165] sm:$0xfe]
      %v172 = vld [vmem:[%s165 + $0x8] sm:$0xfe]
      %v173 = vld [vmem:[%s165 + $0x10] sm:$0xff]
      %v174 = vld [vmem:[%s165 + $0x18] sm:$0xff]
      %v175 = vld [vmem:[%s165 + $0x20] sm:$0xff]
      %v176 = vld [vmem:[%s165 + $0x28] sm:$0xff]
      %v177 = vld [vmem:[%s165 + $0x30] sm:$0xff]
      %v178 = vld [vmem:[%s165 + $0x38] sm:$0xff]
      %v179 = vld [vmem:[%s165 + $0x40] sm:$0x1]
      %v180 = vld [vmem:[%s165 + $0x48] sm:$0x1]
      %v181 = vld [vmem:[%s1] sm:$0xff]
      %v182 = vld [vmem:[%s1 + $0x8] sm:$0xff]
      %v183 = vld [vmem:[%s1 + $0x10] sm:$0xff]
      %v184 = vld [vmem:[%s1 + $0x18] sm:$0xff]
      %v185 = vld [vmem:[%s1 + $0x20] sm:$0xff]
      %v186 = vld [vmem:[%s1 + $0x28] sm:$0xff]
      %v187 = vld [vmem:[%s1 + $0x30] sm:$0xff]
      %v188 = vld [vmem:[%s1 + $0x38] sm:$0xff]
      %v189 = vld [vmem:[%s1 + $0x40] sm:$0xff]
      %v190 = vld [vmem:[%s1 + $0x48] sm:$0xff]
      %v191 = vld [vmem:[%s1 + $0x50] sm:$0xff]
      %v192 = vld [vmem:[%s1 + $0x58] sm:$0xff]
      %v193 = vld [vmem:[%s1 + $0x60] sm:$0xff]
      %v194 = vld [vmem:[%s1 + $0x68] sm:$0xff]
      %v195 = vld [vmem:[%s1 + $0x70] sm:$0xff]
      %v196 = vld [vmem:[%s1 + $0x78] sm:$0xff]
      %v197 = vld [vmem:[%s1 + $0x80] sm:$0xff]
      %v198 = vld [vmem:[%s1 + $0x88] sm:$0xff]
      %v199 = vld [vmem:[%s165] sm:$0xfc]
      %v200 = vld [vmem:[%s165 + $0x8] sm:$0xfc]
      %v201 = vld [vmem:[%s165 + $0x40] sm:$0x3]
      %v202 = vld [vmem:[%s165 + $0x48] sm:$0x3]
      %s203 = scalar_lea.vmem %s1, 144
      %v204 = vld [vmem:[%s203] sm:$0xff]
      %v205 = vld [vmem:[%s203 + $0x8] sm:$0xff]
      %v206 = vld [vmem:[%s203 + $0x10] sm:$0xff]
      %v207 = vld [vmem:[%s203 + $0x18] sm:$0xff]
      %v208 = vld [vmem:[%s203 + $0x20] sm:$0xff]
      %v209 = vld [vmem:[%s203 + $0x28] sm:$0xff]
      %v210 = vld [vmem:[%s203 + $0x30] sm:$0xff]
      %v211 = vld [vmem:[%s203 + $0x38] sm:$0xff]
      %v212 = vld [vmem:[%s203 + $0x40] sm:$0xff]
      %v213 = vld [vmem:[%s203 + $0x48] sm:$0xff]
      %v214 = vld [vmem:[%s203 + $0x50] sm:$0xff]
      %v215 = vld [vmem:[%s203 + $0x58] sm:$0xff]
      %v216 = vld [vmem:[%s203 + $0x60] sm:$0xff]
      %v217 = vld [vmem:[%s203 + $0x68] sm:$0xff]
      %v218 = vld [vmem:[%s203 + $0x70] sm:$0xff]
      %v219 = vld [vmem:[%s203 + $0x78] sm:$0xff]
      %v220 = vld [vmem:[%s203 + $0x80] sm:$0xff]
      %v221 = vld [vmem:[%s203 + $0x88] sm:$0xff]
      %vm232 = vcmask 1045504
      %v233 = vrot.slane %v199, 2
      %v234 = vrot.slane %v173, 2
      %v235 = vsel %vm232, %v233, %v234
      %v236 = vrot.slane %v200, 2
      %v237 = vrot.slane %v174, 2
      %v238 = vsel %vm232, %v236, %v237
      %v239 = vrot.slane %v175, 2
      %v240 = vsel %vm232, %v234, %v239
      %v241 = vrot.slane %v176, 2
      %v242 = vsel %vm232, %v237, %v241
      %v243 = vrot.slane %v177, 2
      %v244 = vsel %vm232, %v239, %v243
      %v245 = vrot.slane %v178, 2
      %v246 = vsel %vm232, %v241, %v245
      %v247 = vrot.slane %v201, 2
      %v248 = vsel %vm232, %v243, %v247
      %v249 = vrot.slane %v202, 2
      %v250 = vsel %vm232, %v245, %v249
      %vm255 = vcmask 130048
      %v256 = vsel %vm255, %v238, 0
      %v258 = vsel %vm255, %v242, 0
      %v260 = vsel %vm255, %v246, 0
      %v262 = vsel %vm255, %v250, 0
      %264 = vmatpush.msra.mxu0 %v219
      %265 = vmatpush.msra.mxu0 %v218
      %266 = vmatpush.msra.mxu0 %v217
      %267 = vmatpush.msra.mxu0 %v216
      %268 = vmatpush.msra.mxu0 %v215
      %269 = vmatpush.msra.mxu0 %v214
      %270 = vmatpush.msra.mxu0 %v213
      %271 = vmatpush.msra.mxu0 %v212
      %272 = vmatpush.msra.mxu0 %v211
      %273 = vmatpush.msra.mxu0 %v210
      %274 = vmatpush.msra.mxu0 %v209
      %275 = vmatpush.msra.mxu0 %v208
      %276 = vmatpush.msra.mxu0 %v207
      %277 = vmatpush.msra.mxu0 %v206
      %278 = vmatpush.msra.mxu0 %v205
      %279 = vmatpush.msra.mxu0 %v204
      %280 = vmatmul.f32.gmra.mxu0 %v235
      %v281 = vpop.f32.mrf.mxu0
      %v282 = vadd.f32 0.0, %v281
      %283 = vmatmul.f32.gmra.mxu0 %v240
      %v284 = vpop.f32.mrf.mxu0
      %v285 = vadd.f32 0.0, %v284
      %286 = vmatmul.f32.gmra.mxu0 %v244
      %v287 = vpop.f32.mrf.mxu0
      %v288 = vadd.f32 0.0, %v287
      %289 = vmatmul.f32.gmra.mxu0 %v248
      %v290 = vpop.f32.mrf.mxu0
      %v291 = vadd.f32 0.0, %v290
      %292 = vdwg.mxu0
      %293 = vmatpush.msra.mxu0 0.0
      %294 = vmatpush.msra.mxu0 0.0
      %295 = vmatpush.msra.mxu0 0.0
      %296 = vmatpush.msra.mxu0 0.0
      %297 = vmatpush.msra.mxu0 0.0
      %298 = vmatpush.msra.mxu0 0.0
      %299 = vmatpush.msra.mxu0 0.0
      %300 = vmatpush.msra.mxu0 0.0
      %301 = vmatpush.msra.mxu0 0.0
      %302 = vmatpush.msra.mxu0 0.0
      %303 = vmatpush.msra.mxu0 0.0
      %304 = vmatpush.msra.mxu0 0.0
      %305 = vmatpush.msra.mxu0 0.0
      %306 = vmatpush.msra.mxu0 0.0
      %307 = vmatpush.msra.mxu0 %v221
      %308 = vmatpush.msra.mxu0 %v220
      %309 = vmatmul.f32.gmra.mxu0 %v256
      %v310 = vpop.f32.mrf.mxu0
      %v311 = vadd.f32 %v282, %v310
      %312 = vmatmul.f32.gmra.mxu0 %v258
      %v313 = vpop.f32.mrf.mxu0
      %v314 = vadd.f32 %v285, %v313
      %315 = vmatmul.f32.gmra.mxu0 %v260
      %v316 = vpop.f32.mrf.mxu0
      %v317 = vadd.f32 %v288, %v316
      %318 = vmatmul.f32.gmra.mxu0 %v262
      %v319 = vpop.f32.mrf.mxu0
      %v320 = vadd.f32 %v291, %v319
      %321 = vdwg.mxu0
      %vm326 = vcmask 1046528
      %v327 = vrot.slane %v171, 1
      %v328 = vrot.slane %v173, 1
      %v329 = vsel %vm326, %v327, %v328
      %v330 = vrot.slane %v172, 1
      %v331 = vrot.slane %v174, 1
      %v332 = vsel %vm326, %v330, %v331
      %v333 = vrot.slane %v175, 1
      %v334 = vsel %vm326, %v328, %v333
      %v335 = vrot.slane %v176, 1
      %v336 = vsel %vm326, %v331, %v335
      %v337 = vrot.slane %v177, 1
      %v338 = vsel %vm326, %v333, %v337
      %v339 = vrot.slane %v178, 1
      %v340 = vsel %vm326, %v335, %v339
      %v341 = vrot.slane %v179, 1
      %v342 = vsel %vm326, %v337, %v341
      %v343 = vrot.slane %v180, 1
      %v344 = vsel %vm326, %v339, %v343
      %v349 = vsel %vm255, %v332, 0
      %v351 = vsel %vm255, %v336, 0
      %v353 = vsel %vm255, %v340, 0
      %v355 = vsel %vm255, %v344, 0
      %357 = vmatpush.msra.mxu0 %v196
      %358 = vmatpush.msra.mxu0 %v195
      %359 = vmatpush.msra.mxu0 %v194
      %360 = vmatpush.msra.mxu0 %v193
      %361 = vmatpush.msra.mxu0 %v192
      %362 = vmatpush.msra.mxu0 %v191
      %363 = vmatpush.msra.mxu0 %v190
      %364 = vmatpush.msra.mxu0 %v189
      %365 = vmatpush.msra.mxu0 %v188
      %366 = vmatpush.msra.mxu0 %v187
      %367 = vmatpush.msra.mxu0 %v186
      %368 = vmatpush.msra.mxu0 %v185
      %369 = vmatpush.msra.mxu0 %v184
      %370 = vmatpush.msra.mxu0 %v183
      %371 = vmatpush.msra.mxu0 %v182
      %372 = vmatpush.msra.mxu0 %v181
      %373 = vmatmul.f32.gmra.mxu0 %v329
      %v374 = vpop.f32.mrf.mxu0
      %v375 = vadd.f32 %v311, %v374
      %376 = vmatmul.f32.gmra.mxu0 %v334
      %v377 = vpop.f32.mrf.mxu0
      %v378 = vadd.f32 %v314, %v377
      %379 = vmatmul.f32.gmra.mxu0 %v338
      %v380 = vpop.f32.mrf.mxu0
      %v381 = vadd.f32 %v317, %v380
      %382 = vmatmul.f32.gmra.mxu0 %v342
      %v383 = vpop.f32.mrf.mxu0
      %v384 = vadd.f32 %v320, %v383
      %385 = vdwg.mxu0
      %386 = vmatpush.msra.mxu0 0.0
      %387 = vmatpush.msra.mxu0 0.0
      %388 = vmatpush.msra.mxu0 0.0
      %389 = vmatpush.msra.mxu0 0.0
      %390 = vmatpush.msra.mxu0 0.0
      %391 = vmatpush.msra.mxu0 0.0
      %392 = vmatpush.msra.mxu0 0.0
      %393 = vmatpush.msra.mxu0 0.0
      %394 = vmatpush.msra.mxu0 0.0
      %395 = vmatpush.msra.mxu0 0.0
      %396 = vmatpush.msra.mxu0 0.0
      %397 = vmatpush.msra.mxu0 0.0
      %398 = vmatpush.msra.mxu0 0.0
      %399 = vmatpush.msra.mxu0 0.0
      %400 = vmatpush.msra.mxu0 %v198
      %401 = vmatpush.msra.mxu0 %v197
      %402 = vmatmul.f32.gmra.mxu0 %v349
      %v403 = vpop.f32.mrf.mxu0
      %v404 = vadd.f32 %v375, %v403
      %405 = vmatmul.f32.gmra.mxu0 %v351
      %v406 = vpop.f32.mrf.mxu0
      %v407 = vadd.f32 %v378, %v406
      %408 = vmatmul.f32.gmra.mxu0 %v353
      %v409 = vpop.f32.mrf.mxu0
      %v410 = vadd.f32 %v381, %v409
      %411 = vmatmul.f32.gmra.mxu0 %v355
      %v412 = vpop.f32.mrf.mxu0
      %v413 = vadd.f32 %v384, %v412
      %414 = vdwg.mxu0
      %v415 = vld [vmem:[%s165] sm:$0xf8]
      %v416 = vld [vmem:[%s165 + $0x8] sm:$0xf8]
      %v417 = vld [vmem:[%s165 + $0x40] sm:$0x7]
      %v418 = vld [vmem:[%s165 + $0x48] sm:$0x7]
      %s419 = scalar_lea.vmem %s1, 288
      %v420 = vld [vmem:[%s419] sm:$0xff]
      %v421 = vld [vmem:[%s419 + $0x8] sm:$0xff]
      %v422 = vld [vmem:[%s419 + $0x10] sm:$0xff]
      %v423 = vld [vmem:[%s419 + $0x18] sm:$0xff]
      %v424 = vld [vmem:[%s419 + $0x20] sm:$0xff]
      %v425 = vld [vmem:[%s419 + $0x28] sm:$0xff]
      %v426 = vld [vmem:[%s419 + $0x30] sm:$0xff]
      %v427 = vld [vmem:[%s419 + $0x38] sm:$0xff]
      %v428 = vld [vmem:[%s419 + $0x40] sm:$0xff]
      %v429 = vld [vmem:[%s419 + $0x48] sm:$0xff]
      %v430 = vld [vmem:[%s419 + $0x50] sm:$0xff]
      %v431 = vld [vmem:[%s419 + $0x58] sm:$0xff]
      %v432 = vld [vmem:[%s419 + $0x60] sm:$0xff]
      %v433 = vld [vmem:[%s419 + $0x68] sm:$0xff]
      %v434 = vld [vmem:[%s419 + $0x70] sm:$0xff]
      %v435 = vld [vmem:[%s419 + $0x78] sm:$0xff]
      %v436 = vld [vmem:[%s419 + $0x80] sm:$0xff]
      %v437 = vld [vmem:[%s419 + $0x88] sm:$0xff]
      %vm442 = vcmask 1044480
      %v443 = vrot.slane %v415, 3
      %v444 = vrot.slane %v173, 3
      %v445 = vsel %vm442, %v443, %v444
      %v446 = vrot.slane %v416, 3
      %v447 = vrot.slane %v174, 3
      %v448 = vsel %vm442, %v446, %v447
      %v449 = vrot.slane %v175, 3
      %v450 = vsel %vm442, %v444, %v449
      %v451 = vrot.slane %v176, 3
      %v452 = vsel %vm442, %v447, %v451
      %v453 = vrot.slane %v177, 3
      %v454 = vsel %vm442, %v449, %v453
      %v455 = vrot.slane %v178, 3
      %v456 = vsel %vm442, %v451, %v455
      %v457 = vrot.slane %v417, 3
      %v458 = vsel %vm442, %v453, %v457
      %v459 = vrot.slane %v418, 3
      %v460 = vsel %vm442, %v455, %v459
      %v465 = vsel %vm255, %v448, 0
      %v467 = vsel %vm255, %v452, 0
      %v469 = vsel %vm255, %v456, 0
      %v471 = vsel %vm255, %v460, 0
      %473 = vmatpush.msra.mxu0 %v435
      %474 = vmatpush.msra.mxu0 %v434
      %475 = vmatpush.msra.mxu0 %v433
      %476 = vmatpush.msra.mxu0 %v432
      %477 = vmatpush.msra.mxu0 %v431
      %478 = vmatpush.msra.mxu0 %v430
      %479 = vmatpush.msra.mxu0 %v429
      %480 = vmatpush.msra.mxu0 %v428
      %481 = vmatpush.msra.mxu0 %v427
      %482 = vmatpush.msra.mxu0 %v426
      %483 = vmatpush.msra.mxu0 %v425
      %484 = vmatpush.msra.mxu0 %v424
      %485 = vmatpush.msra.mxu0 %v423
      %486 = vmatpush.msra.mxu0 %v422
      %487 = vmatpush.msra.mxu0 %v421
      %488 = vmatpush.msra.mxu0 %v420
      %489 = vmatmul.f32.gmra.mxu0 %v445
      %v490 = vpop.f32.mrf.mxu0
      %v491 = vadd.f32 0.0, %v490
      %492 = vmatmul.f32.gmra.mxu0 %v450
      %v493 = vpop.f32.mrf.mxu0
      %v494 = vadd.f32 0.0, %v493
      %495 = vmatmul.f32.gmra.mxu0 %v454
      %v496 = vpop.f32.mrf.mxu0
      %v497 = vadd.f32 0.0, %v496
      %498 = vmatmul.f32.gmra.mxu0 %v458
      %v499 = vpop.f32.mrf.mxu0
      %v500 = vadd.f32 0.0, %v499
      %501 = vdwg.mxu0
      %502 = vmatpush.msra.mxu0 0.0
      %503 = vmatpush.msra.mxu0 0.0
      %504 = vmatpush.msra.mxu0 0.0
      %505 = vmatpush.msra.mxu0 0.0
      %506 = vmatpush.msra.mxu0 0.0
      %507 = vmatpush.msra.mxu0 0.0
      %508 = vmatpush.msra.mxu0 0.0
      %509 = vmatpush.msra.mxu0 0.0
      %510 = vmatpush.msra.mxu0 0.0
      %511 = vmatpush.msra.mxu0 0.0
      %512 = vmatpush.msra.mxu0 0.0
      %513 = vmatpush.msra.mxu0 0.0
      %514 = vmatpush.msra.mxu0 0.0
      %515 = vmatpush.msra.mxu0 0.0
      %516 = vmatpush.msra.mxu0 %v437
      %517 = vmatpush.msra.mxu0 %v436
      %518 = vmatmul.f32.gmra.mxu0 %v465
      %v519 = vpop.f32.mrf.mxu0
      %v520 = vadd.f32 %v491, %v519
      %521 = vmatmul.f32.gmra.mxu0 %v467
      %v522 = vpop.f32.mrf.mxu0
      %v523 = vadd.f32 %v494, %v522
      %524 = vmatmul.f32.gmra.mxu0 %v469
      %v525 = vpop.f32.mrf.mxu0
      %v526 = vadd.f32 %v497, %v525
      %527 = vmatmul.f32.gmra.mxu0 %v471
      %v528 = vpop.f32.mrf.mxu0
      %v529 = vadd.f32 %v500, %v528
      %530 = vdwg.mxu0
      %v531 = vadd.f32 %v404, %v520
      %v532 = vadd.f32 %v407, %v523
      %v533 = vadd.f32 %v410, %v526
      %v534 = vadd.f32 %v413, %v529
      %v535 = vld [vmem:[%s2] sm:$0x1]
      %v537 = vperm.slane %v535, 0
      %v539 = vadd.f32 %v531, %v537
      %v540 = vadd.f32 %v532, %v537
      %v541 = vadd.f32 %v533, %v537
      %v542 = vadd.f32 %v534, %v537
      %vm543 = vcmp.ge.f32.partialorder %v539, 0.0
      %vm544 = vcmp.ge.f32.partialorder %v540, 0.0
      %vm545 = vcmp.ge.f32.partialorder %v541, 0.0
      %vm546 = vcmp.ge.f32.partialorder %v542, 0.0
      %v547 = vmul.f32 %v539, 0.2
      %v548 = vmul.f32 %v540, 0.2
      %v549 = vmul.f32 %v541, 0.2
      %v550 = vmul.f32 %v542, 0.2
      %v551 = vsel %vm543, %v539, %v547
      %v552 = vsel %vm544, %v540, %v548
      %v553 = vsel %vm545, %v541, %v549
      %v554 = vsel %vm546, %v542, %v550
      %555 = vst [vmem:[%s170] sm:$0xff] %v551
      %556 = vst [vmem:[%s170 + $0x8] sm:$0xff] %v552
      %557 = vst [vmem:[%s170 + $0x10] sm:$0xff] %v553
      %558 = vst [vmem:[%s170 + $0x18] sm:$0xff] %v554
      %p559 = scmp.lt.s32.totalorder %s14, 1
      %s560 = scalar_select %p559, %s14, 1
      %s561 = smul.addr %s560, 4
      %s562 = smul.addr %s561, 8
      %s563 = scalar_lea.vmem %s3, %s562
      // Predicated region
      $region33: #{simple_decoder_forward.7} parent=31 // pred_check
        %p564 = pneg %p100
      $region34: #{simple_decoder_forward.7} parent=31 // pred_check_branch
        %566 = sbr.rel (%p564) target = $region36
      $region35: #{simple_decoder_forward.7} parent=31 // pred_region
        _
      $region36: #{simple_decoder_forward.7} parent=31 // pred_fallthru
        _
    $region32: #{simple_decoder_forward.7} parent=5 // pred_fallthru
      _
    %p567 = scmp.le.s32.totalorder 2, %s9
    // Predicated region
    $region37: #{simple_decoder_forward.7} parent=5 // pred_check
      %p568 = pneg %p567
    $region38: #{simple_decoder_forward.7} parent=5 // pred_check_branch
      %570 = sbr.rel (%p568) target = $region40
    $region39: #{simple_decoder_forward.7} parent=5 // pred_region
      %s571 = ssub.s32 %s9, 2
      // Predicated region
      $region41: #{simple_decoder_forward.7} parent=39 // pred_check
        %p572 = pneg %p106
      $region42: #{simple_decoder_forward.7} parent=39 // pred_check_branch
        %574 = sbr.rel (%p572) target = $region44
      $region43: #{simple_decoder_forward.7} parent=39 // pred_region
        %p575 = scmp.lt.s32.totalorder %s15, 1
        %s576 = scalar_select %p575, %s15, 1
        %s577 = smul.addr %s576, 4
        %s578 = smul.addr %s577, 8
        %s579 = scalar_lea.vmem %s3, %s578
      $region44: #{simple_decoder_forward.7} parent=39 // pred_fallthru
        _
    $region40: #{simple_decoder_forward.7} parent=5 // pred_fallthru
      _
  $region6: #{simple_decoder_forward.7} parent=0 // loop_footer
    %s13 = sadd.s32 1, %s9
  $region7: #{simple_decoder_forward.7} parent=0 // loop_footer_branch
    %8 = sbr.rel target = $region3
  $region8: #{simple_decoder_forward.7} parent=0 // loop_exit
    _

// kernel: simple_decoder_forward.8
$region0: #{simple_decoder_forward.8}
  #allocation0 [shape = 'u32[]', space=smem, size = 0x4, offset = 0x4, fixed_abs, tag = 'smem constant byte address 0x4 - core index']
  #allocation1 [shape = 'u32[72,128]{1,0:T(1,128)}', space=vmem, size = 0x9000, scoped, tag = 'internal scratch']
  %s0 = inlined_call_operand.vmem [shape: f32[2,68,136], index: 0, kind: input, shape index: {}]
  %s1 = inlined_call_operand.vmem [shape: f32[3,136,128], index: 1, kind: input, shape index: {}]
  %s2 = inlined_call_operand.vmem [shape: f32[1,128], index: 2, kind: input, shape index: {}]
  %s3 = inlined_call_operand.vmem [shape: f32[2,64,128], index: 3, kind: output, shape index: {}]
  %s4 = sld [smem:[#allocation0]]
  $region45: #{simple_decoder_forward.8} parent=0
    _
  %s6 = ssub.s32 1, %s4
  %s7 = scalar_select 0, %s6, %s4
  loop: start=0, step=1, limit=4
  $region2: #{simple_decoder_forward.8} parent=0 // loop_pre_header
    _
  $region3: #{simple_decoder_forward.8} parent=0 // loop_header
    %s9 = sphi 0, %s13
    %p10 = scmp.ge.s32.totalorder %s9, 4
    %s19 = sphi 0, %s21
    %s22 = sphi 0, %s19
    %s23 = sphi 0, %s22
    %s39 = sphi 0, %s23
    %s43 = sphi 0, %s43
    %s45 = sphi 0, %s43
    %s46 = sphi 0, %s45
    %s60 = sphi 0, %s46
    %s64 = sphi 0, %s64
    %s66 = sphi 0, %s64
    %s67 = sphi 0, %s66
    %s81 = sphi 0, %s67
    %s87 = sphi 0, %s89
    %s90 = sphi 0, %s87
    %s91 = sphi 0, %s90
    %s107 = sphi 0, %s91
  $region4: #{simple_decoder_forward.8} parent=0 // loop_header_branch
    %12 = sbr.rel (%p10) target = $region8
  $region5: #{simple_decoder_forward.8} parent=0 // loop_body
    %s14 = ssub.s32 %s9, 1
    %s15 = ssub.s32 %s9, 2
    %s16 = sadd.s32 %s9, 1
    %s17 = ssub.s32 %s9, %s16
    %p18 = scmp.eq.s32.totalorder %s17, 0
    %s20 = sadd.s32 %s19, 1
    %s21 = scalar_select %p18, %s19, %s20
    %p24 = pneg %p18
    %p25 = scmp.eq.s32.totalorder %s9, 1
    %p26 = por %p24, %p25
    %p27 = scmp.ne.s32.totalorder %s19, %s22
    %p28 = scmp.eq.s32.totalorder %s9, 0
    %p29 = por %p27, %p28
    %p30 = scmp.ne.s32.totalorder %s19, %s22
    %p31 = scmp.eq.s32.totalorder %s14, 1
    %p32 = por %p30, %p31
    %p33 = scmp.ne.s32.totalorder %s22, %s23
    %p34 = scmp.eq.s32.totalorder %s14, 0
    %p35 = por %p33, %p34
    %p36 = scmp.ne.s32.totalorder %s22, %s23
    %p37 = scmp.eq.s32.totalorder %s15, 1
    %p38 = por %p36, %p37
    %p40 = scmp.ne.s32.totalorder %s23, %s39
    %p41 = scmp.eq.s32.totalorder %s15, 0
    %p42 = por %p40, %p41
    %s44 = sadd.s32 %s43, 1
    %p47 = scmp.eq.s32.totalorder %s9, 1
    %p48 = scmp.ne.s32.totalorder %s43, %s45
    %p49 = scmp.eq.s32.totalorder %s9, 0
    %p50 = por %p48, %p49
    %p51 = scmp.ne.s32.totalorder %s43, %s45
    %p52 = scmp.eq.s32.totalorder %s14, 1
    %p53 = por %p51, %p52
    %p54 = scmp.ne.s32.totalorder %s45, %s46
    %p55 = scmp.eq.s32.totalorder %s14, 0
    %p56 = por %p54, %p55
    %p57 = scmp.ne.s32.totalorder %s45, %s46
    %p58 = scmp.eq.s32.totalorder %s15, 1
    %p59 = por %p57, %p58
    %p61 = scmp.ne.s32.totalorder %s46, %s60
    %p62 = scmp.eq.s32.totalorder %s15, 0
    %p63 = por %p61, %p62
    %s65 = sadd.s32 %s64, 1
    %p68 = scmp.eq.s32.totalorder %s9, 1
    %p69 = scmp.ne.s32.totalorder %s64, %s66
    %p70 = scmp.eq.s32.totalorder %s9, 0
    %p71 = por %p69, %p70
    %p72 = scmp.ne.s32.totalorder %s64, %s66
    %p73 = scmp.eq.s32.totalorder %s14, 1
    %p74 = por %p72, %p73
    %p75 = scmp.ne.s32.totalorder %s66, %s67
    %p76 = scmp.eq.s32.totalorder %s14, 0
    %p77 = por %p75, %p76
    %p78 = scmp.ne.s32.totalorder %s66, %s67
    %p79 = scmp.eq.s32.totalorder %s15, 1
    %p80 = por %p78, %p79
    %p82 = scmp.ne.s32.totalorder %s67, %s81
    %p83 = scmp.eq.s32.totalorder %s15, 0
    %p84 = por %p82, %p83
    %s85 = ssub.s32 %s9, %s16
    %p86 = scmp.eq.s32.totalorder %s85, 0
    %s88 = sadd.s32 %s87, 1
    %s89 = scalar_select %p86, %s87, %s88
    %p92 = pneg %p86
    %p93 = scmp.eq.s32.totalorder %s9, 1
    %p94 = por %p92, %p93
    %p95 = scmp.ne.s32.totalorder %s87, %s90
    %p96 = scmp.eq.s32.totalorder %s9, 0
    %p97 = por %p95, %p96
    %p98 = scmp.ne.s32.totalorder %s87, %s90
    %p99 = scmp.eq.s32.totalorder %s14, 1
    %p100 = por %p98, %p99
    %p101 = scmp.ne.s32.totalorder %s90, %s91
    %p102 = scmp.eq.s32.totalorder %s14, 0
    %p103 = por %p101, %p102
    %p104 = scmp.ne.s32.totalorder %s90, %s91
    %p105 = scmp.eq.s32.totalorder %s15, 1
    %p106 = por %p104, %p105
    %p108 = scmp.ne.s32.totalorder %s91, %s107
    %p109 = scmp.eq.s32.totalorder %s15, 0
    %p110 = por %p108, %p109
    %p111 = scmp.le.s32.totalorder 1, %s9
    %p112 = scmp.lt.s32.totalorder %s9, 3
    %p113 = pnand %p111, %p112
    %p114 = pneg %p113
    // Predicated region
    $region9: #{simple_decoder_forward.8} parent=5 // pred_check
      _
    $region10: #{simple_decoder_forward.8} parent=5 // pred_check_branch
      %116 = sbr.rel (%p113) target = $region12
    $region11: #{simple_decoder_forward.8} parent=5 // pred_region
      %s117 = ssub.s32 %s9, 1
      // Predicated region
      $region13: #{simple_decoder_forward.8} parent=11 // pred_check
        %p118 = pneg %p56
      $region14: #{simple_decoder_forward.8} parent=11 // pred_check_branch
        %120 = sbr.rel (%p118) target = $region16
      $region15: #{simple_decoder_forward.8} parent=11 // pred_region
        _
      $region16: #{simple_decoder_forward.8} parent=11 // pred_fallthru
        _
      // Predicated region
      $region17: #{simple_decoder_forward.8} parent=11 // pred_check
        %p121 = pneg %p77
      $region18: #{simple_decoder_forward.8} parent=11 // pred_check_branch
        %123 = sbr.rel (%p121) target = $region20
      $region19: #{simple_decoder_forward.8} parent=11 // pred_region
        _
      $region20: #{simple_decoder_forward.8} parent=11 // pred_fallthru
        _
    $region12: #{simple_decoder_forward.8} parent=5 // pred_fallthru
      _
    %p124 = scmp.lt.s32.totalorder %s9, 2
    // Predicated region
    $region21: #{simple_decoder_forward.8} parent=5 // pred_check
      %p125 = pneg %p124
    $region22: #{simple_decoder_forward.8} parent=5 // pred_check_branch
      %127 = sbr.rel (%p125) target = $region24
    $region23: #{simple_decoder_forward.8} parent=5 // pred_region
      // Predicated region
      $region25: #{simple_decoder_forward.8} parent=23 // pred_check
        %p128 = pneg %p29
      $region26: #{simple_decoder_forward.8} parent=23 // pred_check_branch
        %130 = sbr.rel (%p128) target = $region28
      $region27: #{simple_decoder_forward.8} parent=23 // pred_region
        %p131 = scmp.lt.s32.totalorder %s9, 1
        %s132 = scalar_select %p131, %s9, 1
        %s133 = smul.addr %s132, 18
        %s134 = smul.addr %s133, 8
        %s135 = scalar_lea.vmem %s0, %s134
      $region28: #{simple_decoder_forward.8} parent=23 // pred_fallthru
        _
    $region24: #{simple_decoder_forward.8} parent=5 // pred_fallthru
      _
    %p136 = scmp.le.s32.totalorder 1, %s9
    %p137 = scmp.lt.s32.totalorder %s9, 3
    %p138 = pnand %p136, %p137
    %p139 = pneg %p138
    // Predicated region
    $region29: #{simple_decoder_forward.8} parent=5 // pred_check
      _
    $region30: #{simple_decoder_forward.8} parent=5 // pred_check_branch
      %141 = sbr.rel (%p138) target = $region32
    $region31: #{simple_decoder_forward.8} parent=5 // pred_region
      %s142 = ssub.s32 %s9, 1
      %p143 = scmp.lt.s32.totalorder %s14, 1
      %s144 = scalar_select %p143, %s14, 1
      %s145 = smul.addr %s144, 18
      %s146 = smul.addr %s145, 8
      %s147 = scalar_lea.vmem %s0, %s146
      %p148 = pneg %p35
      %p149 = pneg %p32
      %p150 = pneg %p56
      %p151 = pneg %p53
      %p152 = pneg %p77
      %p153 = pneg %p74
      %p154 = pneg %p103
      %p155 = pneg %p100
      %p156 = scmp.lt.s32.totalorder %s14, 1
      %s157 = scalar_select %p156, %s14, 1
      %s158 = smul.addr %s157, 8
      %s159 = smul.addr %s158, 8
      %s160 = scalar_lea.vmem %s3, %s159
      %p161 = scmp.lt.s32.totalorder %s14, 1
      %s162 = scalar_select %p161, %s14, 1
      %s163 = smul.addr %s162, 18
      %s164 = smul.addr %s163, 8
      %s165 = scalar_lea.vmem %s0, %s164
      %p166 = scmp.lt.s32.totalorder %s14, 1
      %s167 = scalar_select %p166, %s14, 1
      %s168 = smul.addr %s167, 8
      %s169 = smul.addr %s168, 8
      %s170 = scalar_lea.vmem %s3, %s169
      %v171 = vld [vmem:[%s165] sm:$0xfe]
      %v172 = vld [vmem:[%s165 + $0x8] sm:$0xfe]
      %v173 = vld [vmem:[%s165 + $0x10] sm:$0xff]
      %v174 = vld [vmem:[%s165 + $0x18] sm:$0xff]
      %v175 = vld [vmem:[%s165 + $0x20] sm:$0xff]
      %v176 = vld [vmem:[%s165 + $0x28] sm:$0xff]
      %v177 = vld [vmem:[%s165 + $0x30] sm:$0xff]
      %v178 = vld [vmem:[%s165 + $0x38] sm:$0xff]
      %v179 = vld [vmem:[%s165 + $0x40] sm:$0xff]
      %v180 = vld [vmem:[%s165 + $0x48] sm:$0xff]
      %v181 = vld [vmem:[%s165 + $0x50] sm:$0xff]
      %v182 = vld [vmem:[%s165 + $0x58] sm:$0xff]
      %v183 = vld [vmem:[%s165 + $0x60] sm:$0xff]
      %v184 = vld [vmem:[%s165 + $0x68] sm:$0xff]
      %v185 = vld [vmem:[%s165 + $0x70] sm:$0xff]
      %v186 = vld [vmem:[%s165 + $0x78] sm:$0xff]
      %v187 = vld [vmem:[%s165 + $0x80] sm:$0x1]
      %v188 = vld [vmem:[%s165 + $0x88] sm:$0x1]
      %v189 = vld [vmem:[%s1] sm:$0xff]
      %v190 = vld [vmem:[%s1 + $0x8] sm:$0xff]
      %v191 = vld [vmem:[%s1 + $0x10] sm:$0xff]
      %v192 = vld [vmem:[%s1 + $0x18] sm:$0xff]
      %v193 = vld [vmem:[%s1 + $0x20] sm:$0xff]
      %v194 = vld [vmem:[%s1 + $0x28] sm:$0xff]
      %v195 = vld [vmem:[%s1 + $0x30] sm:$0xff]
      %v196 = vld [vmem:[%s1 + $0x38] sm:$0xff]
      %v197 = vld [vmem:[%s1 + $0x40] sm:$0xff]
      %v198 = vld [vmem:[%s1 + $0x48] sm:$0xff]
      %v199 = vld [vmem:[%s1 + $0x50] sm:$0xff]
      %v200 = vld [vmem:[%s1 + $0x58] sm:$0xff]
      %v201 = vld [vmem:[%s1 + $0x60] sm:$0xff]
      %v202 = vld [vmem:[%s1 + $0x68] sm:$0xff]
      %v203 = vld [vmem:[%s1 + $0x70] sm:$0xff]
      %v204 = vld [vmem:[%s1 + $0x78] sm:$0xff]
      %v205 = vld [vmem:[%s1 + $0x80] sm:$0xff]
      %v206 = vld [vmem:[%s165] sm:$0xfc]
      %v207 = vld [vmem:[%s165 + $0x8] sm:$0xfc]
      %v208 = vld [vmem:[%s165 + $0x80] sm:$0x3]
      %v209 = vld [vmem:[%s165 + $0x88] sm:$0x3]
      %s210 = scalar_lea.vmem %s1, 136
      %v211 = vld [vmem:[%s210] sm:$0xff]
      %v212 = vld [vmem:[%s210 + $0x8] sm:$0xff]
      %v213 = vld [vmem:[%s210 + $0x10] sm:$0xff]
      %v214 = vld [vmem:[%s210 + $0x18] sm:$0xff]
      %v215 = vld [vmem:[%s210 + $0x20] sm:$0xff]
      %v216 = vld [vmem:[%s210 + $0x28] sm:$0xff]
      %v217 = vld [vmem:[%s210 + $0x30] sm:$0xff]
      %v218 = vld [vmem:[%s210 + $0x38] sm:$0xff]
      %v219 = vld [vmem:[%s210 + $0x40] sm:$0xff]
      %v220 = vld [vmem:[%s210 + $0x48] sm:$0xff]
      %v221 = vld [vmem:[%s210 + $0x50] sm:$0xff]
      %v222 = vld [vmem:[%s210 + $0x58] sm:$0xff]
      %v223 = vld [vmem:[%s210 + $0x60] sm:$0xff]
      %v224 = vld [vmem:[%s210 + $0x68] sm:$0xff]
      %v225 = vld [vmem:[%s210 + $0x70] sm:$0xff]
      %v226 = vld [vmem:[%s210 + $0x78] sm:$0xff]
      %v227 = vld [vmem:[%s210 + $0x80] sm:$0xff]
      %vm246 = vcmask 1045504
      %v247 = vrot.slane %v206, 2
      %v248 = vrot.slane %v173, 2
      %v249 = vsel %vm246, %v247, %v248
      %v250 = vrot.slane %v207, 2
      %v251 = vrot.slane %v174, 2
      %v252 = vsel %vm246, %v250, %v251
      %v253 = vrot.slane %v175, 2
      %v254 = vsel %vm246, %v248, %v253
      %v255 = vrot.slane %v176, 2
      %v256 = vsel %vm246, %v251, %v255
      %v257 = vrot.slane %v177, 2
      %v258 = vsel %vm246, %v253, %v257
      %v259 = vrot.slane %v178, 2
      %v260 = vsel %vm246, %v255, %v259
      %v261 = vrot.slane %v179, 2
      %v262 = vsel %vm246, %v257, %v261
      %v263 = vrot.slane %v180, 2
      %v264 = vsel %vm246, %v259, %v263
      %v265 = vrot.slane %v181, 2
      %v266 = vsel %vm246, %v261, %v265
      %v267 = vrot.slane %v182, 2
      %v268 = vsel %vm246, %v263, %v267
      %v269 = vrot.slane %v183, 2
      %v270 = vsel %vm246, %v265, %v269
      %v271 = vrot.slane %v184, 2
      %v272 = vsel %vm246, %v267, %v271
      %v273 = vrot.slane %v185, 2
      %v274 = vsel %vm246, %v269, %v273
      %v275 = vrot.slane %v186, 2
      %v276 = vsel %vm246, %v271, %v275
      %v277 = vrot.slane %v208, 2
      %v278 = vsel %vm246, %v273, %v277
      %v279 = vrot.slane %v209, 2
      %v280 = vsel %vm246, %v275, %v279
      %vm289 = vcmask 64512
      %v290 = vsel %vm289, %v252, 0
      %v292 = vsel %vm289, %v256, 0
      %v294 = vsel %vm289, %v260, 0
      %v296 = vsel %vm289, %v264, 0
      %v298 = vsel %vm289, %v268, 0
      %v300 = vsel %vm289, %v272, 0
      %v302 = vsel %vm289, %v276, 0
      %v304 = vsel %vm289, %v280, 0
      %306 = vmatpush.msra.mxu0 %v226
      %307 = vmatpush.msra.mxu0 %v225
      %308 = vmatpush.msra.mxu0 %v224
      %309 = vmatpush.msra.mxu0 %v223
      %310 = vmatpush.msra.mxu0 %v222
      %311 = vmatpush.msra.mxu0 %v221
      %312 = vmatpush.msra.mxu0 %v220
      %313 = vmatpush.msra.mxu0 %v219
      %314 = vmatpush.msra.mxu0 %v218
      %315 = vmatpush.msra.mxu0 %v217
      %316 = vmatpush.msra.mxu0 %v216
      %317 = vmatpush.msra.mxu0 %v215
      %318 = vmatpush.msra.mxu0 %v214
      %319 = vmatpush.msra.mxu0 %v213
      %320 = vmatpush.msra.mxu0 %v212
      %321 = vmatpush.msra.mxu0 %v211
      %322 = vmatmul.f32.gmra.mxu0 %v249
      %v323 = vpop.f32.mrf.mxu0
      %v324 = vadd.f32 0.0, %v323
      %325 = vmatmul.f32.gmra.mxu0 %v254
      %v326 = vpop.f32.mrf.mxu0
      %v327 = vadd.f32 0.0, %v326
      %328 = vmatmul.f32.gmra.mxu0 %v258
      %v329 = vpop.f32.mrf.mxu0
      %v330 = vadd.f32 0.0, %v329
      %331 = vmatmul.f32.gmra.mxu0 %v262
      %v332 = vpop.f32.mrf.mxu0
      %v333 = vadd.f32 0.0, %v332
      %334 = vmatmul.f32.gmra.mxu0 %v266
      %v335 = vpop.f32.mrf.mxu0
      %v336 = vadd.f32 0.0, %v335
      %337 = vmatmul.f32.gmra.mxu0 %v270
      %v338 = vpop.f32.mrf.mxu0
      %v339 = vadd.f32 0.0, %v338
      %340 = vmatmul.f32.gmra.mxu0 %v274
      %v341 = vpop.f32.mrf.mxu0
      %v342 = vadd.f32 0.0, %v341
      %343 = vmatmul.f32.gmra.mxu0 %v278
      %v344 = vpop.f32.mrf.mxu0
      %v345 = vadd.f32 0.0, %v344
      %346 = vdwg.mxu0
      %347 = vmatpush.msra.mxu0 0.0
      %348 = vmatpush.msra.mxu0 0.0
      %349 = vmatpush.msra.mxu0 0.0
      %350 = vmatpush.msra.mxu0 0.0
      %351 = vmatpush.msra.mxu0 0.0
      %352 = vmatpush.msra.mxu0 0.0
      %353 = vmatpush.msra.mxu0 0.0
      %354 = vmatpush.msra.mxu0 0.0
      %355 = vmatpush.msra.mxu0 0.0
      %356 = vmatpush.msra.mxu0 0.0
      %357 = vmatpush.msra.mxu0 0.0
      %358 = vmatpush.msra.mxu0 0.0
      %359 = vmatpush.msra.mxu0 0.0
      %360 = vmatpush.msra.mxu0 0.0
      %361 = vmatpush.msra.mxu0 0.0
      %362 = vmatpush.msra.mxu0 %v227
      %363 = vmatmul.f32.gmra.mxu0 %v290
      %v364 = vpop.f32.mrf.mxu0
      %v365 = vadd.f32 %v324, %v364
      %366 = vmatmul.f32.gmra.mxu0 %v292
      %v367 = vpop.f32.mrf.mxu0
      %v368 = vadd.f32 %v327, %v367
      %369 = vmatmul.f32.gmra.mxu0 %v294
      %v370 = vpop.f32.mrf.mxu0
      %v371 = vadd.f32 %v330, %v370
      %372 = vmatmul.f32.gmra.mxu0 %v296
      %v373 = vpop.f32.mrf.mxu0
      %v374 = vadd.f32 %v333, %v373
      %375 = vmatmul.f32.gmra.mxu0 %v298
      %v376 = vpop.f32.mrf.mxu0
      %v377 = vadd.f32 %v336, %v376
      %378 = vmatmul.f32.gmra.mxu0 %v300
      %v379 = vpop.f32.mrf.mxu0
      %v380 = vadd.f32 %v339, %v379
      %381 = vmatmul.f32.gmra.mxu0 %v302
      %v382 = vpop.f32.mrf.mxu0
      %v383 = vadd.f32 %v342, %v382
      %384 = vmatmul.f32.gmra.mxu0 %v304
      %v385 = vpop.f32.mrf.mxu0
      %v386 = vadd.f32 %v345, %v385
      %387 = vdwg.mxu0
      %vm392 = vcmask 1046528
      %v393 = vrot.slane %v171, 1
      %v394 = vrot.slane %v173, 1
      %v395 = vsel %vm392, %v393, %v394
      %v396 = vrot.slane %v172, 1
      %v397 = vrot.slane %v174, 1
      %v398 = vsel %vm392, %v396, %v397
      %v399 = vrot.slane %v175, 1
      %v400 = vsel %vm392, %v394, %v399
      %v401 = vrot.slane %v176, 1
      %v402 = vsel %vm392, %v397, %v401
      %v403 = vrot.slane %v177, 1
      %v404 = vsel %vm392, %v399, %v403
      %v405 = vrot.slane %v178, 1
      %v406 = vsel %vm392, %v401, %v405
      %v407 = vrot.slane %v179, 1
      %v408 = vsel %vm392, %v403, %v407
      %v409 = vrot.slane %v180, 1
      %v410 = vsel %vm392, %v405, %v409
      %v411 = vrot.slane %v181, 1
      %v412 = vsel %vm392, %v407, %v411
      %v413 = vrot.slane %v182, 1
      %v414 = vsel %vm392, %v409, %v413
      %v415 = vrot.slane %v183, 1
      %v416 = vsel %vm392, %v411, %v415
      %v417 = vrot.slane %v184, 1
      %v418 = vsel %vm392, %v413, %v417
      %v419 = vrot.slane %v185, 1
      %v420 = vsel %vm392, %v415, %v419
      %v421 = vrot.slane %v186, 1
      %v422 = vsel %vm392, %v417, %v421
      %v423 = vrot.slane %v187, 1
      %v424 = vsel %vm392, %v419, %v423
      %v425 = vrot.slane %v188, 1
      %v426 = vsel %vm392, %v421, %v425
      %v435 = vsel %vm289, %v398, 0
      %v437 = vsel %vm289, %v402, 0
      %v439 = vsel %vm289, %v406, 0
      %v441 = vsel %vm289, %v410, 0
      %v443 = vsel %vm289, %v414, 0
      %v445 = vsel %vm289, %v418, 0
      %v447 = vsel %vm289, %v422, 0
      %v449 = vsel %vm289, %v426, 0
      %451 = vmatpush.msra.mxu0 %v204
      %452 = vmatpush.msra.mxu0 %v203
      %453 = vmatpush.msra.mxu0 %v202
      %454 = vmatpush.msra.mxu0 %v201
      %455 = vmatpush.msra.mxu0 %v200
      %456 = vmatpush.msra.mxu0 %v199
      %457 = vmatpush.msra.mxu0 %v198
      %458 = vmatpush.msra.mxu0 %v197
      %459 = vmatpush.msra.mxu0 %v196
      %460 = vmatpush.msra.mxu0 %v195
      %461 = vmatpush.msra.mxu0 %v194
      %462 = vmatpush.msra.mxu0 %v193
      %463 = vmatpush.msra.mxu0 %v192
      %464 = vmatpush.msra.mxu0 %v191
      %465 = vmatpush.msra.mxu0 %v190
      %466 = vmatpush.msra.mxu0 %v189
      %467 = vmatmul.f32.gmra.mxu0 %v395
      %v468 = vpop.f32.mrf.mxu0
      %v469 = vadd.f32 %v365, %v468
      %470 = vmatmul.f32.gmra.mxu0 %v400
      %v471 = vpop.f32.mrf.mxu0
      %v472 = vadd.f32 %v368, %v471
      %473 = vmatmul.f32.gmra.mxu0 %v404
      %v474 = vpop.f32.mrf.mxu0
      %v475 = vadd.f32 %v371, %v474
      %476 = vmatmul.f32.gmra.mxu0 %v408
      %v477 = vpop.f32.mrf.mxu0
      %v478 = vadd.f32 %v374, %v477
      %479 = vmatmul.f32.gmra.mxu0 %v412
      %v480 = vpop.f32.mrf.mxu0
      %v481 = vadd.f32 %v377, %v480
      %482 = vmatmul.f32.gmra.mxu0 %v416
      %v483 = vpop.f32.mrf.mxu0
      %v484 = vadd.f32 %v380, %v483
      %485 = vmatmul.f32.gmra.mxu0 %v420
      %v486 = vpop.f32.mrf.mxu0
      %v487 = vadd.f32 %v383, %v486
      %488 = vmatmul.f32.gmra.mxu0 %v424
      %v489 = vpop.f32.mrf.mxu0
      %v490 = vadd.f32 %v386, %v489
      %491 = vdwg.mxu0
      %492 = vmatpush.msra.mxu0 0.0
      %493 = vmatpush.msra.mxu0 0.0
      %494 = vmatpush.msra.mxu0 0.0
      %495 = vmatpush.msra.mxu0 0.0
      %496 = vmatpush.msra.mxu0 0.0
      %497 = vmatpush.msra.mxu0 0.0
      %498 = vmatpush.msra.mxu0 0.0
      %499 = vmatpush.msra.mxu0 0.0
      %500 = vmatpush.msra.mxu0 0.0
      %501 = vmatpush.msra.mxu0 0.0
      %502 = vmatpush.msra.mxu0 0.0
      %503 = vmatpush.msra.mxu0 0.0
      %504 = vmatpush.msra.mxu0 0.0
      %505 = vmatpush.msra.mxu0 0.0
      %506 = vmatpush.msra.mxu0 0.0
      %507 = vmatpush.msra.mxu0 %v205
      %508 = vmatmul.f32.gmra.mxu0 %v435
      %v509 = vpop.f32.mrf.mxu0
      %v510 = vadd.f32 %v469, %v509
      %511 = vmatmul.f32.gmra.mxu0 %v437
      %v512 = vpop.f32.mrf.mxu0
      %v513 = vadd.f32 %v472, %v512
      %514 = vmatmul.f32.gmra.mxu0 %v439
      %v515 = vpop.f32.mrf.mxu0
      %v516 = vadd.f32 %v475, %v515
      %517 = vmatmul.f32.gmra.mxu0 %v441
      %v518 = vpop.f32.mrf.mxu0
      %v519 = vadd.f32 %v478, %v518
      %520 = vmatmul.f32.gmra.mxu0 %v443
      %v521 = vpop.f32.mrf.mxu0
      %v522 = vadd.f32 %v481, %v521
      %523 = vmatmul.f32.gmra.mxu0 %v445
      %v524 = vpop.f32.mrf.mxu0
      %v525 = vadd.f32 %v484, %v524
      %526 = vmatmul.f32.gmra.mxu0 %v447
      %v527 = vpop.f32.mrf.mxu0
      %v528 = vadd.f32 %v487, %v527
      %529 = vmatmul.f32.gmra.mxu0 %v449
      %v530 = vpop.f32.mrf.mxu0
      %v531 = vadd.f32 %v490, %v530
      %532 = vdwg.mxu0
      %v533 = vld [vmem:[%s165] sm:$0xf8]
      %v534 = vld [vmem:[%s165 + $0x8] sm:$0xf8]
      %v535 = vld [vmem:[%s165 + $0x80] sm:$0x7]
      %v536 = vld [vmem:[%s165 + $0x88] sm:$0x7]
      %s537 = scalar_lea.vmem %s1, 272
      %v538 = vld [vmem:[%s537] sm:$0xff]
      %v539 = vld [vmem:[%s537 + $0x8] sm:$0xff]
      %v540 = vld [vmem:[%s537 + $0x10] sm:$0xff]
      %v541 = vld [vmem:[%s537 + $0x18] sm:$0xff]
      %v542 = vld [vmem:[%s537 + $0x20] sm:$0xff]
      %v543 = vld [vmem:[%s537 + $0x28] sm:$0xff]
      %v544 = vld [vmem:[%s537 + $0x30] sm:$0xff]
      %v545 = vld [vmem:[%s537 + $0x38] sm:$0xff]
      %v546 = vld [vmem:[%s537 + $0x40] sm:$0xff]
      %v547 = vld [vmem:[%s537 + $0x48] sm:$0xff]
      %v548 = vld [vmem:[%s537 + $0x50] sm:$0xff]
      %v549 = vld [vmem:[%s537 + $0x58] sm:$0xff]
      %v550 = vld [vmem:[%s537 + $0x60] sm:$0xff]
      %v551 = vld [vmem:[%s537 + $0x68] sm:$0xff]
      %v552 = vld [vmem:[%s537 + $0x70] sm:$0xff]
      %v553 = vld [vmem:[%s537 + $0x78] sm:$0xff]
      %v554 = vld [vmem:[%s537 + $0x80] sm:$0xff]
      %vm559 = vcmask 1044480
      %v560 = vrot.slane %v533, 3
      %v561 = vrot.slane %v173, 3
      %v562 = vsel %vm559, %v560, %v561
      %v563 = vrot.slane %v534, 3
      %v564 = vrot.slane %v174, 3
      %v565 = vsel %vm559, %v563, %v564
      %v566 = vrot.slane %v175, 3
      %v567 = vsel %vm559, %v561, %v566
      %v568 = vrot.slane %v176, 3
      %v569 = vsel %vm559, %v564, %v568
      %v570 = vrot.slane %v177, 3
      %v571 = vsel %vm559, %v566, %v570
      %v572 = vrot.slane %v178, 3
      %v573 = vsel %vm559, %v568, %v572
      %v574 = vrot.slane %v179, 3
      %v575 = vsel %vm559, %v570, %v574
      %v576 = vrot.slane %v180, 3
      %v577 = vsel %vm559, %v572, %v576
      %v578 = vrot.slane %v181, 3
      %v579 = vsel %vm559, %v574, %v578
      %v580 = vrot.slane %v182, 3
      %v581 = vsel %vm559, %v576, %v580
      %v582 = vrot.slane %v183, 3
      %v583 = vsel %vm559, %v578, %v582
      %v584 = vrot.slane %v184, 3
      %v585 = vsel %vm559, %v580, %v584
      %v586 = vrot.slane %v185, 3
      %v587 = vsel %vm559, %v582, %v586
      %v588 = vrot.slane %v186, 3
      %v589 = vsel %vm559, %v584, %v588
      %v590 = vrot.slane %v535, 3
      %v591 = vsel %vm559, %v586, %v590
      %v592 = vrot.slane %v536, 3
      %v593 = vsel %vm559, %v588, %v592
      %v602 = vsel %vm289, %v565, 0
      %v604 = vsel %vm289, %v569, 0
      %v606 = vsel %vm289, %v573, 0
      %v608 = vsel %vm289, %v577, 0
      %v610 = vsel %vm289, %v581, 0
      %v612 = vsel %vm289, %v585, 0
      %v614 = vsel %vm289, %v589, 0
      %v616 = vsel %vm289, %v593, 0
      %618 = vmatpush.msra.mxu0 %v553
      %619 = vmatpush.msra.mxu0 %v552
      %620 = vmatpush.msra.mxu0 %v551
      %621 = vmatpush.msra.mxu0 %v550
      %622 = vmatpush.msra.mxu0 %v549
      %623 = vmatpush.msra.mxu0 %v548
      %624 = vmatpush.msra.mxu0 %v547
      %625 = vmatpush.msra.mxu0 %v546
      %626 = vmatpush.msra.mxu0 %v545
      %627 = vmatpush.msra.mxu0 %v544
      %628 = vmatpush.msra.mxu0 %v543
      %629 = vmatpush.msra.mxu0 %v542
      %630 = vmatpush.msra.mxu0 %v541
      %631 = vmatpush.msra.mxu0 %v540
      %632 = vmatpush.msra.mxu0 %v539
      %633 = vmatpush.msra.mxu0 %v538
      %634 = vmatmul.f32.gmra.mxu0 %v562
      %v635 = vpop.f32.mrf.mxu0
      %v636 = vadd.f32 0.0, %v635
      %637 = vmatmul.f32.gmra.mxu0 %v567
      %v638 = vpop.f32.mrf.mxu0
      %v639 = vadd.f32 0.0, %v638
      %640 = vmatmul.f32.gmra.mxu0 %v571
      %v641 = vpop.f32.mrf.mxu0
      %v642 = vadd.f32 0.0, %v641
      %643 = vmatmul.f32.gmra.mxu0 %v575
      %v644 = vpop.f32.mrf.mxu0
      %v645 = vadd.f32 0.0, %v644
      %646 = vmatmul.f32.gmra.mxu0 %v579
      %v647 = vpop.f32.mrf.mxu0
      %v648 = vadd.f32 0.0, %v647
      %649 = vmatmul.f32.gmra.mxu0 %v583
      %v650 = vpop.f32.mrf.mxu0
      %v651 = vadd.f32 0.0, %v650
      %652 = vmatmul.f32.gmra.mxu0 %v587
      %v653 = vpop.f32.mrf.mxu0
      %v654 = vadd.f32 0.0, %v653
      %655 = vmatmul.f32.gmra.mxu0 %v591
      %v656 = vpop.f32.mrf.mxu0
      %v657 = vadd.f32 0.0, %v656
      %658 = vdwg.mxu0
      %659 = vmatpush.msra.mxu0 0.0
      %660 = vmatpush.msra.mxu0 0.0
      %661 = vmatpush.msra.mxu0 0.0
      %662 = vmatpush.msra.mxu0 0.0
      %663 = vmatpush.msra.mxu0 0.0
      %664 = vmatpush.msra.mxu0 0.0
      %665 = vmatpush.msra.mxu0 0.0
      %666 = vmatpush.msra.mxu0 0.0
      %667 = vmatpush.msra.mxu0 0.0
      %668 = vmatpush.msra.mxu0 0.0
      %669 = vmatpush.msra.mxu0 0.0
      %670 = vmatpush.msra.mxu0 0.0
      %671 = vmatpush.msra.mxu0 0.0
      %672 = vmatpush.msra.mxu0 0.0
      %673 = vmatpush.msra.mxu0 0.0
      %674 = vmatpush.msra.mxu0 %v554
      %675 = vmatmul.f32.gmra.mxu0 %v602
      %v676 = vpop.f32.mrf.mxu0
      %v677 = vadd.f32 %v636, %v676
      %678 = vmatmul.f32.gmra.mxu0 %v604
      %v679 = vpop.f32.mrf.mxu0
      %v680 = vadd.f32 %v639, %v679
      %681 = vmatmul.f32.gmra.mxu0 %v606
      %v682 = vpop.f32.mrf.mxu0
      %v683 = vadd.f32 %v642, %v682
      %684 = vmatmul.f32.gmra.mxu0 %v608
      %v685 = vpop.f32.mrf.mxu0
      %v686 = vadd.f32 %v645, %v685
      %687 = vmatmul.f32.gmra.mxu0 %v610
      %v688 = vpop.f32.mrf.mxu0
      %v689 = vadd.f32 %v648, %v688
      %690 = vmatmul.f32.gmra.mxu0 %v612
      %v691 = vpop.f32.mrf.mxu0
      %v692 = vadd.f32 %v651, %v691
      %693 = vmatmul.f32.gmra.mxu0 %v614
      %v694 = vpop.f32.mrf.mxu0
      %v695 = vadd.f32 %v654, %v694
      %696 = vmatmul.f32.gmra.mxu0 %v616
      %v697 = vpop.f32.mrf.mxu0
      %v698 = vadd.f32 %v657, %v697
      %699 = vdwg.mxu0
      %v700 = vadd.f32 %v510, %v677
      %v701 = vadd.f32 %v513, %v680
      %v702 = vadd.f32 %v516, %v683
      %v703 = vadd.f32 %v519, %v686
      %v704 = vadd.f32 %v522, %v689
      %v705 = vadd.f32 %v525, %v692
      %v706 = vadd.f32 %v528, %v695
      %v707 = vadd.f32 %v531, %v698
      %v708 = vld [vmem:[%s2] sm:$0x1]
      %v710 = vperm.slane %v708, 0
      %v712 = vadd.f32 %v700, %v710
      %v713 = vadd.f32 %v701, %v710
      %v714 = vadd.f32 %v702, %v710
      %v715 = vadd.f32 %v703, %v710
      %v716 = vadd.f32 %v704, %v710
      %v717 = vadd.f32 %v705, %v710
      %v718 = vadd.f32 %v706, %v710
      %v719 = vadd.f32 %v707, %v710
      %vm720 = vcmp.ge.f32.partialorder %v712, 0.0
      %vm721 = vcmp.ge.f32.partialorder %v713, 0.0
      %vm722 = vcmp.ge.f32.partialorder %v714, 0.0
      %vm723 = vcmp.ge.f32.partialorder %v715, 0.0
      %vm724 = vcmp.ge.f32.partialorder %v716, 0.0
      %vm725 = vcmp.ge.f32.partialorder %v717, 0.0
      %vm726 = vcmp.ge.f32.partialorder %v718, 0.0
      %vm727 = vcmp.ge.f32.partialorder %v719, 0.0
      %v728 = vmul.f32 %v712, 0.2
      %v729 = vmul.f32 %v713, 0.2
      %v730 = vmul.f32 %v714, 0.2
      %v731 = vmul.f32 %v715, 0.2
      %v732 = vmul.f32 %v716, 0.2
      %v733 = vmul.f32 %v717, 0.2
      %v734 = vmul.f32 %v718, 0.2
      %v735 = vmul.f32 %v719, 0.2
      %v736 = vsel %vm720, %v712, %v728
      %v737 = vsel %vm721, %v713, %v729
      %v738 = vsel %vm722, %v714, %v730
      %v739 = vsel %vm723, %v715, %v731
      %v740 = vsel %vm724, %v716, %v732
      %v741 = vsel %vm725, %v717, %v733
      %v742 = vsel %vm726, %v718, %v734
      %v743 = vsel %vm727, %v719, %v735
      %744 = vst [vmem:[%s170] sm:$0xff] %v736
      %745 = vst [vmem:[%s170 + $0x8] sm:$0xff] %v737
      %746 = vst [vmem:[%s170 + $0x10] sm:$0xff] %v738
      %747 = vst [vmem:[%s170 + $0x18] sm:$0xff] %v739
      %748 = vst [vmem:[%s170 + $0x20] sm:$0xff] %v740
      %749 = vst [vmem:[%s170 + $0x28] sm:$0xff] %v741
      %750 = vst [vmem:[%s170 + $0x30] sm:$0xff] %v742
      %751 = vst [vmem:[%s170 + $0x38] sm:$0xff] %v743
      %p752 = scmp.lt.s32.totalorder %s14, 1
      %s753 = scalar_select %p752, %s14, 1
      %s754 = smul.addr %s753, 8
      %s755 = smul.addr %s754, 8
      %s756 = scalar_lea.vmem %s3, %s755
      // Predicated region
      $region33: #{simple_decoder_forward.8} parent=31 // pred_check
        %p757 = pneg %p100
      $region34: #{simple_decoder_forward.8} parent=31 // pred_check_branch
        %759 = sbr.rel (%p757) target = $region36
      $region35: #{simple_decoder_forward.8} parent=31 // pred_region
        _
      $region36: #{simple_decoder_forward.8} parent=31 // pred_fallthru
        _
    $region32: #{simple_decoder_forward.8} parent=5 // pred_fallthru
      _
    %p760 = scmp.le.s32.totalorder 2, %s9
    // Predicated region
    $region37: #{simple_decoder_forward.8} parent=5 // pred_check
      %p761 = pneg %p760
    $region38: #{simple_decoder_forward.8} parent=5 // pred_check_branch
      %763 = sbr.rel (%p761) target = $region40
    $region39: #{simple_decoder_forward.8} parent=5 // pred_region
      %s764 = ssub.s32 %s9, 2
      // Predicated region
      $region41: #{simple_decoder_forward.8} parent=39 // pred_check
        %p765 = pneg %p106
      $region42: #{simple_decoder_forward.8} parent=39 // pred_check_branch
        %767 = sbr.rel (%p765) target = $region44
      $region43: #{simple_decoder_forward.8} parent=39 // pred_region
        %p768 = scmp.lt.s32.totalorder %s15, 1
        %s769 = scalar_select %p768, %s15, 1
        %s770 = smul.addr %s769, 8
        %s771 = smul.addr %s770, 8
        %s772 = scalar_lea.vmem %s3, %s771
      $region44: #{simple_decoder_forward.8} parent=39 // pred_fallthru
        _
    $region40: #{simple_decoder_forward.8} parent=5 // pred_fallthru
      _
  $region6: #{simple_decoder_forward.8} parent=0 // loop_footer
    %s13 = sadd.s32 1, %s9
  $region7: #{simple_decoder_forward.8} parent=0 // loop_footer_branch
    %8 = sbr.rel target = $region3
  $region8: #{simple_decoder_forward.8} parent=0 // loop_exit
    _

// kernel: simple_decoder_forward.9
$region0: #{simple_decoder_forward.9}
  #allocation0 [shape = 'u32[]', space=smem, size = 0x4, offset = 0x4, fixed_abs, tag = 'smem constant byte address 0x4 - core index']
  #allocation1 [shape = 'u32[72,128]{1,0:T(1,128)}', space=vmem, size = 0x9000, scoped, tag = 'internal scratch']
  %s0 = inlined_call_operand.vmem [shape: f32[2,66,132], index: 0, kind: input, shape index: {}]
  %s1 = inlined_call_operand.vmem [shape: f32[3,132,192], index: 1, kind: input, shape index: {}]
  %s2 = inlined_call_operand.vmem [shape: f32[1,192], index: 2, kind: input, shape index: {}]
  %s3 = inlined_call_operand.vmem [shape: f32[2,64,192], index: 3, kind: output, shape index: {}]
  %s4 = sld [smem:[#allocation0]]
  $region45: #{simple_decoder_forward.9} parent=0
    _
  %s6 = ssub.s32 1, %s4
  %s7 = scalar_select 0, %s6, %s4
  loop: start=0, step=1, limit=4
  $region2: #{simple_decoder_forward.9} parent=0 // loop_pre_header
    _
  $region3: #{simple_decoder_forward.9} parent=0 // loop_header
    %s9 = sphi 0, %s13
    %p10 = scmp.ge.s32.totalorder %s9, 4
    %s19 = sphi 0, %s21
    %s22 = sphi 0, %s19
    %s23 = sphi 0, %s22
    %s39 = sphi 0, %s23
    %s43 = sphi 0, %s43
    %s45 = sphi 0, %s43
    %s46 = sphi 0, %s45
    %s60 = sphi 0, %s46
    %s64 = sphi 0, %s64
    %s66 = sphi 0, %s64
    %s67 = sphi 0, %s66
    %s81 = sphi 0, %s67
    %s87 = sphi 0, %s89
    %s90 = sphi 0, %s87
    %s91 = sphi 0, %s90
    %s107 = sphi 0, %s91
  $region4: #{simple_decoder_forward.9} parent=0 // loop_header_branch
    %12 = sbr.rel (%p10) target = $region8
  $region5: #{simple_decoder_forward.9} parent=0 // loop_body
    %s14 = ssub.s32 %s9, 1
    %s15 = ssub.s32 %s9, 2
    %s16 = sadd.s32 %s9, 1
    %s17 = ssub.s32 %s9, %s16
    %p18 = scmp.eq.s32.totalorder %s17, 0
    %s20 = sadd.s32 %s19, 1
    %s21 = scalar_select %p18, %s19, %s20
    %p24 = pneg %p18
    %p25 = scmp.eq.s32.totalorder %s9, 1
    %p26 = por %p24, %p25
    %p27 = scmp.ne.s32.totalorder %s19, %s22
    %p28 = scmp.eq.s32.totalorder %s9, 0
    %p29 = por %p27, %p28
    %p30 = scmp.ne.s32.totalorder %s19, %s22
    %p31 = scmp.eq.s32.totalorder %s14, 1
    %p32 = por %p30, %p31
    %p33 = scmp.ne.s32.totalorder %s22, %s23
    %p34 = scmp.eq.s32.totalorder %s14, 0
    %p35 = por %p33, %p34
    %p36 = scmp.ne.s32.totalorder %s22, %s23
    %p37 = scmp.eq.s32.totalorder %s15, 1
    %p38 = por %p36, %p37
    %p40 = scmp.ne.s32.totalorder %s23, %s39
    %p41 = scmp.eq.s32.totalorder %s15, 0
    %p42 = por %p40, %p41
    %s44 = sadd.s32 %s43, 1
    %p47 = scmp.eq.s32.totalorder %s9, 1
    %p48 = scmp.ne.s32.totalorder %s43, %s45
    %p49 = scmp.eq.s32.totalorder %s9, 0
    %p50 = por %p48, %p49
    %p51 = scmp.ne.s32.totalorder %s43, %s45
    %p52 = scmp.eq.s32.totalorder %s14, 1
    %p53 = por %p51, %p52
    %p54 = scmp.ne.s32.totalorder %s45, %s46
    %p55 = scmp.eq.s32.totalorder %s14, 0
    %p56 = por %p54, %p55
    %p57 = scmp.ne.s32.totalorder %s45, %s46
    %p58 = scmp.eq.s32.totalorder %s15, 1
    %p59 = por %p57, %p58
    %p61 = scmp.ne.s32.totalorder %s46, %s60
    %p62 = scmp.eq.s32.totalorder %s15, 0
    %p63 = por %p61, %p62
    %s65 = sadd.s32 %s64, 1
    %p68 = scmp.eq.s32.totalorder %s9, 1
    %p69 = scmp.ne.s32.totalorder %s64, %s66
    %p70 = scmp.eq.s32.totalorder %s9, 0
    %p71 = por %p69, %p70
    %p72 = scmp.ne.s32.totalorder %s64, %s66
    %p73 = scmp.eq.s32.totalorder %s14, 1
    %p74 = por %p72, %p73
    %p75 = scmp.ne.s32.totalorder %s66, %s67
    %p76 = scmp.eq.s32.totalorder %s14, 0
    %p77 = por %p75, %p76
    %p78 = scmp.ne.s32.totalorder %s66, %s67
    %p79 = scmp.eq.s32.totalorder %s15, 1
    %p80 = por %p78, %p79
    %p82 = scmp.ne.s32.totalorder %s67, %s81
    %p83 = scmp.eq.s32.totalorder %s15, 0
    %p84 = por %p82, %p83
    %s85 = ssub.s32 %s9, %s16
    %p86 = scmp.eq.s32.totalorder %s85, 0
    %s88 = sadd.s32 %s87, 1
    %s89 = scalar_select %p86, %s87, %s88
    %p92 = pneg %p86
    %p93 = scmp.eq.s32.totalorder %s9, 1
    %p94 = por %p92, %p93
    %p95 = scmp.ne.s32.totalorder %s87, %s90
    %p96 = scmp.eq.s32.totalorder %s9, 0
    %p97 = por %p95, %p96
    %p98 = scmp.ne.s32.totalorder %s87, %s90
    %p99 = scmp.eq.s32.totalorder %s14, 1
    %p100 = por %p98, %p99
    %p101 = scmp.ne.s32.totalorder %s90, %s91
    %p102 = scmp.eq.s32.totalorder %s14, 0
    %p103 = por %p101, %p102
    %p104 = scmp.ne.s32.totalorder %s90, %s91
    %p105 = scmp.eq.s32.totalorder %s15, 1
    %p106 = por %p104, %p105
    %p108 = scmp.ne.s32.totalorder %s91, %s107
    %p109 = scmp.eq.s32.totalorder %s15, 0
    %p110 = por %p108, %p109
    %p111 = scmp.le.s32.totalorder 1, %s9
    %p112 = scmp.lt.s32.totalorder %s9, 3
    %p113 = pnand %p111, %p112
    %p114 = pneg %p113
    // Predicated region
    $region9: #{simple_decoder_forward.9} parent=5 // pred_check
      _
    $region10: #{simple_decoder_forward.9} parent=5 // pred_check_branch
      %116 = sbr.rel (%p113) target = $region12
    $region11: #{simple_decoder_forward.9} parent=5 // pred_region
      %s117 = ssub.s32 %s9, 1
      // Predicated region
      $region13: #{simple_decoder_forward.9} parent=11 // pred_check
        %p118 = pneg %p56
      $region14: #{simple_decoder_forward.9} parent=11 // pred_check_branch
        %120 = sbr.rel (%p118) target = $region16
      $region15: #{simple_decoder_forward.9} parent=11 // pred_region
        _
      $region16: #{simple_decoder_forward.9} parent=11 // pred_fallthru
        _
      // Predicated region
      $region17: #{simple_decoder_forward.9} parent=11 // pred_check
        %p121 = pneg %p77
      $region18: #{simple_decoder_forward.9} parent=11 // pred_check_branch
        %123 = sbr.rel (%p121) target = $region20
      $region19: #{simple_decoder_forward.9} parent=11 // pred_region
        _
      $region20: #{simple_decoder_forward.9} parent=11 // pred_fallthru
        _
    $region12: #{simple_decoder_forward.9} parent=5 // pred_fallthru
      _
    %p124 = scmp.lt.s32.totalorder %s9, 2
    // Predicated region
    $region21: #{simple_decoder_forward.9} parent=5 // pred_check
      %p125 = pneg %p124
    $region22: #{simple_decoder_forward.9} parent=5 // pred_check_branch
      %127 = sbr.rel (%p125) target = $region24
    $region23: #{simple_decoder_forward.9} parent=5 // pred_region
      // Predicated region
      $region25: #{simple_decoder_forward.9} parent=23 // pred_check
        %p128 = pneg %p29
      $region26: #{simple_decoder_forward.9} parent=23 // pred_check_branch
        %130 = sbr.rel (%p128) target = $region28
      $region27: #{simple_decoder_forward.9} parent=23 // pred_region
        %p131 = scmp.lt.s32.totalorder %s9, 1
        %s132 = scalar_select %p131, %s9, 1
        %s133 = smul.addr %s132, 18
        %s134 = smul.addr %s133, 8
        %s135 = scalar_lea.vmem %s0, %s134
      $region28: #{simple_decoder_forward.9} parent=23 // pred_fallthru
        _
    $region24: #{simple_decoder_forward.9} parent=5 // pred_fallthru
      _
    %p136 = scmp.le.s32.totalorder 1, %s9
    %p137 = scmp.lt.s32.totalorder %s9, 3
    %p138 = pnand %p136, %p137
    %p139 = pneg %p138
    // Predicated region
    $region29: #{simple_decoder_forward.9} parent=5 // pred_check
      _
    $region30: #{simple_decoder_forward.9} parent=5 // pred_check_branch
      %141 = sbr.rel (%p138) target = $region32
    $region31: #{simple_decoder_forward.9} parent=5 // pred_region
      %s142 = ssub.s32 %s9, 1
      %p143 = scmp.lt.s32.totalorder %s14, 1
      %s144 = scalar_select %p143, %s14, 1
      %s145 = smul.addr %s144, 18
      %s146 = smul.addr %s145, 8
      %s147 = scalar_lea.vmem %s0, %s146
      %p148 = pneg %p35
      %p149 = pneg %p32
      %p150 = pneg %p56
      %p151 = pneg %p53
      %p152 = pneg %p77
      %p153 = pneg %p74
      %p154 = pneg %p103
      %p155 = pneg %p100
      %p156 = scmp.lt.s32.totalorder %s14, 1
      %s157 = scalar_select %p156, %s14, 1
      %s158 = smul.addr %s157, 16
      %s159 = smul.addr %s158, 8
      %s160 = scalar_lea.vmem %s3, %s159
      %p161 = scmp.lt.s32.totalorder %s14, 1
      %s162 = scalar_select %p161, %s14, 1
      %s163 = smul.addr %s162, 18
      %s164 = smul.addr %s163, 8
      %s165 = scalar_lea.vmem %s0, %s164
      %p166 = scmp.lt.s32.totalorder %s14, 1
      %s167 = scalar_select %p166, %s14, 1
      %s168 = smul.addr %s167, 16
      %s169 = smul.addr %s168, 8
      %s170 = scalar_lea.vmem %s3, %s169
      %v171 = vld [vmem:[%s165] sm:$0xff]
      %v172 = vld [vmem:[%s165 + $0x8] sm:$0xff]
      %v173 = vld [vmem:[%s165 + $0x10] sm:$0xff]
      %v174 = vld [vmem:[%s165 + $0x18] sm:$0xff]
      %v175 = vld [vmem:[%s165 + $0x20] sm:$0xff]
      %v176 = vld [vmem:[%s165 + $0x28] sm:$0xff]
      %v177 = vld [vmem:[%s165 + $0x30] sm:$0xff]
      %v178 = vld [vmem:[%s165 + $0x38] sm:$0xff]
      %v179 = vld [vmem:[%s165 + $0x40] sm:$0xff]
      %v180 = vld [vmem:[%s165 + $0x48] sm:$0xff]
      %v181 = vld [vmem:[%s165 + $0x50] sm:$0xff]
      %v182 = vld [vmem:[%s165 + $0x58] sm:$0xff]
      %v183 = vld [vmem:[%s165 + $0x60] sm:$0xff]
      %v184 = vld [vmem:[%s165 + $0x68] sm:$0xff]
      %v185 = vld [vmem:[%s165 + $0x70] sm:$0xff]
      %v186 = vld [vmem:[%s165 + $0x78] sm:$0xff]
      %v187 = vld [vmem:[%s1] sm:$0xff]
      %v188 = vld [vmem:[%s1 + $0x8] sm:$0xff]
      %v189 = vld [vmem:[%s1 + $0x10] sm:$0xff]
      %v190 = vld [vmem:[%s1 + $0x18] sm:$0xff]
      %v191 = vld [vmem:[%s1 + $0x20] sm:$0xff]
      %v192 = vld [vmem:[%s1 + $0x28] sm:$0xff]
      %v193 = vld [vmem:[%s1 + $0x30] sm:$0xff]
      %v194 = vld [vmem:[%s1 + $0x38] sm:$0xff]
      %v195 = vld [vmem:[%s1 + $0x40] sm:$0xff]
      %v196 = vld [vmem:[%s1 + $0x48] sm:$0xff]
      %v197 = vld [vmem:[%s1 + $0x50] sm:$0xff]
      %v198 = vld [vmem:[%s1 + $0x58] sm:$0xff]
      %v199 = vld [vmem:[%s1 + $0x60] sm:$0xff]
      %v200 = vld [vmem:[%s1 + $0x68] sm:$0xff]
      %v201 = vld [vmem:[%s1 + $0x70] sm:$0xff]
      %v202 = vld [vmem:[%s1 + $0x78] sm:$0xff]
      %v203 = vld [vmem:[%s1 + $0x80] sm:$0xff]
      %v204 = vld [vmem:[%s1 + $0x88] sm:$0xff]
      %v205 = vld [vmem:[%s1 + $0x90] sm:$0xff]
      %v206 = vld [vmem:[%s1 + $0x98] sm:$0xff]
      %v207 = vld [vmem:[%s1 + $0xa0] sm:$0xff]
      %v208 = vld [vmem:[%s1 + $0xa8] sm:$0xff]
      %v209 = vld [vmem:[%s1 + $0xb0] sm:$0xff]
      %v210 = vld [vmem:[%s1 + $0xb8] sm:$0xff]
      %v211 = vld [vmem:[%s1 + $0xc0] sm:$0xff]
      %v212 = vld [vmem:[%s1 + $0xc8] sm:$0xff]
      %v213 = vld [vmem:[%s1 + $0xd0] sm:$0xff]
      %v214 = vld [vmem:[%s1 + $0xd8] sm:$0xff]
      %v215 = vld [vmem:[%s1 + $0xe0] sm:$0xff]
      %v216 = vld [vmem:[%s1 + $0xe8] sm:$0xff]
      %v217 = vld [vmem:[%s1 + $0xf0] sm:$0xff]
      %v218 = vld [vmem:[%s1 + $0xf8] sm:$0xff]
      %v219 = vld [vmem:[%s1 + $0x100] sm:$0xf]
      %v220 = vld [vmem:[%s1 + $0x108] sm:$0xf]
      %v221 = vld [vmem:[%s165] sm:$0xfe]
      %v222 = vld [vmem:[%s165 + $0x8] sm:$0xfe]
      %v223 = vld [vmem:[%s165 + $0x80] sm:$0x1]
      %v224 = vld [vmem:[%s165 + $0x88] sm:$0x1]
      %s225 = scalar_lea.vmem %s1, 272
      %v226 = vld [vmem:[%s225] sm:$0xff]
      %v227 = vld [vmem:[%s225 + $0x8] sm:$0xff]
      %v228 = vld [vmem:[%s225 + $0x10] sm:$0xff]
      %v229 = vld [vmem:[%s225 + $0x18] sm:$0xff]
      %v230 = vld [vmem:[%s225 + $0x20] sm:$0xff]
      %v231 = vld [vmem:[%s225 + $0x28] sm:$0xff]
      %v232 = vld [vmem:[%s225 + $0x30] sm:$0xff]
      %v233 = vld [vmem:[%s225 + $0x38] sm:$0xff]
      %v234 = vld [vmem:[%s225 + $0x40] sm:$0xff]
      %v235 = vld [vmem:[%s225 + $0x48] sm:$0xff]
      %v236 = vld [vmem:[%s225 + $0x50] sm:$0xff]
      %v237 = vld [vmem:[%s225 + $0x58] sm:$0xff]
      %v238 = vld [vmem:[%s225 + $0x60] sm:$0xff]
      %v239 = vld [vmem:[%s225 + $0x68] sm:$0xff]
      %v240 = vld [vmem:[%s225 + $0x70] sm:$0xff]
      %v241 = vld [vmem:[%s225 + $0x78] sm:$0xff]
      %v242 = vld [vmem:[%s225 + $0x80] sm:$0xff]
      %v243 = vld [vmem:[%s225 + $0x88] sm:$0xff]
      %v244 = vld [vmem:[%s225 + $0x90] sm:$0xff]
      %v245 = vld [vmem:[%s225 + $0x98] sm:$0xff]
      %v246 = vld [vmem:[%s225 + $0xa0] sm:$0xff]
      %v247 = vld [vmem:[%s225 + $0xa8] sm:$0xff]
      %v248 = vld [vmem:[%s225 + $0xb0] sm:$0xff]
      %v249 = vld [vmem:[%s225 + $0xb8] sm:$0xff]
      %v250 = vld [vmem:[%s225 + $0xc0] sm:$0xff]
      %v251 = vld [vmem:[%s225 + $0xc8] sm:$0xff]
      %v252 = vld [vmem:[%s225 + $0xd0] sm:$0xff]
      %v253 = vld [vmem:[%s225 + $0xd8] sm:$0xff]
      %v254 = vld [vmem:[%s225 + $0xe0] sm:$0xff]
      %v255 = vld [vmem:[%s225 + $0xe8] sm:$0xff]
      %v256 = vld [vmem:[%s225 + $0xf0] sm:$0xff]
      %v257 = vld [vmem:[%s225 + $0xf8] sm:$0xff]
      %v258 = vld [vmem:[%s225 + $0x100] sm:$0xf]
      %v259 = vld [vmem:[%s225 + $0x108] sm:$0xf]
      %vm278 = vcmask 1046528
      %v279 = vrot.slane %v221, 1
      %v280 = vrot.slane %v173, 1
      %v281 = vsel %vm278, %v279, %v280
      %v282 = vrot.slane %v222, 1
      %v283 = vrot.slane %v174, 1
      %v284 = vsel %vm278, %v282, %v283
      %v285 = vrot.slane %v175, 1
      %v286 = vsel %vm278, %v280, %v285
      %v287 = vrot.slane %v176, 1
      %v288 = vsel %vm278, %v283, %v287
      %v289 = vrot.slane %v177, 1
      %v290 = vsel %vm278, %v285, %v289
      %v291 = vrot.slane %v178, 1
      %v292 = vsel %vm278, %v287, %v291
      %v293 = vrot.slane %v179, 1
      %v294 = vsel %vm278, %v289, %v293
      %v295 = vrot.slane %v180, 1
      %v296 = vsel %vm278, %v291, %v295
      %v297 = vrot.slane %v181, 1
      %v298 = vsel %vm278, %v293, %v297
      %v299 = vrot.slane %v182, 1
      %v300 = vsel %vm278, %v295, %v299
      %v301 = vrot.slane %v183, 1
      %v302 = vsel %vm278, %v297, %v301
      %v303 = vrot.slane %v184, 1
      %v304 = vsel %vm278, %v299, %v303
      %v305 = vrot.slane %v185, 1
      %v306 = vsel %vm278, %v301, %v305
      %v307 = vrot.slane %v186, 1
      %v308 = vsel %vm278, %v303, %v307
      %v309 = vrot.slane %v223, 1
      %v310 = vsel %vm278, %v305, %v309
      %v311 = vrot.slane %v224, 1
      %v312 = vsel %vm278, %v307, %v311
      %vm321 = vcmask 31744
      %v322 = vsel %vm321, %v284, 0
      %v324 = vsel %vm321, %v288, 0
      %v326 = vsel %vm321, %v292, 0
      %v328 = vsel %vm321, %v296, 0
      %v330 = vsel %vm321, %v300, 0
      %v332 = vsel %vm321, %v304, 0
      %v334 = vsel %vm321, %v308, 0
      %v336 = vsel %vm321, %v312, 0
      %vm338 = vcmask 1043456
      %v340 = vsel %vm338, %v258, 0
      %v343 = vsel %vm338, %v259, 0
      %345 = vmatpush.msra.mxu0 %v256
      %346 = vmatpush.msra.mxu0 %v254
      %347 = vmatpush.msra.mxu0 %v252
      %348 = vmatpush.msra.mxu0 %v250
      %349 = vmatpush.msra.mxu0 %v248
      %350 = vmatpush.msra.mxu0 %v246
      %351 = vmatpush.msra.mxu0 %v244
      %352 = vmatpush.msra.mxu0 %v242
      %353 = vmatpush.msra.mxu0 %v240
      %354 = vmatpush.msra.mxu0 %v238
      %355 = vmatpush.msra.mxu0 %v236
      %356 = vmatpush.msra.mxu0 %v234
      %357 = vmatpush.msra.mxu0 %v232
      %358 = vmatpush.msra.mxu0 %v230
      %359 = vmatpush.msra.mxu0 %v228
      %360 = vmatpush.msra.mxu0 %v226
      %361 = vmatmul.f32.gmra.mxu0 %v281
      %v362 = vpop.f32.mrf.mxu0
      %v363 = vadd.f32 0.0, %v362
      %364 = vmatmul.f32.gmra.mxu0 %v286
      %v365 = vpop.f32.mrf.mxu0
      %v366 = vadd.f32 0.0, %v365
      %367 = vmatmul.f32.gmra.mxu0 %v290
      %v368 = vpop.f32.mrf.mxu0
      %v369 = vadd.f32 0.0, %v368
      %370 = vmatmul.f32.gmra.mxu0 %v294
      %v371 = vpop.f32.mrf.mxu0
      %v372 = vadd.f32 0.0, %v371
      %373 = vmatmul.f32.gmra.mxu0 %v298
      %v374 = vpop.f32.mrf.mxu0
      %v375 = vadd.f32 0.0, %v374
      %376 = vmatmul.f32.gmra.mxu0 %v302
      %v377 = vpop.f32.mrf.mxu0
      %v378 = vadd.f32 0.0, %v377
      %379 = vmatmul.f32.gmra.mxu0 %v306
      %v380 = vpop.f32.mrf.mxu0
      %v381 = vadd.f32 0.0, %v380
      %382 = vmatmul.f32.gmra.mxu0 %v310
      %v383 = vpop.f32.mrf.mxu0
      %v384 = vadd.f32 0.0, %v383
      %385 = vdwg.mxu0
      %386 = vmatpush.msra.mxu0 0.0
      %387 = vmatpush.msra.mxu0 0.0
      %388 = vmatpush.msra.mxu0 0.0
      %389 = vmatpush.msra.mxu0 0.0
      %390 = vmatpush.msra.mxu0 0.0
      %391 = vmatpush.msra.mxu0 0.0
      %392 = vmatpush.msra.mxu0 0.0
      %393 = vmatpush.msra.mxu0 0.0
      %394 = vmatpush.msra.mxu0 0.0
      %395 = vmatpush.msra.mxu0 0.0
      %396 = vmatpush.msra.mxu0 0.0
      %397 = vmatpush.msra.mxu0 0.0
      %398 = vmatpush.msra.mxu0 0.0
      %399 = vmatpush.msra.mxu0 0.0
      %400 = vmatpush.msra.mxu0 0.0
      %401 = vmatpush.msra.mxu0 %v340
      %402 = vmatmul.f32.gmra.mxu0 %v322
      %v403 = vpop.f32.mrf.mxu0
      %v404 = vadd.f32 %v363, %v403
      %405 = vmatmul.f32.gmra.mxu0 %v324
      %v406 = vpop.f32.mrf.mxu0
      %v407 = vadd.f32 %v366, %v406
      %408 = vmatmul.f32.gmra.mxu0 %v326
      %v409 = vpop.f32.mrf.mxu0
      %v410 = vadd.f32 %v369, %v409
      %411 = vmatmul.f32.gmra.mxu0 %v328
      %v412 = vpop.f32.mrf.mxu0
      %v413 = vadd.f32 %v372, %v412
      %414 = vmatmul.f32.gmra.mxu0 %v330
      %v415 = vpop.f32.mrf.mxu0
      %v416 = vadd.f32 %v375, %v415
      %417 = vmatmul.f32.gmra.mxu0 %v332
      %v418 = vpop.f32.mrf.mxu0
      %v419 = vadd.f32 %v378, %v418
      %420 = vmatmul.f32.gmra.mxu0 %v334
      %v421 = vpop.f32.mrf.mxu0
      %v422 = vadd.f32 %v381, %v421
      %423 = vmatmul.f32.gmra.mxu0 %v336
      %v424 = vpop.f32.mrf.mxu0
      %v425 = vadd.f32 %v384, %v424
      %426 = vdwg.mxu0
      %427 = vmatpush.msra.mxu0 %v257
      %428 = vmatpush.msra.mxu0 %v255
      %429 = vmatpush.msra.mxu0 %v253
      %430 = vmatpush.msra.mxu0 %v251
      %431 = vmatpush.msra.mxu0 %v249
      %432 = vmatpush.msra.mxu0 %v247
      %433 = vmatpush.msra.mxu0 %v245
      %434 = vmatpush.msra.mxu0 %v243
      %435 = vmatpush.msra.mxu0 %v241
      %436 = vmatpush.msra.mxu0 %v239
      %437 = vmatpush.msra.mxu0 %v237
      %438 = vmatpush.msra.mxu0 %v235
      %439 = vmatpush.msra.mxu0 %v233
      %440 = vmatpush.msra.mxu0 %v231
      %441 = vmatpush.msra.mxu0 %v229
      %442 = vmatpush.msra.mxu0 %v227
      %443 = vmatmul.f32.gmra.mxu0 %v281
      %v444 = vpop.f32.mrf.mxu0
      %v445 = vadd.f32 0.0, %v444
      %446 = vmatmul.f32.gmra.mxu0 %v286
      %v447 = vpop.f32.mrf.mxu0
      %v448 = vadd.f32 0.0, %v447
      %449 = vmatmul.f32.gmra.mxu0 %v290
      %v450 = vpop.f32.mrf.mxu0
      %v451 = vadd.f32 0.0, %v450
      %452 = vmatmul.f32.gmra.mxu0 %v294
      %v453 = vpop.f32.mrf.mxu0
      %v454 = vadd.f32 0.0, %v453
      %455 = vmatmul.f32.gmra.mxu0 %v298
      %v456 = vpop.f32.mrf.mxu0
      %v457 = vadd.f32 0.0, %v456
      %458 = vmatmul.f32.gmra.mxu0 %v302
      %v459 = vpop.f32.mrf.mxu0
      %v460 = vadd.f32 0.0, %v459
      %461 = vmatmul.f32.gmra.mxu0 %v306
      %v462 = vpop.f32.mrf.mxu0
      %v463 = vadd.f32 0.0, %v462
      %464 = vmatmul.f32.gmra.mxu0 %v310
      %v465 = vpop.f32.mrf.mxu0
      %v466 = vadd.f32 0.0, %v465
      %467 = vdwg.mxu0
      %468 = vmatpush.msra.mxu0 0.0
      %469 = vmatpush.msra.mxu0 0.0
      %470 = vmatpush.msra.mxu0 0.0
      %471 = vmatpush.msra.mxu0 0.0
      %472 = vmatpush.msra.mxu0 0.0
      %473 = vmatpush.msra.mxu0 0.0
      %474 = vmatpush.msra.mxu0 0.0
      %475 = vmatpush.msra.mxu0 0.0
      %476 = vmatpush.msra.mxu0 0.0
      %477 = vmatpush.msra.mxu0 0.0
      %478 = vmatpush.msra.mxu0 0.0
      %479 = vmatpush.msra.mxu0 0.0
      %480 = vmatpush.msra.mxu0 0.0
      %481 = vmatpush.msra.mxu0 0.0
      %482 = vmatpush.msra.mxu0 0.0
      %483 = vmatpush.msra.mxu0 %v343
      %484 = vmatmul.f32.gmra.mxu0 %v322
      %v485 = vpop.f32.mrf.mxu0
      %v486 = vadd.f32 %v445, %v485
      %487 = vmatmul.f32.gmra.mxu0 %v324
      %v488 = vpop.f32.mrf.mxu0
      %v489 = vadd.f32 %v448, %v488
      %490 = vmatmul.f32.gmra.mxu0 %v326
      %v491 = vpop.f32.mrf.mxu0
      %v492 = vadd.f32 %v451, %v491
      %493 = vmatmul.f32.gmra.mxu0 %v328
      %v494 = vpop.f32.mrf.mxu0
      %v495 = vadd.f32 %v454, %v494
      %496 = vmatmul.f32.gmra.mxu0 %v330
      %v497 = vpop.f32.mrf.mxu0
      %v498 = vadd.f32 %v457, %v497
      %499 = vmatmul.f32.gmra.mxu0 %v332
      %v500 = vpop.f32.mrf.mxu0
      %v501 = vadd.f32 %v460, %v500
      %502 = vmatmul.f32.gmra.mxu0 %v334
      %v503 = vpop.f32.mrf.mxu0
      %v504 = vadd.f32 %v463, %v503
      %505 = vmatmul.f32.gmra.mxu0 %v336
      %v506 = vpop.f32.mrf.mxu0
      %v507 = vadd.f32 %v466, %v506
      %508 = vdwg.mxu0
      %v510 = vsel %vm321, %v172, 0
      %v512 = vsel %vm321, %v174, 0
      %v514 = vsel %vm321, %v176, 0
      %v516 = vsel %vm321, %v178, 0
      %v518 = vsel %vm321, %v180, 0
      %v520 = vsel %vm321, %v182, 0
      %v522 = vsel %vm321, %v184, 0
      %v524 = vsel %vm321, %v186, 0
      %v527 = vsel %vm338, %v219, 0
      %v530 = vsel %vm338, %v220, 0
      %532 = vmatpush.msra.mxu0 %v217
      %533 = vmatpush.msra.mxu0 %v215
      %534 = vmatpush.msra.mxu0 %v213
      %535 = vmatpush.msra.mxu0 %v211
      %536 = vmatpush.msra.mxu0 %v209
      %537 = vmatpush.msra.mxu0 %v207
      %538 = vmatpush.msra.mxu0 %v205
      %539 = vmatpush.msra.mxu0 %v203
      %540 = vmatpush.msra.mxu0 %v201
      %541 = vmatpush.msra.mxu0 %v199
      %542 = vmatpush.msra.mxu0 %v197
      %543 = vmatpush.msra.mxu0 %v195
      %544 = vmatpush.msra.mxu0 %v193
      %545 = vmatpush.msra.mxu0 %v191
      %546 = vmatpush.msra.mxu0 %v189
      %547 = vmatpush.msra.mxu0 %v187
      %548 = vmatmul.f32.gmra.mxu0 %v171
      %v549 = vpop.f32.mrf.mxu0
      %v550 = vadd.f32 %v404, %v549
      %551 = vmatmul.f32.gmra.mxu0 %v173
      %v552 = vpop.f32.mrf.mxu0
      %v553 = vadd.f32 %v407, %v552
      %554 = vmatmul.f32.gmra.mxu0 %v175
      %v555 = vpop.f32.mrf.mxu0
      %v556 = vadd.f32 %v410, %v555
      %557 = vmatmul.f32.gmra.mxu0 %v177
      %v558 = vpop.f32.mrf.mxu0
      %v559 = vadd.f32 %v413, %v558
      %560 = vmatmul.f32.gmra.mxu0 %v179
      %v561 = vpop.f32.mrf.mxu0
      %v562 = vadd.f32 %v416, %v561
      %563 = vmatmul.f32.gmra.mxu0 %v181
      %v564 = vpop.f32.mrf.mxu0
      %v565 = vadd.f32 %v419, %v564
      %566 = vmatmul.f32.gmra.mxu0 %v183
      %v567 = vpop.f32.mrf.mxu0
      %v568 = vadd.f32 %v422, %v567
      %569 = vmatmul.f32.gmra.mxu0 %v185
      %v570 = vpop.f32.mrf.mxu0
      %v571 = vadd.f32 %v425, %v570
      %572 = vdwg.mxu0
      %573 = vmatpush.msra.mxu0 0.0
      %574 = vmatpush.msra.mxu0 0.0
      %575 = vmatpush.msra.mxu0 0.0
      %576 = vmatpush.msra.mxu0 0.0
      %577 = vmatpush.msra.mxu0 0.0
      %578 = vmatpush.msra.mxu0 0.0
      %579 = vmatpush.msra.mxu0 0.0
      %580 = vmatpush.msra.mxu0 0.0
      %581 = vmatpush.msra.mxu0 0.0
      %582 = vmatpush.msra.mxu0 0.0
      %583 = vmatpush.msra.mxu0 0.0
      %584 = vmatpush.msra.mxu0 0.0
      %585 = vmatpush.msra.mxu0 0.0
      %586 = vmatpush.msra.mxu0 0.0
      %587 = vmatpush.msra.mxu0 0.0
      %588 = vmatpush.msra.mxu0 %v527
      %589 = vmatmul.f32.gmra.mxu0 %v510
      %v590 = vpop.f32.mrf.mxu0
      %v591 = vadd.f32 %v550, %v590
      %592 = vmatmul.f32.gmra.mxu0 %v512
      %v593 = vpop.f32.mrf.mxu0
      %v594 = vadd.f32 %v553, %v593
      %595 = vmatmul.f32.gmra.mxu0 %v514
      %v596 = vpop.f32.mrf.mxu0
      %v597 = vadd.f32 %v556, %v596
      %598 = vmatmul.f32.gmra.mxu0 %v516
      %v599 = vpop.f32.mrf.mxu0
      %v600 = vadd.f32 %v559, %v599
      %601 = vmatmul.f32.gmra.mxu0 %v518
      %v602 = vpop.f32.mrf.mxu0
      %v603 = vadd.f32 %v562, %v602
      %604 = vmatmul.f32.gmra.mxu0 %v520
      %v605 = vpop.f32.mrf.mxu0
      %v606 = vadd.f32 %v565, %v605
      %607 = vmatmul.f32.gmra.mxu0 %v522
      %v608 = vpop.f32.mrf.mxu0
      %v609 = vadd.f32 %v568, %v608
      %610 = vmatmul.f32.gmra.mxu0 %v524
      %v611 = vpop.f32.mrf.mxu0
      %v612 = vadd.f32 %v571, %v611
      %613 = vdwg.mxu0
      %614 = vmatpush.msra.mxu0 %v218
      %615 = vmatpush.msra.mxu0 %v216
      %616 = vmatpush.msra.mxu0 %v214
      %617 = vmatpush.msra.mxu0 %v212
      %618 = vmatpush.msra.mxu0 %v210
      %619 = vmatpush.msra.mxu0 %v208
      %620 = vmatpush.msra.mxu0 %v206
      %621 = vmatpush.msra.mxu0 %v204
      %622 = vmatpush.msra.mxu0 %v202
      %623 = vmatpush.msra.mxu0 %v200
      %624 = vmatpush.msra.mxu0 %v198
      %625 = vmatpush.msra.mxu0 %v196
      %626 = vmatpush.msra.mxu0 %v194
      %627 = vmatpush.msra.mxu0 %v192
      %628 = vmatpush.msra.mxu0 %v190
      %629 = vmatpush.msra.mxu0 %v188
      %630 = vmatmul.f32.gmra.mxu0 %v171
      %v631 = vpop.f32.mrf.mxu0
      %v632 = vadd.f32 %v486, %v631
      %633 = vmatmul.f32.gmra.mxu0 %v173
      %v634 = vpop.f32.mrf.mxu0
      %v635 = vadd.f32 %v489, %v634
      %636 = vmatmul.f32.gmra.mxu0 %v175
      %v637 = vpop.f32.mrf.mxu0
      %v638 = vadd.f32 %v492, %v637
      %639 = vmatmul.f32.gmra.mxu0 %v177
      %v640 = vpop.f32.mrf.mxu0
      %v641 = vadd.f32 %v495, %v640
      %642 = vmatmul.f32.gmra.mxu0 %v179
      %v643 = vpop.f32.mrf.mxu0
      %v644 = vadd.f32 %v498, %v643
      %645 = vmatmul.f32.gmra.mxu0 %v181
      %v646 = vpop.f32.mrf.mxu0
      %v647 = vadd.f32 %v501, %v646
      %648 = vmatmul.f32.gmra.mxu0 %v183
      %v649 = vpop.f32.mrf.mxu0
      %v650 = vadd.f32 %v504, %v649
      %651 = vmatmul.f32.gmra.mxu0 %v185
      %v652 = vpop.f32.mrf.mxu0
      %v653 = vadd.f32 %v507, %v652
      %654 = vdwg.mxu0
      %655 = vmatpush.msra.mxu0 0.0
      %656 = vmatpush.msra.mxu0 0.0
      %657 = vmatpush.msra.mxu0 0.0
      %658 = vmatpush.msra.mxu0 0.0
      %659 = vmatpush.msra.mxu0 0.0
      %660 = vmatpush.msra.mxu0 0.0
      %661 = vmatpush.msra.mxu0 0.0
      %662 = vmatpush.msra.mxu0 0.0
      %663 = vmatpush.msra.mxu0 0.0
      %664 = vmatpush.msra.mxu0 0.0
      %665 = vmatpush.msra.mxu0 0.0
      %666 = vmatpush.msra.mxu0 0.0
      %667 = vmatpush.msra.mxu0 0.0
      %668 = vmatpush.msra.mxu0 0.0
      %669 = vmatpush.msra.mxu0 0.0
      %670 = vmatpush.msra.mxu0 %v530
      %671 = vmatmul.f32.gmra.mxu0 %v510
      %v672 = vpop.f32.mrf.mxu0
      %v673 = vadd.f32 %v632, %v672
      %674 = vmatmul.f32.gmra.mxu0 %v512
      %v675 = vpop.f32.mrf.mxu0
      %v676 = vadd.f32 %v635, %v675
      %677 = vmatmul.f32.gmra.mxu0 %v514
      %v678 = vpop.f32.mrf.mxu0
      %v679 = vadd.f32 %v638, %v678
      %680 = vmatmul.f32.gmra.mxu0 %v516
      %v681 = vpop.f32.mrf.mxu0
      %v682 = vadd.f32 %v641, %v681
      %683 = vmatmul.f32.gmra.mxu0 %v518
      %v684 = vpop.f32.mrf.mxu0
      %v685 = vadd.f32 %v644, %v684
      %686 = vmatmul.f32.gmra.mxu0 %v520
      %v687 = vpop.f32.mrf.mxu0
      %v688 = vadd.f32 %v647, %v687
      %689 = vmatmul.f32.gmra.mxu0 %v522
      %v690 = vpop.f32.mrf.mxu0
      %v691 = vadd.f32 %v650, %v690
      %692 = vmatmul.f32.gmra.mxu0 %v524
      %v693 = vpop.f32.mrf.mxu0
      %v694 = vadd.f32 %v653, %v693
      %695 = vdwg.mxu0
      %v696 = vld [vmem:[%s165] sm:$0xfc]
      %v697 = vld [vmem:[%s165 + $0x8] sm:$0xfc]
      %v698 = vld [vmem:[%s165 + $0x80] sm:$0x3]
      %v699 = vld [vmem:[%s165 + $0x88] sm:$0x3]
      %s700 = scalar_lea.vmem %s1, 544
      %v701 = vld [vmem:[%s700] sm:$0xff]
      %v702 = vld [vmem:[%s700 + $0x8] sm:$0xff]
      %v703 = vld [vmem:[%s700 + $0x10] sm:$0xff]
      %v704 = vld [vmem:[%s700 + $0x18] sm:$0xff]
      %v705 = vld [vmem:[%s700 + $0x20] sm:$0xff]
      %v706 = vld [vmem:[%s700 + $0x28] sm:$0xff]
      %v707 = vld [vmem:[%s700 + $0x30] sm:$0xff]
      %v708 = vld [vmem:[%s700 + $0x38] sm:$0xff]
      %v709 = vld [vmem:[%s700 + $0x40] sm:$0xff]
      %v710 = vld [vmem:[%s700 + $0x48] sm:$0xff]
      %v711 = vld [vmem:[%s700 + $0x50] sm:$0xff]
      %v712 = vld [vmem:[%s700 + $0x58] sm:$0xff]
      %v713 = vld [vmem:[%s700 + $0x60] sm:$0xff]
      %v714 = vld [vmem:[%s700 + $0x68] sm:$0xff]
      %v715 = vld [vmem:[%s700 + $0x70] sm:$0xff]
      %v716 = vld [vmem:[%s700 + $0x78] sm:$0xff]
      %v717 = vld [vmem:[%s700 + $0x80] sm:$0xff]
      %v718 = vld [vmem:[%s700 + $0x88] sm:$0xff]
      %v719 = vld [vmem:[%s700 + $0x90] sm:$0xff]
      %v720 = vld [vmem:[%s700 + $0x98] sm:$0xff]
      %v721 = vld [vmem:[%s700 + $0xa0] sm:$0xff]
      %v722 = vld [vmem:[%s700 + $0xa8] sm:$0xff]
      %v723 = vld [vmem:[%s700 + $0xb0] sm:$0xff]
      %v724 = vld [vmem:[%s700 + $0xb8] sm:$0xff]
      %v725 = vld [vmem:[%s700 + $0xc0] sm:$0xff]
      %v726 = vld [vmem:[%s700 + $0xc8] sm:$0xff]
      %v727 = vld [vmem:[%s700 + $0xd0] sm:$0xff]
      %v728 = vld [vmem:[%s700 + $0xd8] sm:$0xff]
      %v729 = vld [vmem:[%s700 + $0xe0] sm:$0xff]
      %v730 = vld [vmem:[%s700 + $0xe8] sm:$0xff]
      %v731 = vld [vmem:[%s700 + $0xf0] sm:$0xff]
      %v732 = vld [vmem:[%s700 + $0xf8] sm:$0xff]
      %v733 = vld [vmem:[%s700 + $0x100] sm:$0xf]
      %v734 = vld [vmem:[%s700 + $0x108] sm:$0xf]
      %vm739 = vcmask 1045504
      %v740 = vrot.slane %v696, 2
      %v741 = vrot.slane %v173, 2
      %v742 = vsel %vm739, %v740, %v741
      %v743 = vrot.slane %v697, 2
      %v744 = vrot.slane %v174, 2
      %v745 = vsel %vm739, %v743, %v744
      %v746 = vrot.slane %v175, 2
      %v747 = vsel %vm739, %v741, %v746
      %v748 = vrot.slane %v176, 2
      %v749 = vsel %vm739, %v744, %v748
      %v750 = vrot.slane %v177, 2
      %v751 = vsel %vm739, %v746, %v750
      %v752 = vrot.slane %v178, 2
      %v753 = vsel %vm739, %v748, %v752
      %v754 = vrot.slane %v179, 2
      %v755 = vsel %vm739, %v750, %v754
      %v756 = vrot.slane %v180, 2
      %v757 = vsel %vm739, %v752, %v756
      %v758 = vrot.slane %v181, 2
      %v759 = vsel %vm739, %v754, %v758
      %v760 = vrot.slane %v182, 2
      %v761 = vsel %vm739, %v756, %v760
      %v762 = vrot.slane %v183, 2
      %v763 = vsel %vm739, %v758, %v762
      %v764 = vrot.slane %v184, 2
      %v765 = vsel %vm739, %v760, %v764
      %v766 = vrot.slane %v185, 2
      %v767 = vsel %vm739, %v762, %v766
      %v768 = vrot.slane %v186, 2
      %v769 = vsel %vm739, %v764, %v768
      %v770 = vrot.slane %v698, 2
      %v771 = vsel %vm739, %v766, %v770
      %v772 = vrot.slane %v699, 2
      %v773 = vsel %vm739, %v768, %v772
      %v782 = vsel %vm321, %v745, 0
      %v784 = vsel %vm321, %v749, 0
      %v786 = vsel %vm321, %v753, 0
      %v788 = vsel %vm321, %v757, 0
      %v790 = vsel %vm321, %v761, 0
      %v792 = vsel %vm321, %v765, 0
      %v794 = vsel %vm321, %v769, 0
      %v796 = vsel %vm321, %v773, 0
      %v799 = vsel %vm338, %v733, 0
      %v802 = vsel %vm338, %v734, 0
      %804 = vmatpush.msra.mxu0 %v731
      %805 = vmatpush.msra.mxu0 %v729
      %806 = vmatpush.msra.mxu0 %v727
      %807 = vmatpush.msra.mxu0 %v725
      %808 = vmatpush.msra.mxu0 %v723
      %809 = vmatpush.msra.mxu0 %v721
      %810 = vmatpush.msra.mxu0 %v719
      %811 = vmatpush.msra.mxu0 %v717
      %812 = vmatpush.msra.mxu0 %v715
      %813 = vmatpush.msra.mxu0 %v713
      %814 = vmatpush.msra.mxu0 %v711
      %815 = vmatpush.msra.mxu0 %v709
      %816 = vmatpush.msra.mxu0 %v707
      %817 = vmatpush.msra.mxu0 %v705
      %818 = vmatpush.msra.mxu0 %v703
      %819 = vmatpush.msra.mxu0 %v701
      %820 = vmatmul.f32.gmra.mxu0 %v742
      %v821 = vpop.f32.mrf.mxu0
      %v822 = vadd.f32 0.0, %v821
      %823 = vmatmul.f32.gmra.mxu0 %v747
      %v824 = vpop.f32.mrf.mxu0
      %v825 = vadd.f32 0.0, %v824
      %826 = vmatmul.f32.gmra.mxu0 %v751
      %v827 = vpop.f32.mrf.mxu0
      %v828 = vadd.f32 0.0, %v827
      %829 = vmatmul.f32.gmra.mxu0 %v755
      %v830 = vpop.f32.mrf.mxu0
      %v831 = vadd.f32 0.0, %v830
      %832 = vmatmul.f32.gmra.mxu0 %v759
      %v833 = vpop.f32.mrf.mxu0
      %v834 = vadd.f32 0.0, %v833
      %835 = vmatmul.f32.gmra.mxu0 %v763
      %v836 = vpop.f32.mrf.mxu0
      %v837 = vadd.f32 0.0, %v836
      %838 = vmatmul.f32.gmra.mxu0 %v767
      %v839 = vpop.f32.mrf.mxu0
      %v840 = vadd.f32 0.0, %v839
      %841 = vmatmul.f32.gmra.mxu0 %v771
      %v842 = vpop.f32.mrf.mxu0
      %v843 = vadd.f32 0.0, %v842
      %844 = vdwg.mxu0
      %845 = vmatpush.msra.mxu0 0.0
      %846 = vmatpush.msra.mxu0 0.0
      %847 = vmatpush.msra.mxu0 0.0
      %848 = vmatpush.msra.mxu0 0.0
      %849 = vmatpush.msra.mxu0 0.0
      %850 = vmatpush.msra.mxu0 0.0
      %851 = vmatpush.msra.mxu0 0.0
      %852 = vmatpush.msra.mxu0 0.0
      %853 = vmatpush.msra.mxu0 0.0
      %854 = vmatpush.msra.mxu0 0.0
      %855 = vmatpush.msra.mxu0 0.0
      %856 = vmatpush.msra.mxu0 0.0
      %857 = vmatpush.msra.mxu0 0.0
      %858 = vmatpush.msra.mxu0 0.0
      %859 = vmatpush.msra.mxu0 0.0
      %860 = vmatpush.msra.mxu0 %v799
      %861 = vmatmul.f32.gmra.mxu0 %v782
      %v862 = vpop.f32.mrf.mxu0
      %v863 = vadd.f32 %v822, %v862
      %864 = vmatmul.f32.gmra.mxu0 %v784
      %v865 = vpop.f32.mrf.mxu0
      %v866 = vadd.f32 %v825, %v865
      %867 = vmatmul.f32.gmra.mxu0 %v786
      %v868 = vpop.f32.mrf.mxu0
      %v869 = vadd.f32 %v828, %v868
      %870 = vmatmul.f32.gmra.mxu0 %v788
      %v871 = vpop.f32.mrf.mxu0
      %v872 = vadd.f32 %v831, %v871
      %873 = vmatmul.f32.gmra.mxu0 %v790
      %v874 = vpop.f32.mrf.mxu0
      %v875 = vadd.f32 %v834, %v874
      %876 = vmatmul.f32.gmra.mxu0 %v792
      %v877 = vpop.f32.mrf.mxu0
      %v878 = vadd.f32 %v837, %v877
      %879 = vmatmul.f32.gmra.mxu0 %v794
      %v880 = vpop.f32.mrf.mxu0
      %v881 = vadd.f32 %v840, %v880
      %882 = vmatmul.f32.gmra.mxu0 %v796
      %v883 = vpop.f32.mrf.mxu0
      %v884 = vadd.f32 %v843, %v883
      %885 = vdwg.mxu0
      %886 = vmatpush.msra.mxu0 %v732
      %887 = vmatpush.msra.mxu0 %v730
      %888 = vmatpush.msra.mxu0 %v728
      %889 = vmatpush.msra.mxu0 %v726
      %890 = vmatpush.msra.mxu0 %v724
      %891 = vmatpush.msra.mxu0 %v722
      %892 = vmatpush.msra.mxu0 %v720
      %893 = vmatpush.msra.mxu0 %v718
      %894 = vmatpush.msra.mxu0 %v716
      %895 = vmatpush.msra.mxu0 %v714
      %896 = vmatpush.msra.mxu0 %v712
      %897 = vmatpush.msra.mxu0 %v710
      %898 = vmatpush.msra.mxu0 %v708
      %899 = vmatpush.msra.mxu0 %v706
      %900 = vmatpush.msra.mxu0 %v704
      %901 = vmatpush.msra.mxu0 %v702
      %902 = vmatmul.f32.gmra.mxu0 %v742
      %v903 = vpop.f32.mrf.mxu0
      %v904 = vadd.f32 0.0, %v903
      %905 = vmatmul.f32.gmra.mxu0 %v747
      %v906 = vpop.f32.mrf.mxu0
      %v907 = vadd.f32 0.0, %v906
      %908 = vmatmul.f32.gmra.mxu0 %v751
      %v909 = vpop.f32.mrf.mxu0
      %v910 = vadd.f32 0.0, %v909
      %911 = vmatmul.f32.gmra.mxu0 %v755
      %v912 = vpop.f32.mrf.mxu0
      %v913 = vadd.f32 0.0, %v912
      %914 = vmatmul.f32.gmra.mxu0 %v759
      %v915 = vpop.f32.mrf.mxu0
      %v916 = vadd.f32 0.0, %v915
      %917 = vmatmul.f32.gmra.mxu0 %v763
      %v918 = vpop.f32.mrf.mxu0
      %v919 = vadd.f32 0.0, %v918
      %920 = vmatmul.f32.gmra.mxu0 %v767
      %v921 = vpop.f32.mrf.mxu0
      %v922 = vadd.f32 0.0, %v921
      %923 = vmatmul.f32.gmra.mxu0 %v771
      %v924 = vpop.f32.mrf.mxu0
      %v925 = vadd.f32 0.0, %v924
      %926 = vdwg.mxu0
      %927 = vmatpush.msra.mxu0 0.0
      %928 = vmatpush.msra.mxu0 0.0
      %929 = vmatpush.msra.mxu0 0.0
      %930 = vmatpush.msra.mxu0 0.0
      %931 = vmatpush.msra.mxu0 0.0
      %932 = vmatpush.msra.mxu0 0.0
      %933 = vmatpush.msra.mxu0 0.0
      %934 = vmatpush.msra.mxu0 0.0
      %935 = vmatpush.msra.mxu0 0.0
      %936 = vmatpush.msra.mxu0 0.0
      %937 = vmatpush.msra.mxu0 0.0
      %938 = vmatpush.msra.mxu0 0.0
      %939 = vmatpush.msra.mxu0 0.0
      %940 = vmatpush.msra.mxu0 0.0
      %941 = vmatpush.msra.mxu0 0.0
      %942 = vmatpush.msra.mxu0 %v802
      %943 = vmatmul.f32.gmra.mxu0 %v782
      %v944 = vpop.f32.mrf.mxu0
      %v945 = vadd.f32 %v904, %v944
      %946 = vmatmul.f32.gmra.mxu0 %v784
      %v947 = vpop.f32.mrf.mxu0
      %v948 = vadd.f32 %v907, %v947
      %949 = vmatmul.f32.gmra.mxu0 %v786
      %v950 = vpop.f32.mrf.mxu0
      %v951 = vadd.f32 %v910, %v950
      %952 = vmatmul.f32.gmra.mxu0 %v788
      %v953 = vpop.f32.mrf.mxu0
      %v954 = vadd.f32 %v913, %v953
      %955 = vmatmul.f32.gmra.mxu0 %v790
      %v956 = vpop.f32.mrf.mxu0
      %v957 = vadd.f32 %v916, %v956
      %958 = vmatmul.f32.gmra.mxu0 %v792
      %v959 = vpop.f32.mrf.mxu0
      %v960 = vadd.f32 %v919, %v959
      %961 = vmatmul.f32.gmra.mxu0 %v794
      %v962 = vpop.f32.mrf.mxu0
      %v963 = vadd.f32 %v922, %v962
      %964 = vmatmul.f32.gmra.mxu0 %v796
      %v965 = vpop.f32.mrf.mxu0
      %v966 = vadd.f32 %v925, %v965
      %967 = vdwg.mxu0
      %v968 = vadd.f32 %v591, %v863
      %v969 = vadd.f32 %v673, %v945
      %v970 = vadd.f32 %v594, %v866
      %v971 = vadd.f32 %v676, %v948
      %v972 = vadd.f32 %v597, %v869
      %v973 = vadd.f32 %v679, %v951
      %v974 = vadd.f32 %v600, %v872
      %v975 = vadd.f32 %v682, %v954
      %v976 = vadd.f32 %v603, %v875
      %v977 = vadd.f32 %v685, %v957
      %v978 = vadd.f32 %v606, %v878
      %v979 = vadd.f32 %v688, %v960
      %v980 = vadd.f32 %v609, %v881
      %v981 = vadd.f32 %v691, %v963
      %v982 = vadd.f32 %v612, %v884
      %v983 = vadd.f32 %v694, %v966
      %v984 = vld [vmem:[%s2] sm:$0x3]
      %v986 = vperm.slane %v984, 0
      %v987 = vperm.slane %v984, 1
      %v990 = vadd.f32 %v968, %v986
      %v991 = vadd.f32 %v969, %v987
      %v992 = vadd.f32 %v970, %v986
      %v993 = vadd.f32 %v971, %v987
      %v994 = vadd.f32 %v972, %v986
      %v995 = vadd.f32 %v973, %v987
      %v996 = vadd.f32 %v974, %v986
      %v997 = vadd.f32 %v975, %v987
      %v998 = vadd.f32 %v976, %v986
      %v999 = vadd.f32 %v977, %v987
      %v1000 = vadd.f32 %v978, %v986
      %v1001 = vadd.f32 %v979, %v987
      %v1002 = vadd.f32 %v980, %v986
      %v1003 = vadd.f32 %v981, %v987
      %v1004 = vadd.f32 %v982, %v986
      %v1005 = vadd.f32 %v983, %v987
      %v1006 = vtanh.pop %v990
      %v1007 = vtanh.pop %v991
      %v1008 = vtanh.pop %v992
      %v1009 = vtanh.pop %v993
      %v1010 = vtanh.pop %v994
      %v1011 = vtanh.pop %v995
      %v1012 = vtanh.pop %v996
      %v1013 = vtanh.pop %v997
      %v1014 = vtanh.pop %v998
      %v1015 = vtanh.pop %v999
      %v1016 = vtanh.pop %v1000
      %v1017 = vtanh.pop %v1001
      %v1018 = vtanh.pop %v1002
      %v1019 = vtanh.pop %v1003
      %v1020 = vtanh.pop %v1004
      %v1021 = vtanh.pop %v1005
      %1022 = vst [vmem:[%s170] sm:$0xff] %v1006
      %vm1023 = vcmask 523264
      %1024 = vst.msk [vmem:[%s170 + $0x8] sm:$0xff] %vm1023, %v1007
      %1025 = vst [vmem:[%s170 + $0x10] sm:$0xff] %v1008
      %1026 = vst.msk [vmem:[%s170 + $0x18] sm:$0xff] %vm1023, %v1009
      %1027 = vst [vmem:[%s170 + $0x20] sm:$0xff] %v1010
      %1028 = vst.msk [vmem:[%s170 + $0x28] sm:$0xff] %vm1023, %v1011
      %1029 = vst [vmem:[%s170 + $0x30] sm:$0xff] %v1012
      %1030 = vst.msk [vmem:[%s170 + $0x38] sm:$0xff] %vm1023, %v1013
      %1031 = vst [vmem:[%s170 + $0x40] sm:$0xff] %v1014
      %1032 = vst.msk [vmem:[%s170 + $0x48] sm:$0xff] %vm1023, %v1015
      %1033 = vst [vmem:[%s170 + $0x50] sm:$0xff] %v1016
      %1034 = vst.msk [vmem:[%s170 + $0x58] sm:$0xff] %vm1023, %v1017
      %1035 = vst [vmem:[%s170 + $0x60] sm:$0xff] %v1018
      %1036 = vst.msk [vmem:[%s170 + $0x68] sm:$0xff] %vm1023, %v1019
      %1037 = vst [vmem:[%s170 + $0x70] sm:$0xff] %v1020
      %1038 = vst.msk [vmem:[%s170 + $0x78] sm:$0xff] %vm1023, %v1021
      %p1039 = scmp.lt.s32.totalorder %s14, 1
      %s1040 = scalar_select %p1039, %s14, 1
      %s1041 = smul.addr %s1040, 16
      %s1042 = smul.addr %s1041, 8
      %s1043 = scalar_lea.vmem %s3, %s1042
      // Predicated region
      $region33: #{simple_decoder_forward.9} parent=31 // pred_check
        %p1044 = pneg %p100
      $region34: #{simple_decoder_forward.9} parent=31 // pred_check_branch
        %1046 = sbr.rel (%p1044) target = $region36
      $region35: #{simple_decoder_forward.9} parent=31 // pred_region
        _
      $region36: #{simple_decoder_forward.9} parent=31 // pred_fallthru
        _
    $region32: #{simple_decoder_forward.9} parent=5 // pred_fallthru
      _
    %p1047 = scmp.le.s32.totalorder 2, %s9
    // Predicated region
    $region37: #{simple_decoder_forward.9} parent=5 // pred_check
      %p1048 = pneg %p1047
    $region38: #{simple_decoder_forward.9} parent=5 // pred_check_branch
      %1050 = sbr.rel (%p1048) target = $region40
    $region39: #{simple_decoder_forward.9} parent=5 // pred_region
      %s1051 = ssub.s32 %s9, 2
      // Predicated region
      $region41: #{simple_decoder_forward.9} parent=39 // pred_check
        %p1052 = pneg %p106
      $region42: #{simple_decoder_forward.9} parent=39 // pred_check_branch
        %1054 = sbr.rel (%p1052) target = $region44
      $region43: #{simple_decoder_forward.9} parent=39 // pred_region
        %p1055 = scmp.lt.s32.totalorder %s15, 1
        %s1056 = scalar_select %p1055, %s15, 1
        %s1057 = smul.addr %s1056, 16
        %s1058 = smul.addr %s1057, 8
        %s1059 = scalar_lea.vmem %s3, %s1058
      $region44: #{simple_decoder_forward.9} parent=39 // pred_fallthru
        _
    $region40: #{simple_decoder_forward.9} parent=5 // pred_fallthru
      _
  $region6: #{simple_decoder_forward.9} parent=0 // loop_footer
    %s13 = sadd.s32 1, %s9
  $region7: #{simple_decoder_forward.9} parent=0 // loop_footer_branch
    %8 = sbr.rel target = $region3
  $region8: #{simple_decoder_forward.9} parent=0 // loop_exit
    _

</llo_original>
